<compile_context>
chip_gen: v6e
topology: v6e:2x2x1
jax: 0.10.0
libtpu: 0.0.40
codegen_flags: <defaults>
</compile_context>

<pallas_src>
import functools

import jax
import jax.numpy as jnp
from jax import lax
from jax.experimental import pallas as pl
from jax.experimental.pallas import tpu as pltpu


def _round_up(v, m):
    return (v + m - 1) // m * m


def _basic_block_kernel(H, W, taps_per_chunk,
                        x_ref, w1_ref, s1_ref, b1_ref, w2_ref, s2_ref, b2_ref,
                        o_ref):
    """One batch element per grid step.

    x_ref : (1, HWp, Cp)  bf16  input, NHWC flattened to (spatial, channel),
                                spatial padded to a multiple of 8
    w*_ref: (9*Cp, Cp)    bf16  im2col conv weights (tap-major, then Cin)
    s*/b* : (1, Cp)       f32   folded BatchNorm scale / bias
    o_ref : (1, HWp, Cp)  bf16
    """
    HWp, Cp = x_ref.shape[1], x_ref.shape[2]

    # ---- in-kernel tap-validity masks (implements the zero padding) ----
    # flat index f -> (row, col).  Row masks need no division; the column is
    # recovered exactly via f32 floor((f+0.5)/W) (valid for H*W << 2^20).
    f_i = lax.broadcasted_iota(jnp.int32, (HWp, 1), 0)
    f_f = f_i.astype(jnp.float32)
    r_f = jnp.floor((f_f + 0.5) / W)            # exact row index as f32
    c_f = f_f - r_f * W                         # exact column index as f32

    row_ok = (f_i >= W, None, f_i < (H - 1) * W)        # tap row offset -1, 0, +1
    col_ok = (c_f >= 0.5, None, c_f <= (W - 1.5))       # tap col offset -1, 0, +1

    dn = (((1,), (0,)), ((), ()))                        # contract the K dimension

    def tap_bf16(a_f32, t):
        """Tap t of the 3x3 stencil on flattened a_f32, masked, cast to bf16."""
        dh, dw = t // 3, t % 3
        off = (dh - 1) * W + (dw - 1)                    # flat shift of this tap
        shifted = pltpu.roll(a_f32, (-off) % HWp, axis=0) if off else a_f32
        m = row_ok[dh]
        cm = col_ok[dw]
        if m is None:
            m = cm
        elif cm is not None:
            m = m & cm
        if m is not None:
            shifted = jnp.where(m, shifted, 0.0)
        return shifted.astype(jnp.bfloat16)

    def conv3x3(a_f32, w_ref):
        """3x3 / stride-1 / pad-1 conv as tap-chunked matmuls, fp32 accumulate."""
        acc = None
        t = 0
        while t < 9:
            nt = min(taps_per_chunk, 9 - t)
            slabs = [tap_bf16(a_f32, t + j) for j in range(nt)]
            lhs = slabs[0] if nt == 1 else jnp.concatenate(slabs, axis=1)
            rhs = w_ref[t * Cp:(t + nt) * Cp, :]         # static slice
            part = lax.dot_general(lhs, rhs, dn,
                                   preferred_element_type=jnp.float32)
            acc = part if acc is None else acc + part
            t += nt
        return acc

    # ---- conv1 + bn1 + relu ----
    x32 = x_ref[0].astype(jnp.float32)                   # live only through conv1
    y1 = jnp.maximum(conv3x3(x32, w1_ref) * s1_ref[...] + b1_ref[...], 0.0)

    # ---- conv2 + bn2 + residual add + relu ----
    out = (conv3x3(y1, w2_ref) * s2_ref[...] + b2_ref[...]
           + x_ref[0].astype(jnp.float32))               # residual re-read (bf16)
    o_ref[0] = jnp.maximum(out, 0.0).astype(o_ref.dtype)


def _fold_bn(gamma, beta, mean, var, cp, eps=1e-5):
    inv = (gamma / jnp.sqrt(var + eps)).astype(jnp.float32)
    shift = (beta - mean * gamma / jnp.sqrt(var + eps)).astype(jnp.float32)
    c = gamma.shape[0]
    scale = jnp.zeros((cp,), jnp.float32).at[:c].set(inv)
    bias = jnp.zeros((cp,), jnp.float32).at[:c].set(shift)
    return scale.reshape(1, cp), bias.reshape(1, cp)


def _prep_conv_weight(w_oihw, cp):
    # PyTorch (Cout, Cin, 3, 3) -> im2col (9*Cp, Cp) bf16, tap-major then Cin.
    cout, cin = w_oihw.shape[0], w_oihw.shape[1]
    w = jnp.transpose(w_oihw, (2, 3, 1, 0))                       # (3,3,Cin,Cout)
    w = jnp.pad(w, ((0, 0), (0, 0), (0, cp - cin), (0, cp - cout)))
    return w.reshape(9 * cp, cp).astype(jnp.bfloat16)


def basic_block_forward_nhwc(x_nhwc, params):
    """BasicBlock forward (stride=1, downsample=None). NHWC in / NHWC out (fp32)."""
    w1, g1, be1, m1, v1, w2, g2, be2, m2, v2 = params
    N, H, W, C = x_nhwc.shape
    Cp = _round_up(C, 128)                 # lane-dense channels
    HW = H * W
    HWp = _round_up(HW, 8)                 # sublane-pad spatial (14x14, 7x7 stages)

    s1, b1 = _fold_bn(g1, be1, m1, v1, Cp)
    s2, b2 = _fold_bn(g2, be2, m2, v2, Cp)
    w1_p = _prep_conv_weight(w1, Cp)
    w2_p = _prep_conv_weight(w2, Cp)

    # Channel pad to lane width; spatial zero-padding handled in-kernel via masks.
    x = jnp.pad(x_nhwc, ((0, 0), (0, 0), (0, 0), (0, Cp - C)))
    x = x.reshape(N, HW, Cp)
    if HWp != HW:
        x = jnp.pad(x, ((0, 0), (0, HWp - HW), (0, 0)))
    x = x.astype(jnp.bfloat16)

    # ~256-deep contraction per matmul on 256-deep MXUs (v6e/v7x); Cp>=256 -> 1 tap.
    taps_per_chunk = max(1, 256 // Cp)

    # Explicit VMEM budget: double-buffered x/out blocks + double-buffered weights
    # + in-kernel live intermediates + headroom, clamped to [32 MiB, 48 MiB]
    # (safe on v5e/v6e/v7x default scoped limits and v7x's 64 MiB physical VMEM).
    blk_bytes = HWp * Cp * 2
    w_bytes = 9 * Cp * Cp * 2
    interm_bytes = HWp * Cp * (16 + 2 * taps_per_chunk + 8)
    est = 4 * blk_bytes + 4 * w_bytes + interm_bytes + (2 << 20)
    vmem_limit = int(min(max(est, 32 << 20), 48 << 20))

    kernel = functools.partial(_basic_block_kernel, H, W, taps_per_chunk)
    out = pl.pallas_call(
        kernel,
        out_shape=jax.ShapeDtypeStruct((N, HWp, Cp), jnp.bfloat16),
        grid_spec=pltpu.PrefetchScalarGridSpec(
            num_scalar_prefetch=0,
            grid=(N,),
            in_specs=[
                pl.BlockSpec((1, HWp, Cp), lambda n: (n, 0, 0)),    # x
                pl.BlockSpec((9 * Cp, Cp), lambda n: (0, 0)),       # w1 (im2col)
                pl.BlockSpec((1, Cp), lambda n: (0, 0)),            # bn1 scale
                pl.BlockSpec((1, Cp), lambda n: (0, 0)),            # bn1 bias
                pl.BlockSpec((9 * Cp, Cp), lambda n: (0, 0)),       # w2 (im2col)
                pl.BlockSpec((1, Cp), lambda n: (0, 0)),            # bn2 scale
                pl.BlockSpec((1, Cp), lambda n: (0, 0)),            # bn2 bias
            ],
            out_specs=pl.BlockSpec((1, HWp, Cp), lambda n: (n, 0, 0)),
        ),
        compiler_params=pltpu.CompilerParams(
            dimension_semantics=("parallel",),
            vmem_limit_bytes=vmem_limit),
    )(x, w1_p, s1, b1, w2_p, s2, b2)

    out = out[:, :HW, :].reshape(N, H, W, Cp)[..., :C]
    return out.astype(jnp.float32)


@jax.jit
def basic_block_forward(x_nchw, params):
    """NCHW adapter matching the PyTorch module interface.

    In a full network keep activations in NHWC and call
    basic_block_forward_nhwc directly (avoids two HBM passes per block).
    """
    x_nhwc = jnp.transpose(x_nchw, (0, 2, 3, 1))
    out = basic_block_forward_nhwc(x_nhwc, params)
    return jnp.transpose(out, (0, 3, 1, 2))


def _reference_forward(x_nchw, params):
    """Pure-JAX fp32 reference (lax.conv) for correctness checking."""
    w1, g1, be1, m1, v1, w2, g2, be2, m2, v2 = params
    eps = 1e-5

    def conv(x, w):
        return lax.conv_general_dilated(
            x, w, window_strides=(1, 1), padding=((1, 1), (1, 1)),
            dimension_numbers=("NCHW", "OIHW", "NCHW"))

    def bn(x, g, b, m, v):
        shp = (1, -1, 1, 1)
        return ((x - m.reshape(shp)) / jnp.sqrt(v.reshape(shp) + eps)
                * g.reshape(shp) + b.reshape(shp))

    out = jnp.maximum(bn(conv(x_nchw, w1), g1, be1, m1, v1), 0.0)
    out = bn(conv(out, w2), g2, be2, m2, v2)
    return jnp.maximum(out + x_nchw, 0.0)


if __name__ == "__main__":
    key = jax.random.PRNGKey(0)
    N, C, H, W = 2, 4, 16, 16      # inplanes == planes == 4, stride=1, no downsample
    ks = jax.random.split(key, 7)

    x = jax.random.normal(ks[0], (N, C, H, W), jnp.float32)

    w1 = 0.1 * jax.random.normal(ks[1], (C, C, 3, 3), jnp.float32)   # conv1 (OIHW)
    w2 = 0.1 * jax.random.normal(ks[2], (C, C, 3, 3), jnp.float32)   # conv2 (OIHW)
    g1 = 1.0 + 0.1 * jax.random.normal(ks[3], (C,), jnp.float32)     # bn1 gamma
    be1 = 0.1 * jax.random.normal(ks[4], (C,), jnp.float32)          # bn1 beta
    m1 = 0.05 * jax.random.normal(ks[5], (C,), jnp.float32)          # bn1 running_mean
    v1 = jnp.abs(1.0 + 0.1 * jax.random.normal(ks[6], (C,), jnp.float32))  # bn1 var
    g2 = jnp.ones((C,), jnp.float32)                                 # bn2 gamma
    be2 = jnp.zeros((C,), jnp.float32)                               # bn2 beta
    m2 = jnp.zeros((C,), jnp.float32)                                # bn2 running_mean
    v2 = jnp.ones((C,), jnp.float32)                                 # bn2 running_var

    params = (w1, g1, be1, m1, v1, w2, g2, be2, m2, v2)

    out = jax.block_until_ready(basic_block_forward(x, params))
    ref = _reference_forward(x, params)

    assert out.shape == (N, C, H, W)
    max_err = float(jnp.max(jnp.abs(out - ref)))
    # bf16 activations/weights on the MXU -> loosened tolerance vs fp32 reference.
    assert jnp.allclose(out, ref, atol=5e-2, rtol=5e-2), \
        f"mismatch vs JAX reference, max abs err {max_err}"

    print("KERNEL_OK")
</pallas_src>

<mosaic_0001>
module attributes {stable_mosaic.version = 11 : i64} {
  func.func @_basic_block_kernel(%arg0: i32, %arg1: memref<1x256x128xbf16, #tpu.memory_space<vmem>>, %arg2: memref<1152x128xbf16, #tpu.memory_space<vmem>>, %arg3: memref<1x128xf32, #tpu.memory_space<vmem>>, %arg4: memref<1x128xf32, #tpu.memory_space<vmem>>, %arg5: memref<1152x128xbf16, #tpu.memory_space<vmem>>, %arg6: memref<1x128xf32, #tpu.memory_space<vmem>>, %arg7: memref<1x128xf32, #tpu.memory_space<vmem>>, %arg8: memref<1x256x128xbf16, #tpu.memory_space<vmem>>) attributes {dimension_semantics = [#tpu.dimension_semantics<parallel>], iteration_bounds = array<i64: 2>, scalar_prefetch = 0 : i64, scratch_operands = 0 : i64, tpu.core_type = #tpu.core_type<tc>, window_params = [{transform_indices = @transform_0, window_bounds = array<i64: 1, 256, 128>}, {pipeline_mode = #tpu.pipeline_mode<synchronous>, transform_indices = @transform_1, window_bounds = array<i64: 1152, 128>}, {pipeline_mode = #tpu.pipeline_mode<synchronous>, transform_indices = @transform_2, window_bounds = array<i64: 1, 128>}, {pipeline_mode = #tpu.pipeline_mode<synchronous>, transform_indices = @transform_3, window_bounds = array<i64: 1, 128>}, {pipeline_mode = #tpu.pipeline_mode<synchronous>, transform_indices = @transform_4, window_bounds = array<i64: 1152, 128>}, {pipeline_mode = #tpu.pipeline_mode<synchronous>, transform_indices = @transform_5, window_bounds = array<i64: 1, 128>}, {pipeline_mode = #tpu.pipeline_mode<synchronous>, transform_indices = @transform_6, window_bounds = array<i64: 1, 128>}, {transform_indices = @transform_7, window_bounds = array<i64: 1, 256, 128>}]} {
    %0 = tpu.iota {dimensions = array<i32: 0>} : vector<256x1xi32>
    %1 = arith.sitofp %0 : vector<256x1xi32> to vector<256x1xf32>
    %cst = arith.constant 5.000000e-01 : f32
    %2 = vector.broadcast %cst : f32 to vector<256x1xf32>
    %3 = arith.addf %1, %2 : vector<256x1xf32>
    %cst_0 = arith.constant 1.600000e+01 : f32
    %4 = vector.broadcast %cst_0 : f32 to vector<256x1xf32>
    %5 = arith.divf %3, %4 : vector<256x1xf32>
    %6 = math.floor %5 : vector<256x1xf32>
    %cst_1 = arith.constant 1.600000e+01 : f32
    %7 = vector.broadcast %cst_1 : f32 to vector<256x1xf32>
    %8 = arith.mulf %6, %7 : vector<256x1xf32>
    %9 = arith.subf %1, %8 : vector<256x1xf32>
    %c16_i32 = arith.constant 16 : i32
    %10 = vector.broadcast %c16_i32 : i32 to vector<256x1xi32>
    %11 = arith.cmpi sge, %0, %10 : vector<256x1xi32>
    %c240_i32 = arith.constant 240 : i32
    %12 = vector.broadcast %c240_i32 : i32 to vector<256x1xi32>
    %13 = arith.cmpi slt, %0, %12 : vector<256x1xi32>
    %cst_2 = arith.constant 5.000000e-01 : f32
    %14 = vector.broadcast %cst_2 : f32 to vector<256x1xf32>
    %15 = arith.cmpf oge, %9, %14 : vector<256x1xf32>
    %cst_3 = arith.constant 1.450000e+01 : f32
    %16 = vector.broadcast %cst_3 : f32 to vector<256x1xf32>
    %17 = arith.cmpf ole, %9, %16 : vector<256x1xf32>
    %c0 = arith.constant 0 : index
    %c0_4 = arith.constant 0 : index
    %c0_5 = arith.constant 0 : index
    %18 = vector.load %arg1[%c0, %c0_4, %c0_5] : memref<1x256x128xbf16, #tpu.memory_space<vmem>>, vector<1x256x128xbf16>
    %19 = vector.shape_cast %18 : vector<1x256x128xbf16> to vector<256x128xbf16>
    %20 = arith.extf %19 : vector<256x128xbf16> to vector<256x128xf32>
    %c17_i32 = arith.constant 17 : i32
    %21 = tpu.dynamic_rotate %20 by %c17_i32 dim 0 : vector<256x128xf32>, i32 -> vector<256x128xf32>
    %22 = arith.andi %11, %15 : vector<256x1xi1>
    %cst_6 = arith.constant 0.000000e+00 : f32
    %23 = vector.shape_cast %22 : vector<256x1xi1> to vector<256x1xi1>
    %24 = vector.broadcast %23 : vector<256x1xi1> to vector<256x128xi1>
    %25 = vector.broadcast %cst_6 : f32 to vector<256x128xf32>
    %26 = arith.select %24, %21, %25 : vector<256x128xi1>, vector<256x128xf32>
    %27 = arith.truncf %26 : vector<256x128xf32> to vector<256x128xbf16>
    %c16_i32_7 = arith.constant 16 : i32
    %28 = tpu.dynamic_rotate %20 by %c16_i32_7 dim 0 : vector<256x128xf32>, i32 -> vector<256x128xf32>
    %cst_8 = arith.constant 0.000000e+00 : f32
    %29 = vector.shape_cast %11 : vector<256x1xi1> to vector<256x1xi1>
    %30 = vector.broadcast %29 : vector<256x1xi1> to vector<256x128xi1>
    %31 = vector.broadcast %cst_8 : f32 to vector<256x128xf32>
    %32 = arith.select %30, %28, %31 : vector<256x128xi1>, vector<256x128xf32>
    %33 = arith.truncf %32 : vector<256x128xf32> to vector<256x128xbf16>
    %34 = tpu.concatenate %27, %33 in 1 : vector<256x128xbf16>, vector<256x128xbf16> -> vector<256x256xbf16>
    %c0_9 = arith.constant 0 : index
    %c0_10 = arith.constant 0 : index
    %35 = vector.load %arg2[%c0_9, %c0_10] : memref<1152x128xbf16, #tpu.memory_space<vmem>>, vector<256x128xbf16>
    %cst_11 = arith.constant dense<0.000000e+00> : vector<256x128xf32>
    %36 = tpu.matmul %34, %35, %cst_11 {dimension_numbers = #tpu.dot_dimension_numbers<[1], [0], [0], [1], [0, 0, 1, 1], [], []>} : vector<256x256xbf16>, vector<256x128xbf16>, vector<256x128xf32> -> vector<256x128xf32>
    %c15_i32 = arith.constant 15 : i32
    %37 = tpu.dynamic_rotate %20 by %c15_i32 dim 0 : vector<256x128xf32>, i32 -> vector<256x128xf32>
    %38 = arith.andi %11, %17 : vector<256x1xi1>
    %cst_12 = arith.constant 0.000000e+00 : f32
    %39 = vector.shape_cast %38 : vector<256x1xi1> to vector<256x1xi1>
    %40 = vector.broadcast %39 : vector<256x1xi1> to vector<256x128xi1>
    %41 = vector.broadcast %cst_12 : f32 to vector<256x128xf32>
    %42 = arith.select %40, %37, %41 : vector<256x128xi1>, vector<256x128xf32>
    %43 = arith.truncf %42 : vector<256x128xf32> to vector<256x128xbf16>
    %c1_i32 = arith.constant 1 : i32
    %44 = tpu.dynamic_rotate %20 by %c1_i32 dim 0 : vector<256x128xf32>, i32 -> vector<256x128xf32>
    %cst_13 = arith.constant 0.000000e+00 : f32
    %45 = vector.shape_cast %15 : vector<256x1xi1> to vector<256x1xi1>
    %46 = vector.broadcast %45 : vector<256x1xi1> to vector<256x128xi1>
    %47 = vector.broadcast %cst_13 : f32 to vector<256x128xf32>
    %48 = arith.select %46, %44, %47 : vector<256x128xi1>, vector<256x128xf32>
    %49 = arith.truncf %48 : vector<256x128xf32> to vector<256x128xbf16>
    %50 = tpu.concatenate %43, %49 in 1 : vector<256x128xbf16>, vector<256x128xbf16> -> vector<256x256xbf16>
    %c256 = arith.constant 256 : index
    %c0_14 = arith.constant 0 : index
    %51 = vector.load %arg2[%c256, %c0_14] : memref<1152x128xbf16, #tpu.memory_space<vmem>>, vector<256x128xbf16>
    %cst_15 = arith.constant dense<0.000000e+00> : vector<256x128xf32>
    %52 = tpu.matmul %50, %51, %cst_15 {dimension_numbers = #tpu.dot_dimension_numbers<[1], [0], [0], [1], [0, 0, 1, 1], [], []>} : vector<256x256xbf16>, vector<256x128xbf16>, vector<256x128xf32> -> vector<256x128xf32>
    %53 = arith.addf %36, %52 : vector<256x128xf32>
    %54 = arith.truncf %20 : vector<256x128xf32> to vector<256x128xbf16>
    %c255_i32 = arith.constant 255 : i32
    %55 = tpu.dynamic_rotate %20 by %c255_i32 dim 0 : vector<256x128xf32>, i32 -> vector<256x128xf32>
    %cst_16 = arith.constant 0.000000e+00 : f32
    %56 = vector.shape_cast %17 : vector<256x1xi1> to vector<256x1xi1>
    %57 = vector.broadcast %56 : vector<256x1xi1> to vector<256x128xi1>
    %58 = vector.broadcast %cst_16 : f32 to vector<256x128xf32>
    %59 = arith.select %57, %55, %58 : vector<256x128xi1>, vector<256x128xf32>
    %60 = arith.truncf %59 : vector<256x128xf32> to vector<256x128xbf16>
    %61 = tpu.concatenate %54, %60 in 1 : vector<256x128xbf16>, vector<256x128xbf16> -> vector<256x256xbf16>
    %c512 = arith.constant 512 : index
    %c0_17 = arith.constant 0 : index
    %62 = vector.load %arg2[%c512, %c0_17] : memref<1152x128xbf16, #tpu.memory_space<vmem>>, vector<256x128xbf16>
    %cst_18 = arith.constant dense<0.000000e+00> : vector<256x128xf32>
    %63 = tpu.matmul %61, %62, %cst_18 {dimension_numbers = #tpu.dot_dimension_numbers<[1], [0], [0], [1], [0, 0, 1, 1], [], []>} : vector<256x256xbf16>, vector<256x128xbf16>, vector<256x128xf32> -> vector<256x128xf32>
    %64 = arith.addf %53, %63 : vector<256x128xf32>
    %c241_i32 = arith.constant 241 : i32
    %65 = tpu.dynamic_rotate %20 by %c241_i32 dim 0 : vector<256x128xf32>, i32 -> vector<256x128xf32>
    %66 = arith.andi %13, %15 : vector<256x1xi1>
    %cst_19 = arith.constant 0.000000e+00 : f32
    %67 = vector.shape_cast %66 : vector<256x1xi1> to vector<256x1xi1>
    %68 = vector.broadcast %67 : vector<256x1xi1> to vector<256x128xi1>
    %69 = vector.broadcast %cst_19 : f32 to vector<256x128xf32>
    %70 = arith.select %68, %65, %69 : vector<256x128xi1>, vector<256x128xf32>
    %71 = arith.truncf %70 : vector<256x128xf32> to vector<256x128xbf16>
    %c240_i32_20 = arith.constant 240 : i32
    %72 = tpu.dynamic_rotate %20 by %c240_i32_20 dim 0 : vector<256x128xf32>, i32 -> vector<256x128xf32>
    %cst_21 = arith.constant 0.000000e+00 : f32
    %73 = vector.shape_cast %13 : vector<256x1xi1> to vector<256x1xi1>
    %74 = vector.broadcast %73 : vector<256x1xi1> to vector<256x128xi1>
    %75 = vector.broadcast %cst_21 : f32 to vector<256x128xf32>
    %76 = arith.select %74, %72, %75 : vector<256x128xi1>, vector<256x128xf32>
    %77 = arith.truncf %76 : vector<256x128xf32> to vector<256x128xbf16>
    %78 = tpu.concatenate %71, %77 in 1 : vector<256x128xbf16>, vector<256x128xbf16> -> vector<256x256xbf16>
    %c768 = arith.constant 768 : index
    %c0_22 = arith.constant 0 : index
    %79 = vector.load %arg2[%c768, %c0_22] : memref<1152x128xbf16, #tpu.memory_space<vmem>>, vector<256x128xbf16>
    %cst_23 = arith.constant dense<0.000000e+00> : vector<256x128xf32>
    %80 = tpu.matmul %78, %79, %cst_23 {dimension_numbers = #tpu.dot_dimension_numbers<[1], [0], [0], [1], [0, 0, 1, 1], [], []>} : vector<256x256xbf16>, vector<256x128xbf16>, vector<256x128xf32> -> vector<256x128xf32>
    %81 = arith.addf %64, %80 : vector<256x128xf32>
    %c239_i32 = arith.constant 239 : i32
    %82 = tpu.dynamic_rotate %20 by %c239_i32 dim 0 : vector<256x128xf32>, i32 -> vector<256x128xf32>
    %83 = arith.andi %13, %17 : vector<256x1xi1>
    %cst_24 = arith.constant 0.000000e+00 : f32
    %84 = vector.shape_cast %83 : vector<256x1xi1> to vector<256x1xi1>
    %85 = vector.broadcast %84 : vector<256x1xi1> to vector<256x128xi1>
    %86 = vector.broadcast %cst_24 : f32 to vector<256x128xf32>
    %87 = arith.select %85, %82, %86 : vector<256x128xi1>, vector<256x128xf32>
    %88 = arith.truncf %87 : vector<256x128xf32> to vector<256x128xbf16>
    %c1024 = arith.constant 1024 : index
    %c0_25 = arith.constant 0 : index
    %89 = vector.load %arg2[%c1024, %c0_25] : memref<1152x128xbf16, #tpu.memory_space<vmem>>, vector<128x128xbf16>
    %cst_26 = arith.constant dense<0.000000e+00> : vector<256x128xf32>
    %90 = tpu.matmul %88, %89, %cst_26 {dimension_numbers = #tpu.dot_dimension_numbers<[1], [0], [0], [1], [0, 0, 1, 1], [], []>} : vector<256x128xbf16>, vector<128x128xbf16>, vector<256x128xf32> -> vector<256x128xf32>
    %91 = arith.addf %81, %90 : vector<256x128xf32>
    %c0_27 = arith.constant 0 : index
    %c0_28 = arith.constant 0 : index
    %92 = vector.load %arg3[%c0_27, %c0_28] : memref<1x128xf32, #tpu.memory_space<vmem>>, vector<1x128xf32>
    %93 = vector.broadcast %92 : vector<1x128xf32> to vector<256x128xf32>
    %94 = arith.mulf %91, %93 : vector<256x128xf32>
    %c0_29 = arith.constant 0 : index
    %c0_30 = arith.constant 0 : index
    %95 = vector.load %arg4[%c0_29, %c0_30] : memref<1x128xf32, #tpu.memory_space<vmem>>, vector<1x128xf32>
    %96 = vector.broadcast %95 : vector<1x128xf32> to vector<256x128xf32>
    %97 = arith.addf %94, %96 : vector<256x128xf32>
    %cst_31 = arith.constant 0.000000e+00 : f32
    %98 = vector.broadcast %cst_31 : f32 to vector<256x128xf32>
    %99 = arith.maximumf %97, %98 : vector<256x128xf32>
    %c17_i32_32 = arith.constant 17 : i32
    %100 = tpu.dynamic_rotate %99 by %c17_i32_32 dim 0 : vector<256x128xf32>, i32 -> vector<256x128xf32>
    %101 = arith.andi %11, %15 : vector<256x1xi1>
    %cst_33 = arith.constant 0.000000e+00 : f32
    %102 = vector.shape_cast %101 : vector<256x1xi1> to vector<256x1xi1>
    %103 = vector.broadcast %102 : vector<256x1xi1> to vector<256x128xi1>
    %104 = vector.broadcast %cst_33 : f32 to vector<256x128xf32>
    %105 = arith.select %103, %100, %104 : vector<256x128xi1>, vector<256x128xf32>
    %106 = arith.truncf %105 : vector<256x128xf32> to vector<256x128xbf16>
    %c16_i32_34 = arith.constant 16 : i32
    %107 = tpu.dynamic_rotate %99 by %c16_i32_34 dim 0 : vector<256x128xf32>, i32 -> vector<256x128xf32>
    %cst_35 = arith.constant 0.000000e+00 : f32
    %108 = vector.shape_cast %11 : vector<256x1xi1> to vector<256x1xi1>
    %109 = vector.broadcast %108 : vector<256x1xi1> to vector<256x128xi1>
    %110 = vector.broadcast %cst_35 : f32 to vector<256x128xf32>
    %111 = arith.select %109, %107, %110 : vector<256x128xi1>, vector<256x128xf32>
    %112 = arith.truncf %111 : vector<256x128xf32> to vector<256x128xbf16>
    %113 = tpu.concatenate %106, %112 in 1 : vector<256x128xbf16>, vector<256x128xbf16> -> vector<256x256xbf16>
    %c0_36 = arith.constant 0 : index
    %c0_37 = arith.constant 0 : index
    %114 = vector.load %arg5[%c0_36, %c0_37] : memref<1152x128xbf16, #tpu.memory_space<vmem>>, vector<256x128xbf16>
    %cst_38 = arith.constant dense<0.000000e+00> : vector<256x128xf32>
    %115 = tpu.matmul %113, %114, %cst_38 {dimension_numbers = #tpu.dot_dimension_numbers<[1], [0], [0], [1], [0, 0, 1, 1], [], []>} : vector<256x256xbf16>, vector<256x128xbf16>, vector<256x128xf32> -> vector<256x128xf32>
    %c15_i32_39 = arith.constant 15 : i32
    %116 = tpu.dynamic_rotate %99 by %c15_i32_39 dim 0 : vector<256x128xf32>, i32 -> vector<256x128xf32>
    %117 = arith.andi %11, %17 : vector<256x1xi1>
    %cst_40 = arith.constant 0.000000e+00 : f32
    %118 = vector.shape_cast %117 : vector<256x1xi1> to vector<256x1xi1>
    %119 = vector.broadcast %118 : vector<256x1xi1> to vector<256x128xi1>
    %120 = vector.broadcast %cst_40 : f32 to vector<256x128xf32>
    %121 = arith.select %119, %116, %120 : vector<256x128xi1>, vector<256x128xf32>
    %122 = arith.truncf %121 : vector<256x128xf32> to vector<256x128xbf16>
    %c1_i32_41 = arith.constant 1 : i32
    %123 = tpu.dynamic_rotate %99 by %c1_i32_41 dim 0 : vector<256x128xf32>, i32 -> vector<256x128xf32>
    %cst_42 = arith.constant 0.000000e+00 : f32
    %124 = vector.shape_cast %15 : vector<256x1xi1> to vector<256x1xi1>
    %125 = vector.broadcast %124 : vector<256x1xi1> to vector<256x128xi1>
    %126 = vector.broadcast %cst_42 : f32 to vector<256x128xf32>
    %127 = arith.select %125, %123, %126 : vector<256x128xi1>, vector<256x128xf32>
    %128 = arith.truncf %127 : vector<256x128xf32> to vector<256x128xbf16>
    %129 = tpu.concatenate %122, %128 in 1 : vector<256x128xbf16>, vector<256x128xbf16> -> vector<256x256xbf16>
    %c256_43 = arith.constant 256 : index
    %c0_44 = arith.constant 0 : index
    %130 = vector.load %arg5[%c256_43, %c0_44] : memref<1152x128xbf16, #tpu.memory_space<vmem>>, vector<256x128xbf16>
    %cst_45 = arith.constant dense<0.000000e+00> : vector<256x128xf32>
    %131 = tpu.matmul %129, %130, %cst_45 {dimension_numbers = #tpu.dot_dimension_numbers<[1], [0], [0], [1], [0, 0, 1, 1], [], []>} : vector<256x256xbf16>, vector<256x128xbf16>, vector<256x128xf32> -> vector<256x128xf32>
    %132 = arith.addf %115, %131 : vector<256x128xf32>
    %133 = arith.truncf %99 : vector<256x128xf32> to vector<256x128xbf16>
    %c255_i32_46 = arith.constant 255 : i32
    %134 = tpu.dynamic_rotate %99 by %c255_i32_46 dim 0 : vector<256x128xf32>, i32 -> vector<256x128xf32>
    %cst_47 = arith.constant 0.000000e+00 : f32
    %135 = vector.shape_cast %17 : vector<256x1xi1> to vector<256x1xi1>
    %136 = vector.broadcast %135 : vector<256x1xi1> to vector<256x128xi1>
    %137 = vector.broadcast %cst_47 : f32 to vector<256x128xf32>
    %138 = arith.select %136, %134, %137 : vector<256x128xi1>, vector<256x128xf32>
    %139 = arith.truncf %138 : vector<256x128xf32> to vector<256x128xbf16>
    %140 = tpu.concatenate %133, %139 in 1 : vector<256x128xbf16>, vector<256x128xbf16> -> vector<256x256xbf16>
    %c512_48 = arith.constant 512 : index
    %c0_49 = arith.constant 0 : index
    %141 = vector.load %arg5[%c512_48, %c0_49] : memref<1152x128xbf16, #tpu.memory_space<vmem>>, vector<256x128xbf16>
    %cst_50 = arith.constant dense<0.000000e+00> : vector<256x128xf32>
    %142 = tpu.matmul %140, %141, %cst_50 {dimension_numbers = #tpu.dot_dimension_numbers<[1], [0], [0], [1], [0, 0, 1, 1], [], []>} : vector<256x256xbf16>, vector<256x128xbf16>, vector<256x128xf32> -> vector<256x128xf32>
    %143 = arith.addf %132, %142 : vector<256x128xf32>
    %c241_i32_51 = arith.constant 241 : i32
    %144 = tpu.dynamic_rotate %99 by %c241_i32_51 dim 0 : vector<256x128xf32>, i32 -> vector<256x128xf32>
    %145 = arith.andi %13, %15 : vector<256x1xi1>
    %cst_52 = arith.constant 0.000000e+00 : f32
    %146 = vector.shape_cast %145 : vector<256x1xi1> to vector<256x1xi1>
    %147 = vector.broadcast %146 : vector<256x1xi1> to vector<256x128xi1>
    %148 = vector.broadcast %cst_52 : f32 to vector<256x128xf32>
    %149 = arith.select %147, %144, %148 : vector<256x128xi1>, vector<256x128xf32>
    %150 = arith.truncf %149 : vector<256x128xf32> to vector<256x128xbf16>
    %c240_i32_53 = arith.constant 240 : i32
    %151 = tpu.dynamic_rotate %99 by %c240_i32_53 dim 0 : vector<256x128xf32>, i32 -> vector<256x128xf32>
    %cst_54 = arith.constant 0.000000e+00 : f32
    %152 = vector.shape_cast %13 : vector<256x1xi1> to vector<256x1xi1>
    %153 = vector.broadcast %152 : vector<256x1xi1> to vector<256x128xi1>
    %154 = vector.broadcast %cst_54 : f32 to vector<256x128xf32>
    %155 = arith.select %153, %151, %154 : vector<256x128xi1>, vector<256x128xf32>
    %156 = arith.truncf %155 : vector<256x128xf32> to vector<256x128xbf16>
    %157 = tpu.concatenate %150, %156 in 1 : vector<256x128xbf16>, vector<256x128xbf16> -> vector<256x256xbf16>
    %c768_55 = arith.constant 768 : index
    %c0_56 = arith.constant 0 : index
    %158 = vector.load %arg5[%c768_55, %c0_56] : memref<1152x128xbf16, #tpu.memory_space<vmem>>, vector<256x128xbf16>
    %cst_57 = arith.constant dense<0.000000e+00> : vector<256x128xf32>
    %159 = tpu.matmul %157, %158, %cst_57 {dimension_numbers = #tpu.dot_dimension_numbers<[1], [0], [0], [1], [0, 0, 1, 1], [], []>} : vector<256x256xbf16>, vector<256x128xbf16>, vector<256x128xf32> -> vector<256x128xf32>
    %160 = arith.addf %143, %159 : vector<256x128xf32>
    %c239_i32_58 = arith.constant 239 : i32
    %161 = tpu.dynamic_rotate %99 by %c239_i32_58 dim 0 : vector<256x128xf32>, i32 -> vector<256x128xf32>
    %162 = arith.andi %13, %17 : vector<256x1xi1>
    %cst_59 = arith.constant 0.000000e+00 : f32
    %163 = vector.shape_cast %162 : vector<256x1xi1> to vector<256x1xi1>
    %164 = vector.broadcast %163 : vector<256x1xi1> to vector<256x128xi1>
    %165 = vector.broadcast %cst_59 : f32 to vector<256x128xf32>
    %166 = arith.select %164, %161, %165 : vector<256x128xi1>, vector<256x128xf32>
    %167 = arith.truncf %166 : vector<256x128xf32> to vector<256x128xbf16>
    %c1024_60 = arith.constant 1024 : index
    %c0_61 = arith.constant 0 : index
    %168 = vector.load %arg5[%c1024_60, %c0_61] : memref<1152x128xbf16, #tpu.memory_space<vmem>>, vector<128x128xbf16>
    %cst_62 = arith.constant dense<0.000000e+00> : vector<256x128xf32>
    %169 = tpu.matmul %167, %168, %cst_62 {dimension_numbers = #tpu.dot_dimension_numbers<[1], [0], [0], [1], [0, 0, 1, 1], [], []>} : vector<256x128xbf16>, vector<128x128xbf16>, vector<256x128xf32> -> vector<256x128xf32>
    %170 = arith.addf %160, %169 : vector<256x128xf32>
    %c0_63 = arith.constant 0 : index
    %c0_64 = arith.constant 0 : index
    %171 = vector.load %arg6[%c0_63, %c0_64] : memref<1x128xf32, #tpu.memory_space<vmem>>, vector<1x128xf32>
    %172 = vector.broadcast %171 : vector<1x128xf32> to vector<256x128xf32>
    %173 = arith.mulf %170, %172 : vector<256x128xf32>
    %c0_65 = arith.constant 0 : index
    %c0_66 = arith.constant 0 : index
    %174 = vector.load %arg7[%c0_65, %c0_66] : memref<1x128xf32, #tpu.memory_space<vmem>>, vector<1x128xf32>
    %175 = vector.broadcast %174 : vector<1x128xf32> to vector<256x128xf32>
    %176 = arith.addf %173, %175 : vector<256x128xf32>
    %c0_67 = arith.constant 0 : index
    %c0_68 = arith.constant 0 : index
    %c0_69 = arith.constant 0 : index
    %177 = vector.load %arg1[%c0_67, %c0_68, %c0_69] : memref<1x256x128xbf16, #tpu.memory_space<vmem>>, vector<1x256x128xbf16>
    %178 = vector.shape_cast %177 : vector<1x256x128xbf16> to vector<256x128xbf16>
    %179 = arith.extf %178 : vector<256x128xbf16> to vector<256x128xf32>
    %180 = arith.addf %176, %179 : vector<256x128xf32>
    %cst_70 = arith.constant 0.000000e+00 : f32
    %181 = vector.broadcast %cst_70 : f32 to vector<256x128xf32>
    %182 = arith.maximumf %180, %181 : vector<256x128xf32>
    %183 = arith.truncf %182 : vector<256x128xf32> to vector<256x128xbf16>
    %c0_71 = arith.constant 0 : index
    %c0_72 = arith.constant 0 : index
    %c0_73 = arith.constant 0 : index
    %184 = vector.load %arg8[%c0_71, %c0_72, %c0_73] : memref<1x256x128xbf16, #tpu.memory_space<vmem>>, vector<1x256x128xbf16>
    %185 = vector.shape_cast %184 : vector<1x256x128xbf16> to vector<256x128xbf16>
    %186 = vector.shape_cast %183 : vector<256x128xbf16> to vector<1x256x128xbf16>
    tpu.vector_store %arg8[%c0_71, %c0_72, %c0_73], %186 {strides = array<i32>} : memref<1x256x128xbf16, #tpu.memory_space<vmem>>, vector<1x256x128xbf16>,
    return
  }
  func.func @transform_0(%arg0: i32) -> (i32, i32, i32) {
    %c0_i32 = arith.constant 0 : i32
    %c0_i32_0 = arith.constant 0 : i32
    %c0_i32_1 = arith.constant 0 : i32
    return %arg0, %c0_i32, %c0_i32_0 : i32, i32, i32
  }
  func.func @transform_1(%arg0: i32) -> (i32, i32) {
    %c0_i32 = arith.constant 0 : i32
    %c0_i32_0 = arith.constant 0 : i32
    %c0_i32_1 = arith.constant 0 : i32
    return %c0_i32, %c0_i32_0 : i32, i32
  }
  func.func @transform_2(%arg0: i32) -> (i32, i32) {
    %c0_i32 = arith.constant 0 : i32
    %c0_i32_0 = arith.constant 0 : i32
    %c0_i32_1 = arith.constant 0 : i32
    return %c0_i32, %c0_i32_0 : i32, i32
  }
  func.func @transform_3(%arg0: i32) -> (i32, i32) {
    %c0_i32 = arith.constant 0 : i32
    %c0_i32_0 = arith.constant 0 : i32
    %c0_i32_1 = arith.constant 0 : i32
    return %c0_i32, %c0_i32_0 : i32, i32
  }
  func.func @transform_4(%arg0: i32) -> (i32, i32) {
    %c0_i32 = arith.constant 0 : i32
    %c0_i32_0 = arith.constant 0 : i32
    %c0_i32_1 = arith.constant 0 : i32
    return %c0_i32, %c0_i32_0 : i32, i32
  }
  func.func @transform_5(%arg0: i32) -> (i32, i32) {
    %c0_i32 = arith.constant 0 : i32
    %c0_i32_0 = arith.constant 0 : i32
    %c0_i32_1 = arith.constant 0 : i32
    return %c0_i32, %c0_i32_0 : i32, i32
  }
  func.func @transform_6(%arg0: i32) -> (i32, i32) {
    %c0_i32 = arith.constant 0 : i32
    %c0_i32_0 = arith.constant 0 : i32
    %c0_i32_1 = arith.constant 0 : i32
    return %c0_i32, %c0_i32_0 : i32, i32
  }
  func.func @transform_7(%arg0: i32) -> (i32, i32, i32) {
    %c0_i32 = arith.constant 0 : i32
    %c0_i32_0 = arith.constant 0 : i32
    %c0_i32_1 = arith.constant 0 : i32
    return %arg0, %c0_i32, %c0_i32_0 : i32, i32, i32
  }
}

</mosaic_0001>

<llo_original>
// kernel: basic_block_forward.1
$region0: #{basic_block_forward.1}
  #allocation0 [shape = 'u32[]', space=smem, size = 0x4, offset = 0x4, fixed_abs, tag = 'smem constant byte address 0x4 - core index']
  #allocation1 [shape = 'u32[144,128]{1,0:T(1,128)}', space=vmem, size = 0x12000, scoped, tag = 'internal scratch']
  %s0 = inlined_call_operand.vmem [shape: bf16[2,256,128], index: 0, kind: input, shape index: {}]
  %s1 = inlined_call_operand.vmem [shape: bf16[1152,128], index: 1, kind: input, shape index: {}]
  %s2 = inlined_call_operand.vmem [shape: f32[1,128], index: 2, kind: input, shape index: {}]
  %s3 = inlined_call_operand.vmem [shape: f32[1,128], index: 3, kind: input, shape index: {}]
  %s4 = inlined_call_operand.vmem [shape: bf16[1152,128], index: 4, kind: input, shape index: {}]
  %s5 = inlined_call_operand.vmem [shape: f32[1,128], index: 5, kind: input, shape index: {}]
  %s6 = inlined_call_operand.vmem [shape: f32[1,128], index: 6, kind: input, shape index: {}]
  %s7 = inlined_call_operand.vmem [shape: bf16[2,256,128], index: 7, kind: output, shape index: {}]
  %s8 = sld [smem:[#allocation0]]
  $region61: #{basic_block_forward.1} parent=0
    _
  %s10 = ssub.s32 1, %s8
  %s11 = scalar_select 0, %s10, %s8
  loop: start=0, step=1, limit=4
  $region2: #{basic_block_forward.1} parent=0 // loop_pre_header
    _
  $region3: #{basic_block_forward.1} parent=0 // loop_header
    %s13 = sphi 0, %s17
    %p14 = scmp.ge.s32.totalorder %s13, 4
    %s23 = sphi 0, %s25
    %s26 = sphi 0, %s23
    %s27 = sphi 0, %s26
    %s43 = sphi 0, %s27
    %s47 = sphi 0, %s47
    %s49 = sphi 0, %s47
    %s50 = sphi 0, %s49
    %s64 = sphi 0, %s50
    %s68 = sphi 0, %s68
    %s70 = sphi 0, %s68
    %s71 = sphi 0, %s70
    %s85 = sphi 0, %s71
    %s89 = sphi 0, %s89
    %s91 = sphi 0, %s89
    %s92 = sphi 0, %s91
    %s106 = sphi 0, %s92
    %s110 = sphi 0, %s110
    %s112 = sphi 0, %s110
    %s113 = sphi 0, %s112
    %s127 = sphi 0, %s113
    %s131 = sphi 0, %s131
    %s133 = sphi 0, %s131
    %s134 = sphi 0, %s133
    %s148 = sphi 0, %s134
    %s152 = sphi 0, %s152
    %s154 = sphi 0, %s152
    %s155 = sphi 0, %s154
    %s169 = sphi 0, %s155
    %s175 = sphi 0, %s177
    %s178 = sphi 0, %s175
    %s179 = sphi 0, %s178
    %s195 = sphi 0, %s179
  $region4: #{basic_block_forward.1} parent=0 // loop_header_branch
    %16 = sbr.rel (%p14) target = $region8
  $region5: #{basic_block_forward.1} parent=0 // loop_body
    %s18 = ssub.s32 %s13, 1
    %s19 = ssub.s32 %s13, 2
    %s20 = sadd.s32 %s13, 1
    %s21 = ssub.s32 %s13, %s20
    %p22 = scmp.eq.s32.totalorder %s21, 0
    %s24 = sadd.s32 %s23, 1
    %s25 = scalar_select %p22, %s23, %s24
    %p28 = pneg %p22
    %p29 = scmp.eq.s32.totalorder %s13, 1
    %p30 = por %p28, %p29
    %p31 = scmp.ne.s32.totalorder %s23, %s26
    %p32 = scmp.eq.s32.totalorder %s13, 0
    %p33 = por %p31, %p32
    %p34 = scmp.ne.s32.totalorder %s23, %s26
    %p35 = scmp.eq.s32.totalorder %s18, 1
    %p36 = por %p34, %p35
    %p37 = scmp.ne.s32.totalorder %s26, %s27
    %p38 = scmp.eq.s32.totalorder %s18, 0
    %p39 = por %p37, %p38
    %p40 = scmp.ne.s32.totalorder %s26, %s27
    %p41 = scmp.eq.s32.totalorder %s19, 1
    %p42 = por %p40, %p41
    %p44 = scmp.ne.s32.totalorder %s27, %s43
    %p45 = scmp.eq.s32.totalorder %s19, 0
    %p46 = por %p44, %p45
    %s48 = sadd.s32 %s47, 1
    %p51 = scmp.eq.s32.totalorder %s13, 1
    %p52 = scmp.ne.s32.totalorder %s47, %s49
    %p53 = scmp.eq.s32.totalorder %s13, 0
    %p54 = por %p52, %p53
    %p55 = scmp.ne.s32.totalorder %s47, %s49
    %p56 = scmp.eq.s32.totalorder %s18, 1
    %p57 = por %p55, %p56
    %p58 = scmp.ne.s32.totalorder %s49, %s50
    %p59 = scmp.eq.s32.totalorder %s18, 0
    %p60 = por %p58, %p59
    %p61 = scmp.ne.s32.totalorder %s49, %s50
    %p62 = scmp.eq.s32.totalorder %s19, 1
    %p63 = por %p61, %p62
    %p65 = scmp.ne.s32.totalorder %s50, %s64
    %p66 = scmp.eq.s32.totalorder %s19, 0
    %p67 = por %p65, %p66
    %s69 = sadd.s32 %s68, 1
    %p72 = scmp.eq.s32.totalorder %s13, 1
    %p73 = scmp.ne.s32.totalorder %s68, %s70
    %p74 = scmp.eq.s32.totalorder %s13, 0
    %p75 = por %p73, %p74
    %p76 = scmp.ne.s32.totalorder %s68, %s70
    %p77 = scmp.eq.s32.totalorder %s18, 1
    %p78 = por %p76, %p77
    %p79 = scmp.ne.s32.totalorder %s70, %s71
    %p80 = scmp.eq.s32.totalorder %s18, 0
    %p81 = por %p79, %p80
    %p82 = scmp.ne.s32.totalorder %s70, %s71
    %p83 = scmp.eq.s32.totalorder %s19, 1
    %p84 = por %p82, %p83
    %p86 = scmp.ne.s32.totalorder %s71, %s85
    %p87 = scmp.eq.s32.totalorder %s19, 0
    %p88 = por %p86, %p87
    %s90 = sadd.s32 %s89, 1
    %p93 = scmp.eq.s32.totalorder %s13, 1
    %p94 = scmp.ne.s32.totalorder %s89, %s91
    %p95 = scmp.eq.s32.totalorder %s13, 0
    %p96 = por %p94, %p95
    %p97 = scmp.ne.s32.totalorder %s89, %s91
    %p98 = scmp.eq.s32.totalorder %s18, 1
    %p99 = por %p97, %p98
    %p100 = scmp.ne.s32.totalorder %s91, %s92
    %p101 = scmp.eq.s32.totalorder %s18, 0
    %p102 = por %p100, %p101
    %p103 = scmp.ne.s32.totalorder %s91, %s92
    %p104 = scmp.eq.s32.totalorder %s19, 1
    %p105 = por %p103, %p104
    %p107 = scmp.ne.s32.totalorder %s92, %s106
    %p108 = scmp.eq.s32.totalorder %s19, 0
    %p109 = por %p107, %p108
    %s111 = sadd.s32 %s110, 1
    %p114 = scmp.eq.s32.totalorder %s13, 1
    %p115 = scmp.ne.s32.totalorder %s110, %s112
    %p116 = scmp.eq.s32.totalorder %s13, 0
    %p117 = por %p115, %p116
    %p118 = scmp.ne.s32.totalorder %s110, %s112
    %p119 = scmp.eq.s32.totalorder %s18, 1
    %p120 = por %p118, %p119
    %p121 = scmp.ne.s32.totalorder %s112, %s113
    %p122 = scmp.eq.s32.totalorder %s18, 0
    %p123 = por %p121, %p122
    %p124 = scmp.ne.s32.totalorder %s112, %s113
    %p125 = scmp.eq.s32.totalorder %s19, 1
    %p126 = por %p124, %p125
    %p128 = scmp.ne.s32.totalorder %s113, %s127
    %p129 = scmp.eq.s32.totalorder %s19, 0
    %p130 = por %p128, %p129
    %s132 = sadd.s32 %s131, 1
    %p135 = scmp.eq.s32.totalorder %s13, 1
    %p136 = scmp.ne.s32.totalorder %s131, %s133
    %p137 = scmp.eq.s32.totalorder %s13, 0
    %p138 = por %p136, %p137
    %p139 = scmp.ne.s32.totalorder %s131, %s133
    %p140 = scmp.eq.s32.totalorder %s18, 1
    %p141 = por %p139, %p140
    %p142 = scmp.ne.s32.totalorder %s133, %s134
    %p143 = scmp.eq.s32.totalorder %s18, 0
    %p144 = por %p142, %p143
    %p145 = scmp.ne.s32.totalorder %s133, %s134
    %p146 = scmp.eq.s32.totalorder %s19, 1
    %p147 = por %p145, %p146
    %p149 = scmp.ne.s32.totalorder %s134, %s148
    %p150 = scmp.eq.s32.totalorder %s19, 0
    %p151 = por %p149, %p150
    %s153 = sadd.s32 %s152, 1
    %p156 = scmp.eq.s32.totalorder %s13, 1
    %p157 = scmp.ne.s32.totalorder %s152, %s154
    %p158 = scmp.eq.s32.totalorder %s13, 0
    %p159 = por %p157, %p158
    %p160 = scmp.ne.s32.totalorder %s152, %s154
    %p161 = scmp.eq.s32.totalorder %s18, 1
    %p162 = por %p160, %p161
    %p163 = scmp.ne.s32.totalorder %s154, %s155
    %p164 = scmp.eq.s32.totalorder %s18, 0
    %p165 = por %p163, %p164
    %p166 = scmp.ne.s32.totalorder %s154, %s155
    %p167 = scmp.eq.s32.totalorder %s19, 1
    %p168 = por %p166, %p167
    %p170 = scmp.ne.s32.totalorder %s155, %s169
    %p171 = scmp.eq.s32.totalorder %s19, 0
    %p172 = por %p170, %p171
    %s173 = ssub.s32 %s13, %s20
    %p174 = scmp.eq.s32.totalorder %s173, 0
    %s176 = sadd.s32 %s175, 1
    %s177 = scalar_select %p174, %s175, %s176
    %p180 = pneg %p174
    %p181 = scmp.eq.s32.totalorder %s13, 1
    %p182 = por %p180, %p181
    %p183 = scmp.ne.s32.totalorder %s175, %s178
    %p184 = scmp.eq.s32.totalorder %s13, 0
    %p185 = por %p183, %p184
    %p186 = scmp.ne.s32.totalorder %s175, %s178
    %p187 = scmp.eq.s32.totalorder %s18, 1
    %p188 = por %p186, %p187
    %p189 = scmp.ne.s32.totalorder %s178, %s179
    %p190 = scmp.eq.s32.totalorder %s18, 0
    %p191 = por %p189, %p190
    %p192 = scmp.ne.s32.totalorder %s178, %s179
    %p193 = scmp.eq.s32.totalorder %s19, 1
    %p194 = por %p192, %p193
    %p196 = scmp.ne.s32.totalorder %s179, %s195
    %p197 = scmp.eq.s32.totalorder %s19, 0
    %p198 = por %p196, %p197
    %p199 = scmp.le.s32.totalorder 1, %s13
    %p200 = scmp.lt.s32.totalorder %s13, 3
    %p201 = pnand %p199, %p200
    %p202 = pneg %p201
    // Predicated region
    $region9: #{basic_block_forward.1} parent=5 // pred_check
      _
    $region10: #{basic_block_forward.1} parent=5 // pred_check_branch
      %204 = sbr.rel (%p201) target = $region12
    $region11: #{basic_block_forward.1} parent=5 // pred_region
      %s205 = ssub.s32 %s13, 1
      // Predicated region
      $region13: #{basic_block_forward.1} parent=11 // pred_check
        %p206 = pneg %p60
      $region14: #{basic_block_forward.1} parent=11 // pred_check_branch
        %208 = sbr.rel (%p206) target = $region16
      $region15: #{basic_block_forward.1} parent=11 // pred_region
        _
      $region16: #{basic_block_forward.1} parent=11 // pred_fallthru
        _
      // Predicated region
      $region17: #{basic_block_forward.1} parent=11 // pred_check
        %p209 = pneg %p81
      $region18: #{basic_block_forward.1} parent=11 // pred_check_branch
        %211 = sbr.rel (%p209) target = $region20
      $region19: #{basic_block_forward.1} parent=11 // pred_region
        _
      $region20: #{basic_block_forward.1} parent=11 // pred_fallthru
        _
      // Predicated region
      $region21: #{basic_block_forward.1} parent=11 // pred_check
        %p212 = pneg %p102
      $region22: #{basic_block_forward.1} parent=11 // pred_check_branch
        %214 = sbr.rel (%p212) target = $region24
      $region23: #{basic_block_forward.1} parent=11 // pred_region
        _
      $region24: #{basic_block_forward.1} parent=11 // pred_fallthru
        _
      // Predicated region
      $region25: #{basic_block_forward.1} parent=11 // pred_check
        %p215 = pneg %p123
      $region26: #{basic_block_forward.1} parent=11 // pred_check_branch
        %217 = sbr.rel (%p215) target = $region28
      $region27: #{basic_block_forward.1} parent=11 // pred_region
        _
      $region28: #{basic_block_forward.1} parent=11 // pred_fallthru
        _
      // Predicated region
      $region29: #{basic_block_forward.1} parent=11 // pred_check
        %p218 = pneg %p144
      $region30: #{basic_block_forward.1} parent=11 // pred_check_branch
        %220 = sbr.rel (%p218) target = $region32
      $region31: #{basic_block_forward.1} parent=11 // pred_region
        _
      $region32: #{basic_block_forward.1} parent=11 // pred_fallthru
        _
      // Predicated region
      $region33: #{basic_block_forward.1} parent=11 // pred_check
        %p221 = pneg %p165
      $region34: #{basic_block_forward.1} parent=11 // pred_check_branch
        %223 = sbr.rel (%p221) target = $region36
      $region35: #{basic_block_forward.1} parent=11 // pred_region
        _
      $region36: #{basic_block_forward.1} parent=11 // pred_fallthru
        _
    $region12: #{basic_block_forward.1} parent=5 // pred_fallthru
      _
    %p224 = scmp.lt.s32.totalorder %s13, 2
    // Predicated region
    $region37: #{basic_block_forward.1} parent=5 // pred_check
      %p225 = pneg %p224
    $region38: #{basic_block_forward.1} parent=5 // pred_check_branch
      %227 = sbr.rel (%p225) target = $region40
    $region39: #{basic_block_forward.1} parent=5 // pred_region
      // Predicated region
      $region41: #{basic_block_forward.1} parent=39 // pred_check
        %p228 = pneg %p33
      $region42: #{basic_block_forward.1} parent=39 // pred_check_branch
        %230 = sbr.rel (%p228) target = $region44
      $region43: #{basic_block_forward.1} parent=39 // pred_region
        %p231 = scmp.lt.s32.totalorder %s13, 1
        %s232 = scalar_select %p231, %s13, 1
        %s233 = smul.addr %s232, 32
        %s234 = smul.addr %s233, 4
        %s235 = scalar_lea.vmem %s0, %s234
      $region44: #{basic_block_forward.1} parent=39 // pred_fallthru
        _
    $region40: #{basic_block_forward.1} parent=5 // pred_fallthru
      _
    %p236 = scmp.le.s32.totalorder 1, %s13
    %p237 = scmp.lt.s32.totalorder %s13, 3
    %p238 = pnand %p236, %p237
    %p239 = pneg %p238
    // Predicated region
    $region45: #{basic_block_forward.1} parent=5 // pred_check
      _
    $region46: #{basic_block_forward.1} parent=5 // pred_check_branch
      %241 = sbr.rel (%p238) target = $region48
    $region47: #{basic_block_forward.1} parent=5 // pred_region
      %s242 = ssub.s32 %s13, 1
      %p243 = scmp.lt.s32.totalorder %s18, 1
      %s244 = scalar_select %p243, %s18, 1
      %s245 = smul.addr %s244, 32
      %s246 = smul.addr %s245, 4
      %s247 = scalar_lea.vmem %s0, %s246
      %p248 = pneg %p39
      %p249 = pneg %p36
      %p250 = pneg %p60
      %p251 = pneg %p57
      %p252 = pneg %p81
      %p253 = pneg %p78
      %p254 = pneg %p102
      %p255 = pneg %p99
      %p256 = pneg %p123
      %p257 = pneg %p120
      %p258 = pneg %p144
      %p259 = pneg %p141
      %p260 = pneg %p165
      %p261 = pneg %p162
      %p262 = pneg %p191
      %p263 = pneg %p188
      %p264 = scmp.lt.s32.totalorder %s18, 1
      %s265 = scalar_select %p264, %s18, 1
      %s266 = smul.addr %s265, 32
      %s267 = smul.addr %s266, 4
      %s268 = scalar_lea.vmem %s7, %s267
      %p269 = scmp.lt.s32.totalorder %s18, 1
      %s270 = scalar_select %p269, %s18, 1
      %s271 = smul.addr %s270, 32
      %s272 = smul.addr %s271, 4
      %s273 = scalar_lea.vmem %s0, %s272
      %p274 = scmp.lt.s32.totalorder %s18, 1
      %s275 = scalar_select %p274, %s18, 1
      %s276 = smul.addr %s275, 32
      %s277 = smul.addr %s276, 4
      %s278 = scalar_lea.vmem %s7, %s277
      %v280 = vlaneseq
      %v281 = vshrl.u32 %v280, 7
      %v282 = vadd.s32 %v281, 8
      %v283 = vadd.s32 %v281, 16
      %v284 = vadd.s32 %v281, 24
      %v285 = vadd.s32 %v281, 32
      %v286 = vadd.s32 %v281, 40
      %v287 = vadd.s32 %v281, 48
      %v288 = vadd.s32 %v281, 56
      %v289 = vadd.s32 %v281, 64
      %v290 = vadd.s32 %v281, 72
      %v291 = vadd.s32 %v281, 80
      %v292 = vadd.s32 %v281, 88
      %v293 = vadd.s32 %v281, 96
      %v294 = vadd.s32 %v281, 104
      %v295 = vadd.s32 %v281, 112
      %v296 = vadd.s32 %v281, 120
      %v297 = vadd.s32 %v281, 128
      %v298 = vadd.s32 %v281, 136
      %v299 = vadd.s32 %v281, 144
      %v300 = vadd.s32 %v281, 152
      %v301 = vadd.s32 %v281, 160
      %v302 = vadd.s32 %v281, 168
      %v303 = vadd.s32 %v281, 176
      %v304 = vadd.s32 %v281, 184
      %v305 = vadd.s32 %v281, 192
      %v306 = vadd.s32 %v281, 200
      %v307 = vadd.s32 %v281, 208
      %v308 = vadd.s32 %v281, 216
      %v309 = vadd.s32 %v281, 224
      %v310 = vadd.s32 %v281, 232
      %v311 = vadd.s32 %v281, 240
      %v312 = vadd.s32 %v281, 248
      %v313 = vcvt.s32.f32 %v281
      %v314 = vcvt.s32.f32 %v282
      %v315 = vcvt.s32.f32 %v283
      %v316 = vcvt.s32.f32 %v284
      %v317 = vcvt.s32.f32 %v285
      %v318 = vcvt.s32.f32 %v286
      %v319 = vcvt.s32.f32 %v287
      %v320 = vcvt.s32.f32 %v288
      %v321 = vcvt.s32.f32 %v289
      %v322 = vcvt.s32.f32 %v290
      %v323 = vcvt.s32.f32 %v291
      %v324 = vcvt.s32.f32 %v292
      %v325 = vcvt.s32.f32 %v293
      %v326 = vcvt.s32.f32 %v294
      %v327 = vcvt.s32.f32 %v295
      %v328 = vcvt.s32.f32 %v296
      %v329 = vcvt.s32.f32 %v297
      %v330 = vcvt.s32.f32 %v298
      %v331 = vcvt.s32.f32 %v299
      %v332 = vcvt.s32.f32 %v300
      %v333 = vcvt.s32.f32 %v301
      %v334 = vcvt.s32.f32 %v302
      %v335 = vcvt.s32.f32 %v303
      %v336 = vcvt.s32.f32 %v304
      %v337 = vcvt.s32.f32 %v305
      %v338 = vcvt.s32.f32 %v306
      %v339 = vcvt.s32.f32 %v307
      %v340 = vcvt.s32.f32 %v308
      %v341 = vcvt.s32.f32 %v309
      %v342 = vcvt.s32.f32 %v310
      %v343 = vcvt.s32.f32 %v311
      %v344 = vcvt.s32.f32 %v312
      %v345 = vadd.f32 %v313, 0.5
      %v346 = vadd.f32 %v314, 0.5
      %v347 = vadd.f32 %v315, 0.5
      %v348 = vadd.f32 %v316, 0.5
      %v349 = vadd.f32 %v317, 0.5
      %v350 = vadd.f32 %v318, 0.5
      %v351 = vadd.f32 %v319, 0.5
      %v352 = vadd.f32 %v320, 0.5
      %v353 = vadd.f32 %v321, 0.5
      %v354 = vadd.f32 %v322, 0.5
      %v355 = vadd.f32 %v323, 0.5
      %v356 = vadd.f32 %v324, 0.5
      %v357 = vadd.f32 %v325, 0.5
      %v358 = vadd.f32 %v326, 0.5
      %v359 = vadd.f32 %v327, 0.5
      %v360 = vadd.f32 %v328, 0.5
      %v361 = vadd.f32 %v329, 0.5
      %v362 = vadd.f32 %v330, 0.5
      %v363 = vadd.f32 %v331, 0.5
      %v364 = vadd.f32 %v332, 0.5
      %v365 = vadd.f32 %v333, 0.5
      %v366 = vadd.f32 %v334, 0.5
      %v367 = vadd.f32 %v335, 0.5
      %v368 = vadd.f32 %v336, 0.5
      %v369 = vadd.f32 %v337, 0.5
      %v370 = vadd.f32 %v338, 0.5
      %v371 = vadd.f32 %v339, 0.5
      %v372 = vadd.f32 %v340, 0.5
      %v373 = vadd.f32 %v341, 0.5
      %v374 = vadd.f32 %v342, 0.5
      %v375 = vadd.f32 %v343, 0.5
      %v376 = vadd.f32 %v344, 0.5
      %v377 = vrcp.pop 16.0
      %v378 = vmul.f32 %v345, %v377
      %v379 = vmul.f32 %v346, %v377
      %v380 = vmul.f32 %v347, %v377
      %v381 = vmul.f32 %v348, %v377
      %v382 = vmul.f32 %v349, %v377
      %v383 = vmul.f32 %v350, %v377
      %v384 = vmul.f32 %v351, %v377
      %v385 = vmul.f32 %v352, %v377
      %v386 = vmul.f32 %v353, %v377
      %v387 = vmul.f32 %v354, %v377
      %v388 = vmul.f32 %v355, %v377
      %v389 = vmul.f32 %v356, %v377
      %v390 = vmul.f32 %v357, %v377
      %v391 = vmul.f32 %v358, %v377
      %v392 = vmul.f32 %v359, %v377
      %v393 = vmul.f32 %v360, %v377
      %v394 = vmul.f32 %v361, %v377
      %v395 = vmul.f32 %v362, %v377
      %v396 = vmul.f32 %v363, %v377
      %v397 = vmul.f32 %v364, %v377
      %v398 = vmul.f32 %v365, %v377
      %v399 = vmul.f32 %v366, %v377
      %v400 = vmul.f32 %v367, %v377
      %v401 = vmul.f32 %v368, %v377
      %v402 = vmul.f32 %v369, %v377
      %v403 = vmul.f32 %v370, %v377
      %v404 = vmul.f32 %v371, %v377
      %v405 = vmul.f32 %v372, %v377
      %v406 = vmul.f32 %v373, %v377
      %v407 = vmul.f32 %v374, %v377
      %v408 = vmul.f32 %v375, %v377
      %v409 = vmul.f32 %v376, %v377
      %v410 = vfloor.f32 %v378
      %v411 = vfloor.f32 %v379
      %v412 = vfloor.f32 %v380
      %v413 = vfloor.f32 %v381
      %v414 = vfloor.f32 %v382
      %v415 = vfloor.f32 %v383
      %v416 = vfloor.f32 %v384
      %v417 = vfloor.f32 %v385
      %v418 = vfloor.f32 %v386
      %v419 = vfloor.f32 %v387
      %v420 = vfloor.f32 %v388
      %v421 = vfloor.f32 %v389
      %v422 = vfloor.f32 %v390
      %v423 = vfloor.f32 %v391
      %v424 = vfloor.f32 %v392
      %v425 = vfloor.f32 %v393
      %v426 = vfloor.f32 %v394
      %v427 = vfloor.f32 %v395
      %v428 = vfloor.f32 %v396
      %v429 = vfloor.f32 %v397
      %v430 = vfloor.f32 %v398
      %v431 = vfloor.f32 %v399
      %v432 = vfloor.f32 %v400
      %v433 = vfloor.f32 %v401
      %v434 = vfloor.f32 %v402
      %v435 = vfloor.f32 %v403
      %v436 = vfloor.f32 %v404
      %v437 = vfloor.f32 %v405
      %v438 = vfloor.f32 %v406
      %v439 = vfloor.f32 %v407
      %v440 = vfloor.f32 %v408
      %v441 = vfloor.f32 %v409
      %v442 = vmul.f32 %v410, 16.0
      %v443 = vmul.f32 %v411, 16.0
      %v444 = vmul.f32 %v412, 16.0
      %v445 = vmul.f32 %v413, 16.0
      %v446 = vmul.f32 %v414, 16.0
      %v447 = vmul.f32 %v415, 16.0
      %v448 = vmul.f32 %v416, 16.0
      %v449 = vmul.f32 %v417, 16.0
      %v450 = vmul.f32 %v418, 16.0
      %v451 = vmul.f32 %v419, 16.0
      %v452 = vmul.f32 %v420, 16.0
      %v453 = vmul.f32 %v421, 16.0
      %v454 = vmul.f32 %v422, 16.0
      %v455 = vmul.f32 %v423, 16.0
      %v456 = vmul.f32 %v424, 16.0
      %v457 = vmul.f32 %v425, 16.0
      %v458 = vmul.f32 %v426, 16.0
      %v459 = vmul.f32 %v427, 16.0
      %v460 = vmul.f32 %v428, 16.0
      %v461 = vmul.f32 %v429, 16.0
      %v462 = vmul.f32 %v430, 16.0
      %v463 = vmul.f32 %v431, 16.0
      %v464 = vmul.f32 %v432, 16.0
      %v465 = vmul.f32 %v433, 16.0
      %v466 = vmul.f32 %v434, 16.0
      %v467 = vmul.f32 %v435, 16.0
      %v468 = vmul.f32 %v436, 16.0
      %v469 = vmul.f32 %v437, 16.0
      %v470 = vmul.f32 %v438, 16.0
      %v471 = vmul.f32 %v439, 16.0
      %v472 = vmul.f32 %v440, 16.0
      %v473 = vmul.f32 %v441, 16.0
      %v474 = vsub.f32 %v313, %v442
      %v475 = vsub.f32 %v314, %v443
      %v476 = vsub.f32 %v315, %v444
      %v477 = vsub.f32 %v316, %v445
      %v478 = vsub.f32 %v317, %v446
      %v479 = vsub.f32 %v318, %v447
      %v480 = vsub.f32 %v319, %v448
      %v481 = vsub.f32 %v320, %v449
      %v482 = vsub.f32 %v321, %v450
      %v483 = vsub.f32 %v322, %v451
      %v484 = vsub.f32 %v323, %v452
      %v485 = vsub.f32 %v324, %v453
      %v486 = vsub.f32 %v325, %v454
      %v487 = vsub.f32 %v326, %v455
      %v488 = vsub.f32 %v327, %v456
      %v489 = vsub.f32 %v328, %v457
      %v490 = vsub.f32 %v329, %v458
      %v491 = vsub.f32 %v330, %v459
      %v492 = vsub.f32 %v331, %v460
      %v493 = vsub.f32 %v332, %v461
      %v494 = vsub.f32 %v333, %v462
      %v495 = vsub.f32 %v334, %v463
      %v496 = vsub.f32 %v335, %v464
      %v497 = vsub.f32 %v336, %v465
      %v498 = vsub.f32 %v337, %v466
      %v499 = vsub.f32 %v338, %v467
      %v500 = vsub.f32 %v339, %v468
      %v501 = vsub.f32 %v340, %v469
      %v502 = vsub.f32 %v341, %v470
      %v503 = vsub.f32 %v342, %v471
      %v504 = vsub.f32 %v343, %v472
      %v505 = vsub.f32 %v344, %v473
      %vm506 = vcmp.ge.s32.totalorder %v281, 16
      %vm507 = vcmp.ge.s32.totalorder %v282, 16
      %vm508 = vcmp.ge.s32.totalorder %v283, 16
      %vm509 = vcmp.ge.s32.totalorder %v284, 16
      %vm510 = vcmp.ge.s32.totalorder %v285, 16
      %vm511 = vcmp.ge.s32.totalorder %v286, 16
      %vm512 = vcmp.ge.s32.totalorder %v287, 16
      %vm513 = vcmp.ge.s32.totalorder %v288, 16
      %vm514 = vcmp.ge.s32.totalorder %v289, 16
      %vm515 = vcmp.ge.s32.totalorder %v290, 16
      %vm516 = vcmp.ge.s32.totalorder %v291, 16
      %vm517 = vcmp.ge.s32.totalorder %v292, 16
      %vm518 = vcmp.ge.s32.totalorder %v293, 16
      %vm519 = vcmp.ge.s32.totalorder %v294, 16
      %vm520 = vcmp.ge.s32.totalorder %v295, 16
      %vm521 = vcmp.ge.s32.totalorder %v296, 16
      %vm522 = vcmp.ge.s32.totalorder %v297, 16
      %vm523 = vcmp.ge.s32.totalorder %v298, 16
      %vm524 = vcmp.ge.s32.totalorder %v299, 16
      %vm525 = vcmp.ge.s32.totalorder %v300, 16
      %vm526 = vcmp.ge.s32.totalorder %v301, 16
      %vm527 = vcmp.ge.s32.totalorder %v302, 16
      %vm528 = vcmp.ge.s32.totalorder %v303, 16
      %vm529 = vcmp.ge.s32.totalorder %v304, 16
      %vm530 = vcmp.ge.s32.totalorder %v305, 16
      %vm531 = vcmp.ge.s32.totalorder %v306, 16
      %vm532 = vcmp.ge.s32.totalorder %v307, 16
      %vm533 = vcmp.ge.s32.totalorder %v308, 16
      %vm534 = vcmp.ge.s32.totalorder %v309, 16
      %vm535 = vcmp.ge.s32.totalorder %v310, 16
      %vm536 = vcmp.ge.s32.totalorder %v311, 16
      %vm537 = vcmp.ge.s32.totalorder %v312, 16
      %vm538 = vcmp.lt.s32.totalorder %v281, 240
      %vm539 = vcmp.lt.s32.totalorder %v282, 240
      %vm540 = vcmp.lt.s32.totalorder %v283, 240
      %vm541 = vcmp.lt.s32.totalorder %v284, 240
      %vm542 = vcmp.lt.s32.totalorder %v285, 240
      %vm543 = vcmp.lt.s32.totalorder %v286, 240
      %vm544 = vcmp.lt.s32.totalorder %v287, 240
      %vm545 = vcmp.lt.s32.totalorder %v288, 240
      %vm546 = vcmp.lt.s32.totalorder %v289, 240
      %vm547 = vcmp.lt.s32.totalorder %v290, 240
      %vm548 = vcmp.lt.s32.totalorder %v291, 240
      %vm549 = vcmp.lt.s32.totalorder %v292, 240
      %vm550 = vcmp.lt.s32.totalorder %v293, 240
      %vm551 = vcmp.lt.s32.totalorder %v294, 240
      %vm552 = vcmp.lt.s32.totalorder %v295, 240
      %vm553 = vcmp.lt.s32.totalorder %v296, 240
      %vm554 = vcmp.lt.s32.totalorder %v297, 240
      %vm555 = vcmp.lt.s32.totalorder %v298, 240
      %vm556 = vcmp.lt.s32.totalorder %v299, 240
      %vm557 = vcmp.lt.s32.totalorder %v300, 240
      %vm558 = vcmp.lt.s32.totalorder %v301, 240
      %vm559 = vcmp.lt.s32.totalorder %v302, 240
      %vm560 = vcmp.lt.s32.totalorder %v303, 240
      %vm561 = vcmp.lt.s32.totalorder %v304, 240
      %vm562 = vcmp.lt.s32.totalorder %v305, 240
      %vm563 = vcmp.lt.s32.totalorder %v306, 240
      %vm564 = vcmp.lt.s32.totalorder %v307, 240
      %vm565 = vcmp.lt.s32.totalorder %v308, 240
      %vm566 = vcmp.lt.s32.totalorder %v309, 240
      %vm567 = vcmp.lt.s32.totalorder %v310, 240
      %vm568 = vcmp.lt.s32.totalorder %v311, 240
      %vm569 = vcmp.lt.s32.totalorder %v312, 240
      %vm570 = vcmp.ge.f32.partialorder %v474, 0.5
      %vm571 = vcmp.ge.f32.partialorder %v475, 0.5
      %vm572 = vcmp.ge.f32.partialorder %v476, 0.5
      %vm573 = vcmp.ge.f32.partialorder %v477, 0.5
      %vm574 = vcmp.ge.f32.partialorder %v478, 0.5
      %vm575 = vcmp.ge.f32.partialorder %v479, 0.5
      %vm576 = vcmp.ge.f32.partialorder %v480, 0.5
      %vm577 = vcmp.ge.f32.partialorder %v481, 0.5
      %vm578 = vcmp.ge.f32.partialorder %v482, 0.5
      %vm579 = vcmp.ge.f32.partialorder %v483, 0.5
      %vm580 = vcmp.ge.f32.partialorder %v484, 0.5
      %vm581 = vcmp.ge.f32.partialorder %v485, 0.5
      %vm582 = vcmp.ge.f32.partialorder %v486, 0.5
      %vm583 = vcmp.ge.f32.partialorder %v487, 0.5
      %vm584 = vcmp.ge.f32.partialorder %v488, 0.5
      %vm585 = vcmp.ge.f32.partialorder %v489, 0.5
      %vm586 = vcmp.ge.f32.partialorder %v490, 0.5
      %vm587 = vcmp.ge.f32.partialorder %v491, 0.5
      %vm588 = vcmp.ge.f32.partialorder %v492, 0.5
      %vm589 = vcmp.ge.f32.partialorder %v493, 0.5
      %vm590 = vcmp.ge.f32.partialorder %v494, 0.5
      %vm591 = vcmp.ge.f32.partialorder %v495, 0.5
      %vm592 = vcmp.ge.f32.partialorder %v496, 0.5
      %vm593 = vcmp.ge.f32.partialorder %v497, 0.5
      %vm594 = vcmp.ge.f32.partialorder %v498, 0.5
      %vm595 = vcmp.ge.f32.partialorder %v499, 0.5
      %vm596 = vcmp.ge.f32.partialorder %v500, 0.5
      %vm597 = vcmp.ge.f32.partialorder %v501, 0.5
      %vm598 = vcmp.ge.f32.partialorder %v502, 0.5
      %vm599 = vcmp.ge.f32.partialorder %v503, 0.5
      %vm600 = vcmp.ge.f32.partialorder %v504, 0.5
      %vm601 = vcmp.ge.f32.partialorder %v505, 0.5
      %vm602 = vcmp.le.f32.partialorder %v474, 14.5
      %vm603 = vcmp.le.f32.partialorder %v475, 14.5
      %vm604 = vcmp.le.f32.partialorder %v476, 14.5
      %vm605 = vcmp.le.f32.partialorder %v477, 14.5
      %vm606 = vcmp.le.f32.partialorder %v478, 14.5
      %vm607 = vcmp.le.f32.partialorder %v479, 14.5
      %vm608 = vcmp.le.f32.partialorder %v480, 14.5
      %vm609 = vcmp.le.f32.partialorder %v481, 14.5
      %vm610 = vcmp.le.f32.partialorder %v482, 14.5
      %vm611 = vcmp.le.f32.partialorder %v483, 14.5
      %vm612 = vcmp.le.f32.partialorder %v484, 14.5
      %vm613 = vcmp.le.f32.partialorder %v485, 14.5
      %vm614 = vcmp.le.f32.partialorder %v486, 14.5
      %vm615 = vcmp.le.f32.partialorder %v487, 14.5
      %vm616 = vcmp.le.f32.partialorder %v488, 14.5
      %vm617 = vcmp.le.f32.partialorder %v489, 14.5
      %vm618 = vcmp.le.f32.partialorder %v490, 14.5
      %vm619 = vcmp.le.f32.partialorder %v491, 14.5
      %vm620 = vcmp.le.f32.partialorder %v492, 14.5
      %vm621 = vcmp.le.f32.partialorder %v493, 14.5
      %vm622 = vcmp.le.f32.partialorder %v494, 14.5
      %vm623 = vcmp.le.f32.partialorder %v495, 14.5
      %vm624 = vcmp.le.f32.partialorder %v496, 14.5
      %vm625 = vcmp.le.f32.partialorder %v497, 14.5
      %vm626 = vcmp.le.f32.partialorder %v498, 14.5
      %vm627 = vcmp.le.f32.partialorder %v499, 14.5
      %vm628 = vcmp.le.f32.partialorder %v500, 14.5
      %vm629 = vcmp.le.f32.partialorder %v501, 14.5
      %vm630 = vcmp.le.f32.partialorder %v502, 14.5
      %vm631 = vcmp.le.f32.partialorder %v503, 14.5
      %vm632 = vcmp.le.f32.partialorder %v504, 14.5
      %vm633 = vcmp.le.f32.partialorder %v505, 14.5
      %v634 = vld [vmem:[%s273] sm:$0xf]
      %v635 = vld [vmem:[%s273 + $0x4] sm:$0xf]
      %v636 = vld [vmem:[%s273 + $0x8] sm:$0xf]
      %v637 = vld [vmem:[%s273 + $0xc] sm:$0xf]
      %v638 = vld [vmem:[%s273 + $0x10] sm:$0xf]
      %v639 = vld [vmem:[%s273 + $0x14] sm:$0xf]
      %v640 = vld [vmem:[%s273 + $0x18] sm:$0xf]
      %v641 = vld [vmem:[%s273 + $0x1c] sm:$0xf]
      %v642 = vld [vmem:[%s273 + $0x20] sm:$0xf]
      %v643 = vld [vmem:[%s273 + $0x24] sm:$0xf]
      %v644 = vld [vmem:[%s273 + $0x28] sm:$0xf]
      %v645 = vld [vmem:[%s273 + $0x2c] sm:$0xf]
      %v646 = vld [vmem:[%s273 + $0x30] sm:$0xf]
      %v647 = vld [vmem:[%s273 + $0x34] sm:$0xf]
      %v648 = vld [vmem:[%s273 + $0x38] sm:$0xf]
      %v649 = vld [vmem:[%s273 + $0x3c] sm:$0xf]
      %v650 = vld [vmem:[%s273 + $0x40] sm:$0xf]
      %v651 = vld [vmem:[%s273 + $0x44] sm:$0xf]
      %v652 = vld [vmem:[%s273 + $0x48] sm:$0xf]
      %v653 = vld [vmem:[%s273 + $0x4c] sm:$0xf]
      %v654 = vld [vmem:[%s273 + $0x50] sm:$0xf]
      %v655 = vld [vmem:[%s273 + $0x54] sm:$0xf]
      %v656 = vld [vmem:[%s273 + $0x58] sm:$0xf]
      %v657 = vld [vmem:[%s273 + $0x5c] sm:$0xf]
      %v658 = vld [vmem:[%s273 + $0x60] sm:$0xf]
      %v659 = vld [vmem:[%s273 + $0x64] sm:$0xf]
      %v660 = vld [vmem:[%s273 + $0x68] sm:$0xf]
      %v661 = vld [vmem:[%s273 + $0x6c] sm:$0xf]
      %v662 = vld [vmem:[%s273 + $0x70] sm:$0xf]
      %v663 = vld [vmem:[%s273 + $0x74] sm:$0xf]
      %v664 = vld [vmem:[%s273 + $0x78] sm:$0xf]
      %v665 = vld [vmem:[%s273 + $0x7c] sm:$0xf]
      %v666 = vunpack.c.l.bf16 %v634
      %v667 = vunpack.c.l.bf16 %v635
      %v668 = vunpack.c.l.bf16 %v636
      %v669 = vunpack.c.l.bf16 %v637
      %v670 = vunpack.c.l.bf16 %v638
      %v671 = vunpack.c.l.bf16 %v639
      %v672 = vunpack.c.l.bf16 %v640
      %v673 = vunpack.c.l.bf16 %v641
      %v674 = vunpack.c.l.bf16 %v642
      %v675 = vunpack.c.l.bf16 %v643
      %v676 = vunpack.c.l.bf16 %v644
      %v677 = vunpack.c.l.bf16 %v645
      %v678 = vunpack.c.l.bf16 %v646
      %v679 = vunpack.c.l.bf16 %v647
      %v680 = vunpack.c.l.bf16 %v648
      %v681 = vunpack.c.l.bf16 %v649
      %v682 = vunpack.c.l.bf16 %v650
      %v683 = vunpack.c.l.bf16 %v651
      %v684 = vunpack.c.l.bf16 %v652
      %v685 = vunpack.c.l.bf16 %v653
      %v686 = vunpack.c.l.bf16 %v654
      %v687 = vunpack.c.l.bf16 %v655
      %v688 = vunpack.c.l.bf16 %v656
      %v689 = vunpack.c.l.bf16 %v657
      %v690 = vunpack.c.l.bf16 %v658
      %v691 = vunpack.c.l.bf16 %v659
      %v692 = vunpack.c.l.bf16 %v660
      %v693 = vunpack.c.l.bf16 %v661
      %v694 = vunpack.c.l.bf16 %v662
      %v695 = vunpack.c.l.bf16 %v663
      %v696 = vunpack.c.l.bf16 %v664
      %v697 = vunpack.c.l.bf16 %v665
      %v698 = vrot.slane %v666, 7
      %v699 = vrot.slane %v667, 7
      %v700 = vrot.slane %v668, 7
      %v701 = vrot.slane %v669, 7
      %v702 = vrot.slane %v670, 7
      %v703 = vrot.slane %v671, 7
      %v704 = vrot.slane %v672, 7
      %v705 = vrot.slane %v673, 7
      %v706 = vrot.slane %v674, 7
      %v707 = vrot.slane %v675, 7
      %v708 = vrot.slane %v676, 7
      %v709 = vrot.slane %v677, 7
      %v710 = vrot.slane %v678, 7
      %v711 = vrot.slane %v679, 7
      %v712 = vrot.slane %v680, 7
      %v713 = vrot.slane %v681, 7
      %v714 = vrot.slane %v682, 7
      %v715 = vrot.slane %v683, 7
      %v716 = vrot.slane %v684, 7
      %v717 = vrot.slane %v685, 7
      %v718 = vrot.slane %v686, 7
      %v719 = vrot.slane %v687, 7
      %v720 = vrot.slane %v688, 7
      %v721 = vrot.slane %v689, 7
      %v722 = vrot.slane %v690, 7
      %v723 = vrot.slane %v691, 7
      %v724 = vrot.slane %v692, 7
      %v725 = vrot.slane %v693, 7
      %v726 = vrot.slane %v694, 7
      %v727 = vrot.slane %v695, 7
      %v728 = vrot.slane %v696, 7
      %v729 = vrot.slane %v697, 7
      %vm730 = vcmp.lt.s32.totalorder %v281, 1
      %v731 = vsel %vm730, %v728, %v729
      %v732 = vsel %vm730, %v727, %v728
      %v733 = vsel %vm730, %v726, %v727
      %v734 = vsel %vm730, %v725, %v726
      %v735 = vsel %vm730, %v724, %v725
      %v736 = vsel %vm730, %v723, %v724
      %v737 = vsel %vm730, %v722, %v723
      %v738 = vsel %vm730, %v721, %v722
      %v739 = vsel %vm730, %v720, %v721
      %v740 = vsel %vm730, %v719, %v720
      %v741 = vsel %vm730, %v718, %v719
      %v742 = vsel %vm730, %v717, %v718
      %v743 = vsel %vm730, %v716, %v717
      %v744 = vsel %vm730, %v715, %v716
      %v745 = vsel %vm730, %v714, %v715
      %v746 = vsel %vm730, %v713, %v714
      %v747 = vsel %vm730, %v712, %v713
      %v748 = vsel %vm730, %v711, %v712
      %v749 = vsel %vm730, %v710, %v711
      %v750 = vsel %vm730, %v709, %v710
      %v751 = vsel %vm730, %v708, %v709
      %v752 = vsel %vm730, %v707, %v708
      %v753 = vsel %vm730, %v706, %v707
      %v754 = vsel %vm730, %v705, %v706
      %v755 = vsel %vm730, %v704, %v705
      %v756 = vsel %vm730, %v703, %v704
      %v757 = vsel %vm730, %v702, %v703
      %v758 = vsel %vm730, %v701, %v702
      %v759 = vsel %vm730, %v700, %v701
      %v760 = vsel %vm730, %v699, %v700
      %v761 = vsel %vm730, %v698, %v699
      %v762 = vsel %vm730, %v729, %v698
      %vm763 = vmand %vm506, %vm570
      %vm764 = vmand %vm507, %vm571
      %vm765 = vmand %vm508, %vm572
      %vm766 = vmand %vm509, %vm573
      %vm767 = vmand %vm510, %vm574
      %vm768 = vmand %vm511, %vm575
      %vm769 = vmand %vm512, %vm576
      %vm770 = vmand %vm513, %vm577
      %vm771 = vmand %vm514, %vm578
      %vm772 = vmand %vm515, %vm579
      %vm773 = vmand %vm516, %vm580
      %vm774 = vmand %vm517, %vm581
      %vm775 = vmand %vm518, %vm582
      %vm776 = vmand %vm519, %vm583
      %vm777 = vmand %vm520, %vm584
      %vm778 = vmand %vm521, %vm585
      %vm779 = vmand %vm522, %vm586
      %vm780 = vmand %vm523, %vm587
      %vm781 = vmand %vm524, %vm588
      %vm782 = vmand %vm525, %vm589
      %vm783 = vmand %vm526, %vm590
      %vm784 = vmand %vm527, %vm591
      %vm785 = vmand %vm528, %vm592
      %vm786 = vmand %vm529, %vm593
      %vm787 = vmand %vm530, %vm594
      %vm788 = vmand %vm531, %vm595
      %vm789 = vmand %vm532, %vm596
      %vm790 = vmand %vm533, %vm597
      %vm791 = vmand %vm534, %vm598
      %vm792 = vmand %vm535, %vm599
      %vm793 = vmand %vm536, %vm600
      %vm794 = vmand %vm537, %vm601
      %v795 = vsel %vm763, 1, 0
      %v796 = vsel %vm764, 1, 0
      %v797 = vsel %vm765, 1, 0
      %v798 = vsel %vm766, 1, 0
      %v799 = vsel %vm767, 1, 0
      %v800 = vsel %vm768, 1, 0
      %v801 = vsel %vm769, 1, 0
      %v802 = vsel %vm770, 1, 0
      %v803 = vsel %vm771, 1, 0
      %v804 = vsel %vm772, 1, 0
      %v805 = vsel %vm773, 1, 0
      %v806 = vsel %vm774, 1, 0
      %v807 = vsel %vm775, 1, 0
      %v808 = vsel %vm776, 1, 0
      %v809 = vsel %vm777, 1, 0
      %v810 = vsel %vm778, 1, 0
      %v811 = vsel %vm779, 1, 0
      %v812 = vsel %vm780, 1, 0
      %v813 = vsel %vm781, 1, 0
      %v814 = vsel %vm782, 1, 0
      %v815 = vsel %vm783, 1, 0
      %v816 = vsel %vm784, 1, 0
      %v817 = vsel %vm785, 1, 0
      %v818 = vsel %vm786, 1, 0
      %v819 = vsel %vm787, 1, 0
      %v820 = vsel %vm788, 1, 0
      %v821 = vsel %vm789, 1, 0
      %v822 = vsel %vm790, 1, 0
      %v823 = vsel %vm791, 1, 0
      %v824 = vsel %vm792, 1, 0
      %v825 = vsel %vm793, 1, 0
      %v826 = vsel %vm794, 1, 0
      %vm827 = vcmp.eq.s32.totalorder %v795, 1
      %vm828 = vcmp.eq.s32.totalorder %v796, 1
      %vm829 = vcmp.eq.s32.totalorder %v797, 1
      %vm830 = vcmp.eq.s32.totalorder %v798, 1
      %vm831 = vcmp.eq.s32.totalorder %v799, 1
      %vm832 = vcmp.eq.s32.totalorder %v800, 1
      %vm833 = vcmp.eq.s32.totalorder %v801, 1
      %vm834 = vcmp.eq.s32.totalorder %v802, 1
      %vm835 = vcmp.eq.s32.totalorder %v803, 1
      %vm836 = vcmp.eq.s32.totalorder %v804, 1
      %vm837 = vcmp.eq.s32.totalorder %v805, 1
      %vm838 = vcmp.eq.s32.totalorder %v806, 1
      %vm839 = vcmp.eq.s32.totalorder %v807, 1
      %vm840 = vcmp.eq.s32.totalorder %v808, 1
      %vm841 = vcmp.eq.s32.totalorder %v809, 1
      %vm842 = vcmp.eq.s32.totalorder %v810, 1
      %vm843 = vcmp.eq.s32.totalorder %v811, 1
      %vm844 = vcmp.eq.s32.totalorder %v812, 1
      %vm845 = vcmp.eq.s32.totalorder %v813, 1
      %vm846 = vcmp.eq.s32.totalorder %v814, 1
      %vm847 = vcmp.eq.s32.totalorder %v815, 1
      %vm848 = vcmp.eq.s32.totalorder %v816, 1
      %vm849 = vcmp.eq.s32.totalorder %v817, 1
      %vm850 = vcmp.eq.s32.totalorder %v818, 1
      %vm851 = vcmp.eq.s32.totalorder %v819, 1
      %vm852 = vcmp.eq.s32.totalorder %v820, 1
      %vm853 = vcmp.eq.s32.totalorder %v821, 1
      %vm854 = vcmp.eq.s32.totalorder %v822, 1
      %vm855 = vcmp.eq.s32.totalorder %v823, 1
      %vm856 = vcmp.eq.s32.totalorder %v824, 1
      %vm857 = vcmp.eq.s32.totalorder %v825, 1
      %vm858 = vcmp.eq.s32.totalorder %v826, 1
      %v859 = vsel %vm827, %v732, 0.0
      %v860 = vsel %vm828, %v731, 0.0
      %v861 = vsel %vm829, %v762, 0.0
      %v862 = vsel %vm830, %v761, 0.0
      %v863 = vsel %vm831, %v760, 0.0
      %v864 = vsel %vm832, %v759, 0.0
      %v865 = vsel %vm833, %v758, 0.0
      %v866 = vsel %vm834, %v757, 0.0
      %v867 = vsel %vm835, %v756, 0.0
      %v868 = vsel %vm836, %v755, 0.0
      %v869 = vsel %vm837, %v754, 0.0
      %v870 = vsel %vm838, %v753, 0.0
      %v871 = vsel %vm839, %v752, 0.0
      %v872 = vsel %vm840, %v751, 0.0
      %v873 = vsel %vm841, %v750, 0.0
      %v874 = vsel %vm842, %v749, 0.0
      %v875 = vsel %vm843, %v748, 0.0
      %v876 = vsel %vm844, %v747, 0.0
      %v877 = vsel %vm845, %v746, 0.0
      %v878 = vsel %vm846, %v745, 0.0
      %v879 = vsel %vm847, %v744, 0.0
      %v880 = vsel %vm848, %v743, 0.0
      %v881 = vsel %vm849, %v742, 0.0
      %v882 = vsel %vm850, %v741, 0.0
      %v883 = vsel %vm851, %v740, 0.0
      %v884 = vsel %vm852, %v739, 0.0
      %v885 = vsel %vm853, %v738, 0.0
      %v886 = vsel %vm854, %v737, 0.0
      %v887 = vsel %vm855, %v736, 0.0
      %v888 = vsel %vm856, %v735, 0.0
      %v889 = vsel %vm857, %v734, 0.0
      %v890 = vsel %vm858, %v733, 0.0
      %v891 = vpack.c.bf16 %v860, %v859
      %v892 = vpack.c.bf16 %v862, %v861
      %v893 = vpack.c.bf16 %v864, %v863
      %v894 = vpack.c.bf16 %v866, %v865
      %v895 = vpack.c.bf16 %v868, %v867
      %v896 = vpack.c.bf16 %v870, %v869
      %v897 = vpack.c.bf16 %v872, %v871
      %v898 = vpack.c.bf16 %v874, %v873
      %v899 = vpack.c.bf16 %v876, %v875
      %v900 = vpack.c.bf16 %v878, %v877
      %v901 = vpack.c.bf16 %v880, %v879
      %v902 = vpack.c.bf16 %v882, %v881
      %v903 = vpack.c.bf16 %v884, %v883
      %v904 = vpack.c.bf16 %v886, %v885
      %v905 = vpack.c.bf16 %v888, %v887
      %v906 = vpack.c.bf16 %v890, %v889
      %v907 = vsel %vm506, 1, 0
      %v908 = vsel %vm507, 1, 0
      %v909 = vsel %vm508, 1, 0
      %v910 = vsel %vm509, 1, 0
      %v911 = vsel %vm510, 1, 0
      %v912 = vsel %vm511, 1, 0
      %v913 = vsel %vm512, 1, 0
      %v914 = vsel %vm513, 1, 0
      %v915 = vsel %vm514, 1, 0
      %v916 = vsel %vm515, 1, 0
      %v917 = vsel %vm516, 1, 0
      %v918 = vsel %vm517, 1, 0
      %v919 = vsel %vm518, 1, 0
      %v920 = vsel %vm519, 1, 0
      %v921 = vsel %vm520, 1, 0
      %v922 = vsel %vm521, 1, 0
      %v923 = vsel %vm522, 1, 0
      %v924 = vsel %vm523, 1, 0
      %v925 = vsel %vm524, 1, 0
      %v926 = vsel %vm525, 1, 0
      %v927 = vsel %vm526, 1, 0
      %v928 = vsel %vm527, 1, 0
      %v929 = vsel %vm528, 1, 0
      %v930 = vsel %vm529, 1, 0
      %v931 = vsel %vm530, 1, 0
      %v932 = vsel %vm531, 1, 0
      %v933 = vsel %vm532, 1, 0
      %v934 = vsel %vm533, 1, 0
      %v935 = vsel %vm534, 1, 0
      %v936 = vsel %vm535, 1, 0
      %v937 = vsel %vm536, 1, 0
      %v938 = vsel %vm537, 1, 0
      %vm939 = vcmp.eq.s32.totalorder %v907, 1
      %vm940 = vcmp.eq.s32.totalorder %v908, 1
      %vm941 = vcmp.eq.s32.totalorder %v909, 1
      %vm942 = vcmp.eq.s32.totalorder %v910, 1
      %vm943 = vcmp.eq.s32.totalorder %v911, 1
      %vm944 = vcmp.eq.s32.totalorder %v912, 1
      %vm945 = vcmp.eq.s32.totalorder %v913, 1
      %vm946 = vcmp.eq.s32.totalorder %v914, 1
      %vm947 = vcmp.eq.s32.totalorder %v915, 1
      %vm948 = vcmp.eq.s32.totalorder %v916, 1
      %vm949 = vcmp.eq.s32.totalorder %v917, 1
      %vm950 = vcmp.eq.s32.totalorder %v918, 1
      %vm951 = vcmp.eq.s32.totalorder %v919, 1
      %vm952 = vcmp.eq.s32.totalorder %v920, 1
      %vm953 = vcmp.eq.s32.totalorder %v921, 1
      %vm954 = vcmp.eq.s32.totalorder %v922, 1
      %vm955 = vcmp.eq.s32.totalorder %v923, 1
      %vm956 = vcmp.eq.s32.totalorder %v924, 1
      %vm957 = vcmp.eq.s32.totalorder %v925, 1
      %vm958 = vcmp.eq.s32.totalorder %v926, 1
      %vm959 = vcmp.eq.s32.totalorder %v927, 1
      %vm960 = vcmp.eq.s32.totalorder %v928, 1
      %vm961 = vcmp.eq.s32.totalorder %v929, 1
      %vm962 = vcmp.eq.s32.totalorder %v930, 1
      %vm963 = vcmp.eq.s32.totalorder %v931, 1
      %vm964 = vcmp.eq.s32.totalorder %v932, 1
      %vm965 = vcmp.eq.s32.totalorder %v933, 1
      %vm966 = vcmp.eq.s32.totalorder %v934, 1
      %vm967 = vcmp.eq.s32.totalorder %v935, 1
      %vm968 = vcmp.eq.s32.totalorder %v936, 1
      %vm969 = vcmp.eq.s32.totalorder %v937, 1
      %vm970 = vcmp.eq.s32.totalorder %v938, 1
      %v971 = vsel %vm939, %v696, 0.0
      %v972 = vsel %vm940, %v697, 0.0
      %v973 = vsel %vm941, %v666, 0.0
      %v974 = vsel %vm942, %v667, 0.0
      %v975 = vsel %vm943, %v668, 0.0
      %v976 = vsel %vm944, %v669, 0.0
      %v977 = vsel %vm945, %v670, 0.0
      %v978 = vsel %vm946, %v671, 0.0
      %v979 = vsel %vm947, %v672, 0.0
      %v980 = vsel %vm948, %v673, 0.0
      %v981 = vsel %vm949, %v674, 0.0
      %v982 = vsel %vm950, %v675, 0.0
      %v983 = vsel %vm951, %v676, 0.0
      %v984 = vsel %vm952, %v677, 0.0
      %v985 = vsel %vm953, %v678, 0.0
      %v986 = vsel %vm954, %v679, 0.0
      %v987 = vsel %vm955, %v680, 0.0
      %v988 = vsel %vm956, %v681, 0.0
      %v989 = vsel %vm957, %v682, 0.0
      %v990 = vsel %vm958, %v683, 0.0
      %v991 = vsel %vm959, %v684, 0.0
      %v992 = vsel %vm960, %v685, 0.0
      %v993 = vsel %vm961, %v686, 0.0
      %v994 = vsel %vm962, %v687, 0.0
      %v995 = vsel %vm963, %v688, 0.0
      %v996 = vsel %vm964, %v689, 0.0
      %v997 = vsel %vm965, %v690, 0.0
      %v998 = vsel %vm966, %v691, 0.0
      %v999 = vsel %vm967, %v692, 0.0
      %v1000 = vsel %vm968, %v693, 0.0
      %v1001 = vsel %vm969, %v694, 0.0
      %v1002 = vsel %vm970, %v695, 0.0
      %v1003 = vpack.c.bf16 %v972, %v971
      %v1004 = vpack.c.bf16 %v974, %v973
      %v1005 = vpack.c.bf16 %v976, %v975
      %v1006 = vpack.c.bf16 %v978, %v977
      %v1007 = vpack.c.bf16 %v980, %v979
      %v1008 = vpack.c.bf16 %v982, %v981
      %v1009 = vpack.c.bf16 %v984, %v983
      %v1010 = vpack.c.bf16 %v986, %v985
      %v1011 = vpack.c.bf16 %v988, %v987
      %v1012 = vpack.c.bf16 %v990, %v989
      %v1013 = vpack.c.bf16 %v992, %v991
      %v1014 = vpack.c.bf16 %v994, %v993
      %v1015 = vpack.c.bf16 %v996, %v995
      %v1016 = vpack.c.bf16 %v998, %v997
      %v1017 = vpack.c.bf16 %v1000, %v999
      %v1018 = vpack.c.bf16 %v1002, %v1001
      %v1019 = vld [vmem:[%s1] sm:$0xf]
      %v1020 = vld [vmem:[%s1 + $0x4] sm:$0xf]
      %v1021 = vld [vmem:[%s1 + $0x8] sm:$0xf]
      %v1022 = vld [vmem:[%s1 + $0xc] sm:$0xf]
      %v1023 = vld [vmem:[%s1 + $0x10] sm:$0xf]
      %v1024 = vld [vmem:[%s1 + $0x14] sm:$0xf]
      %v1025 = vld [vmem:[%s1 + $0x18] sm:$0xf]
      %v1026 = vld [vmem:[%s1 + $0x1c] sm:$0xf]
      %v1027 = vld [vmem:[%s1 + $0x20] sm:$0xf]
      %v1028 = vld [vmem:[%s1 + $0x24] sm:$0xf]
      %v1029 = vld [vmem:[%s1 + $0x28] sm:$0xf]
      %v1030 = vld [vmem:[%s1 + $0x2c] sm:$0xf]
      %v1031 = vld [vmem:[%s1 + $0x30] sm:$0xf]
      %v1032 = vld [vmem:[%s1 + $0x34] sm:$0xf]
      %v1033 = vld [vmem:[%s1 + $0x38] sm:$0xf]
      %v1034 = vld [vmem:[%s1 + $0x3c] sm:$0xf]
      %v1035 = vld [vmem:[%s1 + $0x40] sm:$0xf]
      %v1036 = vld [vmem:[%s1 + $0x44] sm:$0xf]
      %v1037 = vld [vmem:[%s1 + $0x48] sm:$0xf]
      %v1038 = vld [vmem:[%s1 + $0x4c] sm:$0xf]
      %v1039 = vld [vmem:[%s1 + $0x50] sm:$0xf]
      %v1040 = vld [vmem:[%s1 + $0x54] sm:$0xf]
      %v1041 = vld [vmem:[%s1 + $0x58] sm:$0xf]
      %v1042 = vld [vmem:[%s1 + $0x5c] sm:$0xf]
      %v1043 = vld [vmem:[%s1 + $0x60] sm:$0xf]
      %v1044 = vld [vmem:[%s1 + $0x64] sm:$0xf]
      %v1045 = vld [vmem:[%s1 + $0x68] sm:$0xf]
      %v1046 = vld [vmem:[%s1 + $0x6c] sm:$0xf]
      %v1047 = vld [vmem:[%s1 + $0x70] sm:$0xf]
      %v1048 = vld [vmem:[%s1 + $0x74] sm:$0xf]
      %v1049 = vld [vmem:[%s1 + $0x78] sm:$0xf]
      %v1050 = vld [vmem:[%s1 + $0x7c] sm:$0xf]
      %v1051 = vrot.slane %v666, 1
      %v1052 = vrot.slane %v667, 1
      %v1053 = vrot.slane %v668, 1
      %v1054 = vrot.slane %v669, 1
      %v1055 = vrot.slane %v670, 1
      %v1056 = vrot.slane %v671, 1
      %v1057 = vrot.slane %v672, 1
      %v1058 = vrot.slane %v673, 1
      %v1059 = vrot.slane %v674, 1
      %v1060 = vrot.slane %v675, 1
      %v1061 = vrot.slane %v676, 1
      %v1062 = vrot.slane %v677, 1
      %v1063 = vrot.slane %v678, 1
      %v1064 = vrot.slane %v679, 1
      %v1065 = vrot.slane %v680, 1
      %v1066 = vrot.slane %v681, 1
      %v1067 = vrot.slane %v682, 1
      %v1068 = vrot.slane %v683, 1
      %v1069 = vrot.slane %v684, 1
      %v1070 = vrot.slane %v685, 1
      %v1071 = vrot.slane %v686, 1
      %v1072 = vrot.slane %v687, 1
      %v1073 = vrot.slane %v688, 1
      %v1074 = vrot.slane %v689, 1
      %v1075 = vrot.slane %v690, 1
      %v1076 = vrot.slane %v691, 1
      %v1077 = vrot.slane %v692, 1
      %v1078 = vrot.slane %v693, 1
      %v1079 = vrot.slane %v694, 1
      %v1080 = vrot.slane %v695, 1
      %v1081 = vrot.slane %v696, 1
      %v1082 = vrot.slane %v697, 1
      %vm1083 = vcmp.lt.s32.totalorder %v281, 7
      %v1084 = vsel %vm1083, %v1081, %v1082
      %v1085 = vsel %vm1083, %v1080, %v1081
      %v1086 = vsel %vm1083, %v1079, %v1080
      %v1087 = vsel %vm1083, %v1078, %v1079
      %v1088 = vsel %vm1083, %v1077, %v1078
      %v1089 = vsel %vm1083, %v1076, %v1077
      %v1090 = vsel %vm1083, %v1075, %v1076
      %v1091 = vsel %vm1083, %v1074, %v1075
      %v1092 = vsel %vm1083, %v1073, %v1074
      %v1093 = vsel %vm1083, %v1072, %v1073
      %v1094 = vsel %vm1083, %v1071, %v1072
      %v1095 = vsel %vm1083, %v1070, %v1071
      %v1096 = vsel %vm1083, %v1069, %v1070
      %v1097 = vsel %vm1083, %v1068, %v1069
      %v1098 = vsel %vm1083, %v1067, %v1068
      %v1099 = vsel %vm1083, %v1066, %v1067
      %v1100 = vsel %vm1083, %v1065, %v1066
      %v1101 = vsel %vm1083, %v1064, %v1065
      %v1102 = vsel %vm1083, %v1063, %v1064
      %v1103 = vsel %vm1083, %v1062, %v1063
      %v1104 = vsel %vm1083, %v1061, %v1062
      %v1105 = vsel %vm1083, %v1060, %v1061
      %v1106 = vsel %vm1083, %v1059, %v1060
      %v1107 = vsel %vm1083, %v1058, %v1059
      %v1108 = vsel %vm1083, %v1057, %v1058
      %v1109 = vsel %vm1083, %v1056, %v1057
      %v1110 = vsel %vm1083, %v1055, %v1056
      %v1111 = vsel %vm1083, %v1054, %v1055
      %v1112 = vsel %vm1083, %v1053, %v1054
      %v1113 = vsel %vm1083, %v1052, %v1053
      %v1114 = vsel %vm1083, %v1051, %v1052
      %v1115 = vsel %vm1083, %v1082, %v1051
      %vm1116 = vmand %vm506, %vm602
      %vm1117 = vmand %vm507, %vm603
      %vm1118 = vmand %vm508, %vm604
      %vm1119 = vmand %vm509, %vm605
      %vm1120 = vmand %vm510, %vm606
      %vm1121 = vmand %vm511, %vm607
      %vm1122 = vmand %vm512, %vm608
      %vm1123 = vmand %vm513, %vm609
      %vm1124 = vmand %vm514, %vm610
      %vm1125 = vmand %vm515, %vm611
      %vm1126 = vmand %vm516, %vm612
      %vm1127 = vmand %vm517, %vm613
      %vm1128 = vmand %vm518, %vm614
      %vm1129 = vmand %vm519, %vm615
      %vm1130 = vmand %vm520, %vm616
      %vm1131 = vmand %vm521, %vm617
      %vm1132 = vmand %vm522, %vm618
      %vm1133 = vmand %vm523, %vm619
      %vm1134 = vmand %vm524, %vm620
      %vm1135 = vmand %vm525, %vm621
      %vm1136 = vmand %vm526, %vm622
      %vm1137 = vmand %vm527, %vm623
      %vm1138 = vmand %vm528, %vm624
      %vm1139 = vmand %vm529, %vm625
      %vm1140 = vmand %vm530, %vm626
      %vm1141 = vmand %vm531, %vm627
      %vm1142 = vmand %vm532, %vm628
      %vm1143 = vmand %vm533, %vm629
      %vm1144 = vmand %vm534, %vm630
      %vm1145 = vmand %vm535, %vm631
      %vm1146 = vmand %vm536, %vm632
      %vm1147 = vmand %vm537, %vm633
      %v1148 = vsel %vm1116, 1, 0
      %v1149 = vsel %vm1117, 1, 0
      %v1150 = vsel %vm1118, 1, 0
      %v1151 = vsel %vm1119, 1, 0
      %v1152 = vsel %vm1120, 1, 0
      %v1153 = vsel %vm1121, 1, 0
      %v1154 = vsel %vm1122, 1, 0
      %v1155 = vsel %vm1123, 1, 0
      %v1156 = vsel %vm1124, 1, 0
      %v1157 = vsel %vm1125, 1, 0
      %v1158 = vsel %vm1126, 1, 0
      %v1159 = vsel %vm1127, 1, 0
      %v1160 = vsel %vm1128, 1, 0
      %v1161 = vsel %vm1129, 1, 0
      %v1162 = vsel %vm1130, 1, 0
      %v1163 = vsel %vm1131, 1, 0
      %v1164 = vsel %vm1132, 1, 0
      %v1165 = vsel %vm1133, 1, 0
      %v1166 = vsel %vm1134, 1, 0
      %v1167 = vsel %vm1135, 1, 0
      %v1168 = vsel %vm1136, 1, 0
      %v1169 = vsel %vm1137, 1, 0
      %v1170 = vsel %vm1138, 1, 0
      %v1171 = vsel %vm1139, 1, 0
      %v1172 = vsel %vm1140, 1, 0
      %v1173 = vsel %vm1141, 1, 0
      %v1174 = vsel %vm1142, 1, 0
      %v1175 = vsel %vm1143, 1, 0
      %v1176 = vsel %vm1144, 1, 0
      %v1177 = vsel %vm1145, 1, 0
      %v1178 = vsel %vm1146, 1, 0
      %v1179 = vsel %vm1147, 1, 0
      %vm1180 = vcmp.eq.s32.totalorder %v1148, 1
      %vm1181 = vcmp.eq.s32.totalorder %v1149, 1
      %vm1182 = vcmp.eq.s32.totalorder %v1150, 1
      %vm1183 = vcmp.eq.s32.totalorder %v1151, 1
      %vm1184 = vcmp.eq.s32.totalorder %v1152, 1
      %vm1185 = vcmp.eq.s32.totalorder %v1153, 1
      %vm1186 = vcmp.eq.s32.totalorder %v1154, 1
      %vm1187 = vcmp.eq.s32.totalorder %v1155, 1
      %vm1188 = vcmp.eq.s32.totalorder %v1156, 1
      %vm1189 = vcmp.eq.s32.totalorder %v1157, 1
      %vm1190 = vcmp.eq.s32.totalorder %v1158, 1
      %vm1191 = vcmp.eq.s32.totalorder %v1159, 1
      %vm1192 = vcmp.eq.s32.totalorder %v1160, 1
      %vm1193 = vcmp.eq.s32.totalorder %v1161, 1
      %vm1194 = vcmp.eq.s32.totalorder %v1162, 1
      %vm1195 = vcmp.eq.s32.totalorder %v1163, 1
      %vm1196 = vcmp.eq.s32.totalorder %v1164, 1
      %vm1197 = vcmp.eq.s32.totalorder %v1165, 1
      %vm1198 = vcmp.eq.s32.totalorder %v1166, 1
      %vm1199 = vcmp.eq.s32.totalorder %v1167, 1
      %vm1200 = vcmp.eq.s32.totalorder %v1168, 1
      %vm1201 = vcmp.eq.s32.totalorder %v1169, 1
      %vm1202 = vcmp.eq.s32.totalorder %v1170, 1
      %vm1203 = vcmp.eq.s32.totalorder %v1171, 1
      %vm1204 = vcmp.eq.s32.totalorder %v1172, 1
      %vm1205 = vcmp.eq.s32.totalorder %v1173, 1
      %vm1206 = vcmp.eq.s32.totalorder %v1174, 1
      %vm1207 = vcmp.eq.s32.totalorder %v1175, 1
      %vm1208 = vcmp.eq.s32.totalorder %v1176, 1
      %vm1209 = vcmp.eq.s32.totalorder %v1177, 1
      %vm1210 = vcmp.eq.s32.totalorder %v1178, 1
      %vm1211 = vcmp.eq.s32.totalorder %v1179, 1
      %v1212 = vsel %vm1180, %v1084, 0.0
      %v1213 = vsel %vm1181, %v1115, 0.0
      %v1214 = vsel %vm1182, %v1114, 0.0
      %v1215 = vsel %vm1183, %v1113, 0.0
      %v1216 = vsel %vm1184, %v1112, 0.0
      %v1217 = vsel %vm1185, %v1111, 0.0
      %v1218 = vsel %vm1186, %v1110, 0.0
      %v1219 = vsel %vm1187, %v1109, 0.0
      %v1220 = vsel %vm1188, %v1108, 0.0
      %v1221 = vsel %vm1189, %v1107, 0.0
      %v1222 = vsel %vm1190, %v1106, 0.0
      %v1223 = vsel %vm1191, %v1105, 0.0
      %v1224 = vsel %vm1192, %v1104, 0.0
      %v1225 = vsel %vm1193, %v1103, 0.0
      %v1226 = vsel %vm1194, %v1102, 0.0
      %v1227 = vsel %vm1195, %v1101, 0.0
      %v1228 = vsel %vm1196, %v1100, 0.0
      %v1229 = vsel %vm1197, %v1099, 0.0
      %v1230 = vsel %vm1198, %v1098, 0.0
      %v1231 = vsel %vm1199, %v1097, 0.0
      %v1232 = vsel %vm1200, %v1096, 0.0
      %v1233 = vsel %vm1201, %v1095, 0.0
      %v1234 = vsel %vm1202, %v1094, 0.0
      %v1235 = vsel %vm1203, %v1093, 0.0
      %v1236 = vsel %vm1204, %v1092, 0.0
      %v1237 = vsel %vm1205, %v1091, 0.0
      %v1238 = vsel %vm1206, %v1090, 0.0
      %v1239 = vsel %vm1207, %v1089, 0.0
      %v1240 = vsel %vm1208, %v1088, 0.0
      %v1241 = vsel %vm1209, %v1087, 0.0
      %v1242 = vsel %vm1210, %v1086, 0.0
      %v1243 = vsel %vm1211, %v1085, 0.0
      %v1244 = vpack.c.bf16 %v1213, %v1212
      %v1245 = vpack.c.bf16 %v1215, %v1214
      %v1246 = vpack.c.bf16 %v1217, %v1216
      %v1247 = vpack.c.bf16 %v1219, %v1218
      %v1248 = vpack.c.bf16 %v1221, %v1220
      %v1249 = vpack.c.bf16 %v1223, %v1222
      %v1250 = vpack.c.bf16 %v1225, %v1224
      %v1251 = vpack.c.bf16 %v1227, %v1226
      %v1252 = vpack.c.bf16 %v1229, %v1228
      %v1253 = vpack.c.bf16 %v1231, %v1230
      %v1254 = vpack.c.bf16 %v1233, %v1232
      %v1255 = vpack.c.bf16 %v1235, %v1234
      %v1256 = vpack.c.bf16 %v1237, %v1236
      %v1257 = vpack.c.bf16 %v1239, %v1238
      %v1258 = vpack.c.bf16 %v1241, %v1240
      %v1259 = vpack.c.bf16 %v1243, %v1242
      %v1260 = vsel %vm570, 1, 0
      %v1261 = vsel %vm571, 1, 0
      %v1262 = vsel %vm572, 1, 0
      %v1263 = vsel %vm573, 1, 0
      %v1264 = vsel %vm574, 1, 0
      %v1265 = vsel %vm575, 1, 0
      %v1266 = vsel %vm576, 1, 0
      %v1267 = vsel %vm577, 1, 0
      %v1268 = vsel %vm578, 1, 0
      %v1269 = vsel %vm579, 1, 0
      %v1270 = vsel %vm580, 1, 0
      %v1271 = vsel %vm581, 1, 0
      %v1272 = vsel %vm582, 1, 0
      %v1273 = vsel %vm583, 1, 0
      %v1274 = vsel %vm584, 1, 0
      %v1275 = vsel %vm585, 1, 0
      %v1276 = vsel %vm586, 1, 0
      %v1277 = vsel %vm587, 1, 0
      %v1278 = vsel %vm588, 1, 0
      %v1279 = vsel %vm589, 1, 0
      %v1280 = vsel %vm590, 1, 0
      %v1281 = vsel %vm591, 1, 0
      %v1282 = vsel %vm592, 1, 0
      %v1283 = vsel %vm593, 1, 0
      %v1284 = vsel %vm594, 1, 0
      %v1285 = vsel %vm595, 1, 0
      %v1286 = vsel %vm596, 1, 0
      %v1287 = vsel %vm597, 1, 0
      %v1288 = vsel %vm598, 1, 0
      %v1289 = vsel %vm599, 1, 0
      %v1290 = vsel %vm600, 1, 0
      %v1291 = vsel %vm601, 1, 0
      %vm1292 = vcmp.eq.s32.totalorder %v1260, 1
      %vm1293 = vcmp.eq.s32.totalorder %v1261, 1
      %vm1294 = vcmp.eq.s32.totalorder %v1262, 1
      %vm1295 = vcmp.eq.s32.totalorder %v1263, 1
      %vm1296 = vcmp.eq.s32.totalorder %v1264, 1
      %vm1297 = vcmp.eq.s32.totalorder %v1265, 1
      %vm1298 = vcmp.eq.s32.totalorder %v1266, 1
      %vm1299 = vcmp.eq.s32.totalorder %v1267, 1
      %vm1300 = vcmp.eq.s32.totalorder %v1268, 1
      %vm1301 = vcmp.eq.s32.totalorder %v1269, 1
      %vm1302 = vcmp.eq.s32.totalorder %v1270, 1
      %vm1303 = vcmp.eq.s32.totalorder %v1271, 1
      %vm1304 = vcmp.eq.s32.totalorder %v1272, 1
      %vm1305 = vcmp.eq.s32.totalorder %v1273, 1
      %vm1306 = vcmp.eq.s32.totalorder %v1274, 1
      %vm1307 = vcmp.eq.s32.totalorder %v1275, 1
      %vm1308 = vcmp.eq.s32.totalorder %v1276, 1
      %vm1309 = vcmp.eq.s32.totalorder %v1277, 1
      %vm1310 = vcmp.eq.s32.totalorder %v1278, 1
      %vm1311 = vcmp.eq.s32.totalorder %v1279, 1
      %vm1312 = vcmp.eq.s32.totalorder %v1280, 1
      %vm1313 = vcmp.eq.s32.totalorder %v1281, 1
      %vm1314 = vcmp.eq.s32.totalorder %v1282, 1
      %vm1315 = vcmp.eq.s32.totalorder %v1283, 1
      %vm1316 = vcmp.eq.s32.totalorder %v1284, 1
      %vm1317 = vcmp.eq.s32.totalorder %v1285, 1
      %vm1318 = vcmp.eq.s32.totalorder %v1286, 1
      %vm1319 = vcmp.eq.s32.totalorder %v1287, 1
      %vm1320 = vcmp.eq.s32.totalorder %v1288, 1
      %vm1321 = vcmp.eq.s32.totalorder %v1289, 1
      %vm1322 = vcmp.eq.s32.totalorder %v1290, 1
      %vm1323 = vcmp.eq.s32.totalorder %v1291, 1
      %v1324 = vsel %vm1292, %v762, 0.0
      %v1325 = vsel %vm1293, %v761, 0.0
      %v1326 = vsel %vm1294, %v760, 0.0
      %v1327 = vsel %vm1295, %v759, 0.0
      %v1328 = vsel %vm1296, %v758, 0.0
      %v1329 = vsel %vm1297, %v757, 0.0
      %v1330 = vsel %vm1298, %v756, 0.0
      %v1331 = vsel %vm1299, %v755, 0.0
      %v1332 = vsel %vm1300, %v754, 0.0
      %v1333 = vsel %vm1301, %v753, 0.0
      %v1334 = vsel %vm1302, %v752, 0.0
      %v1335 = vsel %vm1303, %v751, 0.0
      %v1336 = vsel %vm1304, %v750, 0.0
      %v1337 = vsel %vm1305, %v749, 0.0
      %v1338 = vsel %vm1306, %v748, 0.0
      %v1339 = vsel %vm1307, %v747, 0.0
      %v1340 = vsel %vm1308, %v746, 0.0
      %v1341 = vsel %vm1309, %v745, 0.0
      %v1342 = vsel %vm1310, %v744, 0.0
      %v1343 = vsel %vm1311, %v743, 0.0
      %v1344 = vsel %vm1312, %v742, 0.0
      %v1345 = vsel %vm1313, %v741, 0.0
      %v1346 = vsel %vm1314, %v740, 0.0
      %v1347 = vsel %vm1315, %v739, 0.0
      %v1348 = vsel %vm1316, %v738, 0.0
      %v1349 = vsel %vm1317, %v737, 0.0
      %v1350 = vsel %vm1318, %v736, 0.0
      %v1351 = vsel %vm1319, %v735, 0.0
      %v1352 = vsel %vm1320, %v734, 0.0
      %v1353 = vsel %vm1321, %v733, 0.0
      %v1354 = vsel %vm1322, %v732, 0.0
      %v1355 = vsel %vm1323, %v731, 0.0
      %v1356 = vpack.c.bf16 %v1325, %v1324
      %v1357 = vpack.c.bf16 %v1327, %v1326
      %v1358 = vpack.c.bf16 %v1329, %v1328
      %v1359 = vpack.c.bf16 %v1331, %v1330
      %v1360 = vpack.c.bf16 %v1333, %v1332
      %v1361 = vpack.c.bf16 %v1335, %v1334
      %v1362 = vpack.c.bf16 %v1337, %v1336
      %v1363 = vpack.c.bf16 %v1339, %v1338
      %v1364 = vpack.c.bf16 %v1341, %v1340
      %v1365 = vpack.c.bf16 %v1343, %v1342
      %v1366 = vpack.c.bf16 %v1345, %v1344
      %v1367 = vpack.c.bf16 %v1347, %v1346
      %v1368 = vpack.c.bf16 %v1349, %v1348
      %v1369 = vpack.c.bf16 %v1351, %v1350
      %v1370 = vpack.c.bf16 %v1353, %v1352
      %v1371 = vpack.c.bf16 %v1355, %v1354
      %v1372 = vld [vmem:[%s1 + $0x80] sm:$0xf]
      %v1373 = vld [vmem:[%s1 + $0x84] sm:$0xf]
      %v1374 = vld [vmem:[%s1 + $0x88] sm:$0xf]
      %v1375 = vld [vmem:[%s1 + $0x8c] sm:$0xf]
      %v1376 = vld [vmem:[%s1 + $0x90] sm:$0xf]
      %v1377 = vld [vmem:[%s1 + $0x94] sm:$0xf]
      %v1378 = vld [vmem:[%s1 + $0x98] sm:$0xf]
      %v1379 = vld [vmem:[%s1 + $0x9c] sm:$0xf]
      %v1380 = vld [vmem:[%s1 + $0xa0] sm:$0xf]
      %v1381 = vld [vmem:[%s1 + $0xa4] sm:$0xf]
      %v1382 = vld [vmem:[%s1 + $0xa8] sm:$0xf]
      %v1383 = vld [vmem:[%s1 + $0xac] sm:$0xf]
      %v1384 = vld [vmem:[%s1 + $0xb0] sm:$0xf]
      %v1385 = vld [vmem:[%s1 + $0xb4] sm:$0xf]
      %v1386 = vld [vmem:[%s1 + $0xb8] sm:$0xf]
      %v1387 = vld [vmem:[%s1 + $0xbc] sm:$0xf]
      %v1388 = vld [vmem:[%s1 + $0xc0] sm:$0xf]
      %v1389 = vld [vmem:[%s1 + $0xc4] sm:$0xf]
      %v1390 = vld [vmem:[%s1 + $0xc8] sm:$0xf]
      %v1391 = vld [vmem:[%s1 + $0xcc] sm:$0xf]
      %v1392 = vld [vmem:[%s1 + $0xd0] sm:$0xf]
      %v1393 = vld [vmem:[%s1 + $0xd4] sm:$0xf]
      %v1394 = vld [vmem:[%s1 + $0xd8] sm:$0xf]
      %v1395 = vld [vmem:[%s1 + $0xdc] sm:$0xf]
      %v1396 = vld [vmem:[%s1 + $0xe0] sm:$0xf]
      %v1397 = vld [vmem:[%s1 + $0xe4] sm:$0xf]
      %v1398 = vld [vmem:[%s1 + $0xe8] sm:$0xf]
      %v1399 = vld [vmem:[%s1 + $0xec] sm:$0xf]
      %v1400 = vld [vmem:[%s1 + $0xf0] sm:$0xf]
      %v1401 = vld [vmem:[%s1 + $0xf4] sm:$0xf]
      %v1402 = vld [vmem:[%s1 + $0xf8] sm:$0xf]
      %v1403 = vld [vmem:[%s1 + $0xfc] sm:$0xf]
      %v1436 = vunpack.c.l.b16 %v1372
      %v1437 = vunpack.c.l.b16 %v1373
      %v1438 = vunpack.c.l.b16 %v1374
      %v1439 = vunpack.c.l.b16 %v1375
      %v1440 = vunpack.c.l.b16 %v1376
      %v1441 = vunpack.c.l.b16 %v1377
      %v1442 = vunpack.c.l.b16 %v1378
      %v1443 = vunpack.c.l.b16 %v1379
      %v1444 = vunpack.c.l.b16 %v1380
      %v1445 = vunpack.c.l.b16 %v1381
      %v1446 = vunpack.c.l.b16 %v1382
      %v1447 = vunpack.c.l.b16 %v1383
      %v1448 = vunpack.c.l.b16 %v1384
      %v1449 = vunpack.c.l.b16 %v1385
      %v1450 = vunpack.c.l.b16 %v1386
      %v1451 = vunpack.c.l.b16 %v1387
      %v1452 = vunpack.c.l.b16 %v1388
      %v1453 = vunpack.c.l.b16 %v1389
      %v1454 = vunpack.c.l.b16 %v1390
      %v1455 = vunpack.c.l.b16 %v1391
      %v1456 = vunpack.c.l.b16 %v1392
      %v1457 = vunpack.c.l.b16 %v1393
      %v1458 = vunpack.c.l.b16 %v1394
      %v1459 = vunpack.c.l.b16 %v1395
      %v1460 = vunpack.c.l.b16 %v1396
      %v1461 = vunpack.c.l.b16 %v1397
      %v1462 = vunpack.c.l.b16 %v1398
      %v1463 = vunpack.c.l.b16 %v1399
      %v1464 = vunpack.c.l.b16 %v1400
      %v1465 = vunpack.c.l.b16 %v1401
      %v1466 = vunpack.c.l.b16 %v1402
      %v1467 = vunpack.c.l.b16 %v1403
      %v1468 = vpack.c.b16 %v1437, %v1436
      %v1469 = vpack.c.b16 %v1439, %v1438
      %v1470 = vpack.c.b16 %v1441, %v1440
      %v1471 = vpack.c.b16 %v1443, %v1442
      %v1472 = vpack.c.b16 %v1445, %v1444
      %v1473 = vpack.c.b16 %v1447, %v1446
      %v1474 = vpack.c.b16 %v1449, %v1448
      %v1475 = vpack.c.b16 %v1451, %v1450
      %v1476 = vpack.c.b16 %v1453, %v1452
      %v1477 = vpack.c.b16 %v1455, %v1454
      %v1478 = vpack.c.b16 %v1457, %v1456
      %v1479 = vpack.c.b16 %v1459, %v1458
      %v1480 = vpack.c.b16 %v1461, %v1460
      %v1481 = vpack.c.b16 %v1463, %v1462
      %v1482 = vpack.c.b16 %v1465, %v1464
      %v1483 = vpack.c.b16 %v1467, %v1466
      %1500 = vmatprep.subr.bf16.mxu0 0
      %1501 = vmatpush1.bf16.msra.mxu0 %v1475
      %1502 = vmatprep.subr.bf16.mxu0 0
      %1503 = vmatpush1.bf16.msra.mxu0 %v1474
      %1504 = vmatprep.subr.bf16.mxu0 0
      %1505 = vmatpush1.bf16.msra.mxu0 %v1473
      %1506 = vmatprep.subr.bf16.mxu0 0
      %1507 = vmatpush1.bf16.msra.mxu0 %v1472
      %1508 = vmatprep.subr.bf16.mxu0 0
      %1509 = vmatpush1.bf16.msra.mxu0 %v1471
      %1510 = vmatprep.subr.bf16.mxu0 0
      %1511 = vmatpush1.bf16.msra.mxu0 %v1470
      %1512 = vmatprep.subr.bf16.mxu0 0
      %1513 = vmatpush1.bf16.msra.mxu0 %v1469
      %1514 = vmatprep.subr.bf16.mxu0 0
      %1515 = vmatpush1.bf16.msra.mxu0 %v1468
      %1516 = vmatprep.subr.bf16.mxu0 0
      %1517 = vmatpush2.bf16.msra.mxu0 %v1483
      %1518 = vmatprep.subr.bf16.mxu0 0
      %1519 = vmatpush2.bf16.msra.mxu0 %v1482
      %1520 = vmatprep.subr.bf16.mxu0 0
      %1521 = vmatpush2.bf16.msra.mxu0 %v1481
      %1522 = vmatprep.subr.bf16.mxu0 0
      %1523 = vmatpush2.bf16.msra.mxu0 %v1480
      %1524 = vmatprep.subr.bf16.mxu0 0
      %1525 = vmatpush2.bf16.msra.mxu0 %v1479
      %1526 = vmatprep.subr.bf16.mxu0 0
      %1527 = vmatpush2.bf16.msra.mxu0 %v1478
      %1528 = vmatprep.subr.bf16.mxu0 0
      %1529 = vmatpush2.bf16.msra.mxu0 %v1477
      %1530 = vmatprep.subr.bf16.mxu0 0
      %1531 = vmatpush2.bf16.msra.mxu0 %v1476
      %1532 = vmatprep.mubr.bf16.mxu0 %v1356
      %1533 = vmatmul.mubr.bf16.gmra.mxu0 %v1244
      %v1534 = vpop.f32.mrf.mxu0
      %v1535 = vadd.f32 0.0, %v1534
      %v1536 = vpop.f32.mrf.mxu0
      %v1537 = vpop.f32.mrf.mxu0
      %v1538 = vadd.f32 0.0, %v1537
      %v1539 = vpop.f32.mrf.mxu0
      %1540 = vmatprep.mubr.bf16.mxu0 %v1357
      %1541 = vmatmul.mubr.bf16.gmra.mxu0 %v1245
      %v1542 = vpop.f32.mrf.mxu0
      %v1543 = vadd.f32 0.0, %v1542
      %v1544 = vpop.f32.mrf.mxu0
      %v1545 = vpop.f32.mrf.mxu0
      %v1546 = vadd.f32 0.0, %v1545
      %v1547 = vpop.f32.mrf.mxu0
      %1548 = vmatprep.mubr.bf16.mxu0 %v1358
      %1549 = vmatmul.mubr.bf16.gmra.mxu0 %v1246
      %v1550 = vpop.f32.mrf.mxu0
      %v1551 = vadd.f32 0.0, %v1550
      %v1552 = vpop.f32.mrf.mxu0
      %v1553 = vpop.f32.mrf.mxu0
      %v1554 = vadd.f32 0.0, %v1553
      %v1555 = vpop.f32.mrf.mxu0
      %1556 = vmatprep.mubr.bf16.mxu0 %v1359
      %1557 = vmatmul.mubr.bf16.gmra.mxu0 %v1247
      %v1558 = vpop.f32.mrf.mxu0
      %v1559 = vadd.f32 0.0, %v1558
      %v1560 = vpop.f32.mrf.mxu0
      %v1561 = vpop.f32.mrf.mxu0
      %v1562 = vadd.f32 0.0, %v1561
      %v1563 = vpop.f32.mrf.mxu0
      %1564 = vmatprep.mubr.bf16.mxu0 %v1360
      %1565 = vmatmul.mubr.bf16.gmra.mxu0 %v1248
      %v1566 = vpop.f32.mrf.mxu0
      %v1567 = vadd.f32 0.0, %v1566
      %v1568 = vpop.f32.mrf.mxu0
      %v1569 = vpop.f32.mrf.mxu0
      %v1570 = vadd.f32 0.0, %v1569
      %v1571 = vpop.f32.mrf.mxu0
      %1572 = vmatprep.mubr.bf16.mxu0 %v1361
      %1573 = vmatmul.mubr.bf16.gmra.mxu0 %v1249
      %v1574 = vpop.f32.mrf.mxu0
      %v1575 = vadd.f32 0.0, %v1574
      %v1576 = vpop.f32.mrf.mxu0
      %v1577 = vpop.f32.mrf.mxu0
      %v1578 = vadd.f32 0.0, %v1577
      %v1579 = vpop.f32.mrf.mxu0
      %1580 = vmatprep.mubr.bf16.mxu0 %v1362
      %1581 = vmatmul.mubr.bf16.gmra.mxu0 %v1250
      %v1582 = vpop.f32.mrf.mxu0
      %v1583 = vadd.f32 0.0, %v1582
      %v1584 = vpop.f32.mrf.mxu0
      %v1585 = vpop.f32.mrf.mxu0
      %v1586 = vadd.f32 0.0, %v1585
      %v1587 = vpop.f32.mrf.mxu0
      %1588 = vmatprep.mubr.bf16.mxu0 %v1363
      %1589 = vmatmul.mubr.bf16.gmra.mxu0 %v1251
      %v1590 = vpop.f32.mrf.mxu0
      %v1591 = vadd.f32 0.0, %v1590
      %v1592 = vpop.f32.mrf.mxu0
      %v1593 = vpop.f32.mrf.mxu0
      %v1594 = vadd.f32 0.0, %v1593
      %v1595 = vpop.f32.mrf.mxu0
      %1596 = vmatprep.mubr.bf16.mxu0 %v1364
      %1597 = vmatmul.mubr.bf16.gmra.mxu0 %v1252
      %v1598 = vpop.f32.mrf.mxu0
      %v1599 = vadd.f32 0.0, %v1598
      %v1600 = vpop.f32.mrf.mxu0
      %v1601 = vpop.f32.mrf.mxu0
      %v1602 = vadd.f32 0.0, %v1601
      %v1603 = vpop.f32.mrf.mxu0
      %1604 = vmatprep.mubr.bf16.mxu0 %v1365
      %1605 = vmatmul.mubr.bf16.gmra.mxu0 %v1253
      %v1606 = vpop.f32.mrf.mxu0
      %v1607 = vadd.f32 0.0, %v1606
      %v1608 = vpop.f32.mrf.mxu0
      %v1609 = vpop.f32.mrf.mxu0
      %v1610 = vadd.f32 0.0, %v1609
      %v1611 = vpop.f32.mrf.mxu0
      %1612 = vmatprep.mubr.bf16.mxu0 %v1366
      %1613 = vmatmul.mubr.bf16.gmra.mxu0 %v1254
      %v1614 = vpop.f32.mrf.mxu0
      %v1615 = vadd.f32 0.0, %v1614
      %v1616 = vpop.f32.mrf.mxu0
      %v1617 = vpop.f32.mrf.mxu0
      %v1618 = vadd.f32 0.0, %v1617
      %v1619 = vpop.f32.mrf.mxu0
      %1620 = vmatprep.mubr.bf16.mxu0 %v1367
      %1621 = vmatmul.mubr.bf16.gmra.mxu0 %v1255
      %v1622 = vpop.f32.mrf.mxu0
      %v1623 = vadd.f32 0.0, %v1622
      %v1624 = vpop.f32.mrf.mxu0
      %v1625 = vpop.f32.mrf.mxu0
      %v1626 = vadd.f32 0.0, %v1625
      %v1627 = vpop.f32.mrf.mxu0
      %1628 = vmatprep.mubr.bf16.mxu0 %v1368
      %1629 = vmatmul.mubr.bf16.gmra.mxu0 %v1256
      %v1630 = vpop.f32.mrf.mxu0
      %v1631 = vadd.f32 0.0, %v1630
      %v1632 = vpop.f32.mrf.mxu0
      %v1633 = vpop.f32.mrf.mxu0
      %v1634 = vadd.f32 0.0, %v1633
      %v1635 = vpop.f32.mrf.mxu0
      %1636 = vmatprep.mubr.bf16.mxu0 %v1369
      %1637 = vmatmul.mubr.bf16.gmra.mxu0 %v1257
      %v1638 = vpop.f32.mrf.mxu0
      %v1639 = vadd.f32 0.0, %v1638
      %v1640 = vpop.f32.mrf.mxu0
      %v1641 = vpop.f32.mrf.mxu0
      %v1642 = vadd.f32 0.0, %v1641
      %v1643 = vpop.f32.mrf.mxu0
      %1644 = vmatprep.mubr.bf16.mxu0 %v1370
      %1645 = vmatmul.mubr.bf16.gmra.mxu0 %v1258
      %v1646 = vpop.f32.mrf.mxu0
      %v1647 = vadd.f32 0.0, %v1646
      %v1648 = vpop.f32.mrf.mxu0
      %v1649 = vpop.f32.mrf.mxu0
      %v1650 = vadd.f32 0.0, %v1649
      %v1651 = vpop.f32.mrf.mxu0
      %1652 = vmatprep.mubr.bf16.mxu0 %v1371
      %1653 = vmatmul.mubr.bf16.gmra.mxu0 %v1259
      %v1654 = vpop.f32.mrf.mxu0
      %v1655 = vadd.f32 0.0, %v1654
      %v1656 = vpop.f32.mrf.mxu0
      %v1657 = vpop.f32.mrf.mxu0
      %v1658 = vadd.f32 0.0, %v1657
      %v1659 = vpop.f32.mrf.mxu0
      %1660 = vdwg.mxu0
      %v1693 = vunpack.c.l.b16 %v1019
      %v1694 = vunpack.c.l.b16 %v1020
      %v1695 = vunpack.c.l.b16 %v1021
      %v1696 = vunpack.c.l.b16 %v1022
      %v1697 = vunpack.c.l.b16 %v1023
      %v1698 = vunpack.c.l.b16 %v1024
      %v1699 = vunpack.c.l.b16 %v1025
      %v1700 = vunpack.c.l.b16 %v1026
      %v1701 = vunpack.c.l.b16 %v1027
      %v1702 = vunpack.c.l.b16 %v1028
      %v1703 = vunpack.c.l.b16 %v1029
      %v1704 = vunpack.c.l.b16 %v1030
      %v1705 = vunpack.c.l.b16 %v1031
      %v1706 = vunpack.c.l.b16 %v1032
      %v1707 = vunpack.c.l.b16 %v1033
      %v1708 = vunpack.c.l.b16 %v1034
      %v1709 = vunpack.c.l.b16 %v1035
      %v1710 = vunpack.c.l.b16 %v1036
      %v1711 = vunpack.c.l.b16 %v1037
      %v1712 = vunpack.c.l.b16 %v1038
      %v1713 = vunpack.c.l.b16 %v1039
      %v1714 = vunpack.c.l.b16 %v1040
      %v1715 = vunpack.c.l.b16 %v1041
      %v1716 = vunpack.c.l.b16 %v1042
      %v1717 = vunpack.c.l.b16 %v1043
      %v1718 = vunpack.c.l.b16 %v1044
      %v1719 = vunpack.c.l.b16 %v1045
      %v1720 = vunpack.c.l.b16 %v1046
      %v1721 = vunpack.c.l.b16 %v1047
      %v1722 = vunpack.c.l.b16 %v1048
      %v1723 = vunpack.c.l.b16 %v1049
      %v1724 = vunpack.c.l.b16 %v1050
      %v1725 = vpack.c.b16 %v1694, %v1693
      %v1726 = vpack.c.b16 %v1696, %v1695
      %v1727 = vpack.c.b16 %v1698, %v1697
      %v1728 = vpack.c.b16 %v1700, %v1699
      %v1729 = vpack.c.b16 %v1702, %v1701
      %v1730 = vpack.c.b16 %v1704, %v1703
      %v1731 = vpack.c.b16 %v1706, %v1705
      %v1732 = vpack.c.b16 %v1708, %v1707
      %v1733 = vpack.c.b16 %v1710, %v1709
      %v1734 = vpack.c.b16 %v1712, %v1711
      %v1735 = vpack.c.b16 %v1714, %v1713
      %v1736 = vpack.c.b16 %v1716, %v1715
      %v1737 = vpack.c.b16 %v1718, %v1717
      %v1738 = vpack.c.b16 %v1720, %v1719
      %v1739 = vpack.c.b16 %v1722, %v1721
      %v1740 = vpack.c.b16 %v1724, %v1723
      %1757 = vmatprep.subr.bf16.mxu0 0
      %1758 = vmatpush1.bf16.msra.mxu0 %v1732
      %1759 = vmatprep.subr.bf16.mxu0 0
      %1760 = vmatpush1.bf16.msra.mxu0 %v1731
      %1761 = vmatprep.subr.bf16.mxu0 0
      %1762 = vmatpush1.bf16.msra.mxu0 %v1730
      %1763 = vmatprep.subr.bf16.mxu0 0
      %1764 = vmatpush1.bf16.msra.mxu0 %v1729
      %1765 = vmatprep.subr.bf16.mxu0 0
      %1766 = vmatpush1.bf16.msra.mxu0 %v1728
      %1767 = vmatprep.subr.bf16.mxu0 0
      %1768 = vmatpush1.bf16.msra.mxu0 %v1727
      %1769 = vmatprep.subr.bf16.mxu0 0
      %1770 = vmatpush1.bf16.msra.mxu0 %v1726
      %1771 = vmatprep.subr.bf16.mxu0 0
      %1772 = vmatpush1.bf16.msra.mxu0 %v1725
      %1773 = vmatprep.subr.bf16.mxu0 0
      %1774 = vmatpush2.bf16.msra.mxu0 %v1740
      %1775 = vmatprep.subr.bf16.mxu0 0
      %1776 = vmatpush2.bf16.msra.mxu0 %v1739
      %1777 = vmatprep.subr.bf16.mxu0 0
      %1778 = vmatpush2.bf16.msra.mxu0 %v1738
      %1779 = vmatprep.subr.bf16.mxu0 0
      %1780 = vmatpush2.bf16.msra.mxu0 %v1737
      %1781 = vmatprep.subr.bf16.mxu0 0
      %1782 = vmatpush2.bf16.msra.mxu0 %v1736
      %1783 = vmatprep.subr.bf16.mxu0 0
      %1784 = vmatpush2.bf16.msra.mxu0 %v1735
      %1785 = vmatprep.subr.bf16.mxu0 0
      %1786 = vmatpush2.bf16.msra.mxu0 %v1734
      %1787 = vmatprep.subr.bf16.mxu0 0
      %1788 = vmatpush2.bf16.msra.mxu0 %v1733
      %1789 = vmatprep.mubr.bf16.mxu0 %v1003
      %1790 = vmatmul.mubr.bf16.gmra.mxu0 %v891
      %v1791 = vpop.f32.mrf.mxu0
      %v1792 = vadd.f32 %v1535, %v1791
      %v1793 = vpop.f32.mrf.mxu0
      %v1794 = vpop.f32.mrf.mxu0
      %v1795 = vadd.f32 %v1538, %v1794
      %v1796 = vpop.f32.mrf.mxu0
      %1797 = vmatprep.mubr.bf16.mxu0 %v1004
      %1798 = vmatmul.mubr.bf16.gmra.mxu0 %v892
      %v1799 = vpop.f32.mrf.mxu0
      %v1800 = vadd.f32 %v1543, %v1799
      %v1801 = vpop.f32.mrf.mxu0
      %v1802 = vpop.f32.mrf.mxu0
      %v1803 = vadd.f32 %v1546, %v1802
      %v1804 = vpop.f32.mrf.mxu0
      %1805 = vmatprep.mubr.bf16.mxu0 %v1005
      %1806 = vmatmul.mubr.bf16.gmra.mxu0 %v893
      %v1807 = vpop.f32.mrf.mxu0
      %v1808 = vadd.f32 %v1551, %v1807
      %v1809 = vpop.f32.mrf.mxu0
      %v1810 = vpop.f32.mrf.mxu0
      %v1811 = vadd.f32 %v1554, %v1810
      %v1812 = vpop.f32.mrf.mxu0
      %1813 = vmatprep.mubr.bf16.mxu0 %v1006
      %1814 = vmatmul.mubr.bf16.gmra.mxu0 %v894
      %v1815 = vpop.f32.mrf.mxu0
      %v1816 = vadd.f32 %v1559, %v1815
      %v1817 = vpop.f32.mrf.mxu0
      %v1818 = vpop.f32.mrf.mxu0
      %v1819 = vadd.f32 %v1562, %v1818
      %v1820 = vpop.f32.mrf.mxu0
      %1821 = vmatprep.mubr.bf16.mxu0 %v1007
      %1822 = vmatmul.mubr.bf16.gmra.mxu0 %v895
      %v1823 = vpop.f32.mrf.mxu0
      %v1824 = vadd.f32 %v1567, %v1823
      %v1825 = vpop.f32.mrf.mxu0
      %v1826 = vpop.f32.mrf.mxu0
      %v1827 = vadd.f32 %v1570, %v1826
      %v1828 = vpop.f32.mrf.mxu0
      %1829 = vmatprep.mubr.bf16.mxu0 %v1008
      %1830 = vmatmul.mubr.bf16.gmra.mxu0 %v896
      %v1831 = vpop.f32.mrf.mxu0
      %v1832 = vadd.f32 %v1575, %v1831
      %v1833 = vpop.f32.mrf.mxu0
      %v1834 = vpop.f32.mrf.mxu0
      %v1835 = vadd.f32 %v1578, %v1834
      %v1836 = vpop.f32.mrf.mxu0
      %1837 = vmatprep.mubr.bf16.mxu0 %v1009
      %1838 = vmatmul.mubr.bf16.gmra.mxu0 %v897
      %v1839 = vpop.f32.mrf.mxu0
      %v1840 = vadd.f32 %v1583, %v1839
      %v1841 = vpop.f32.mrf.mxu0
      %v1842 = vpop.f32.mrf.mxu0
      %v1843 = vadd.f32 %v1586, %v1842
      %v1844 = vpop.f32.mrf.mxu0
      %1845 = vmatprep.mubr.bf16.mxu0 %v1010
      %1846 = vmatmul.mubr.bf16.gmra.mxu0 %v898
      %v1847 = vpop.f32.mrf.mxu0
      %v1848 = vadd.f32 %v1591, %v1847
      %v1849 = vpop.f32.mrf.mxu0
      %v1850 = vpop.f32.mrf.mxu0
      %v1851 = vadd.f32 %v1594, %v1850
      %v1852 = vpop.f32.mrf.mxu0
      %1853 = vmatprep.mubr.bf16.mxu0 %v1011
      %1854 = vmatmul.mubr.bf16.gmra.mxu0 %v899
      %v1855 = vpop.f32.mrf.mxu0
      %v1856 = vadd.f32 %v1599, %v1855
      %v1857 = vpop.f32.mrf.mxu0
      %v1858 = vpop.f32.mrf.mxu0
      %v1859 = vadd.f32 %v1602, %v1858
      %v1860 = vpop.f32.mrf.mxu0
      %1861 = vmatprep.mubr.bf16.mxu0 %v1012
      %1862 = vmatmul.mubr.bf16.gmra.mxu0 %v900
      %v1863 = vpop.f32.mrf.mxu0
      %v1864 = vadd.f32 %v1607, %v1863
      %v1865 = vpop.f32.mrf.mxu0
      %v1866 = vpop.f32.mrf.mxu0
      %v1867 = vadd.f32 %v1610, %v1866
      %v1868 = vpop.f32.mrf.mxu0
      %1869 = vmatprep.mubr.bf16.mxu0 %v1013
      %1870 = vmatmul.mubr.bf16.gmra.mxu0 %v901
      %v1871 = vpop.f32.mrf.mxu0
      %v1872 = vadd.f32 %v1615, %v1871
      %v1873 = vpop.f32.mrf.mxu0
      %v1874 = vpop.f32.mrf.mxu0
      %v1875 = vadd.f32 %v1618, %v1874
      %v1876 = vpop.f32.mrf.mxu0
      %1877 = vmatprep.mubr.bf16.mxu0 %v1014
      %1878 = vmatmul.mubr.bf16.gmra.mxu0 %v902
      %v1879 = vpop.f32.mrf.mxu0
      %v1880 = vadd.f32 %v1623, %v1879
      %v1881 = vpop.f32.mrf.mxu0
      %v1882 = vpop.f32.mrf.mxu0
      %v1883 = vadd.f32 %v1626, %v1882
      %v1884 = vpop.f32.mrf.mxu0
      %1885 = vmatprep.mubr.bf16.mxu0 %v1015
      %1886 = vmatmul.mubr.bf16.gmra.mxu0 %v903
      %v1887 = vpop.f32.mrf.mxu0
      %v1888 = vadd.f32 %v1631, %v1887
      %v1889 = vpop.f32.mrf.mxu0
      %v1890 = vpop.f32.mrf.mxu0
      %v1891 = vadd.f32 %v1634, %v1890
      %v1892 = vpop.f32.mrf.mxu0
      %1893 = vmatprep.mubr.bf16.mxu0 %v1016
      %1894 = vmatmul.mubr.bf16.gmra.mxu0 %v904
      %v1895 = vpop.f32.mrf.mxu0
      %v1896 = vadd.f32 %v1639, %v1895
      %v1897 = vpop.f32.mrf.mxu0
      %v1898 = vpop.f32.mrf.mxu0
      %v1899 = vadd.f32 %v1642, %v1898
      %v1900 = vpop.f32.mrf.mxu0
      %1901 = vmatprep.mubr.bf16.mxu0 %v1017
      %1902 = vmatmul.mubr.bf16.gmra.mxu0 %v905
      %v1903 = vpop.f32.mrf.mxu0
      %v1904 = vadd.f32 %v1647, %v1903
      %v1905 = vpop.f32.mrf.mxu0
      %v1906 = vpop.f32.mrf.mxu0
      %v1907 = vadd.f32 %v1650, %v1906
      %v1908 = vpop.f32.mrf.mxu0
      %1909 = vmatprep.mubr.bf16.mxu0 %v1018
      %1910 = vmatmul.mubr.bf16.gmra.mxu0 %v906
      %v1911 = vpop.f32.mrf.mxu0
      %v1912 = vadd.f32 %v1655, %v1911
      %v1913 = vpop.f32.mrf.mxu0
      %v1914 = vpop.f32.mrf.mxu0
      %v1915 = vadd.f32 %v1658, %v1914
      %v1916 = vpop.f32.mrf.mxu0
      %1917 = vdwg.mxu0
      %v1918 = vsel %vm602, 1, 0
      %v1919 = vsel %vm603, 1, 0
      %v1920 = vsel %vm604, 1, 0
      %v1921 = vsel %vm605, 1, 0
      %v1922 = vsel %vm606, 1, 0
      %v1923 = vsel %vm607, 1, 0
      %v1924 = vsel %vm608, 1, 0
      %v1925 = vsel %vm609, 1, 0
      %v1926 = vsel %vm610, 1, 0
      %v1927 = vsel %vm611, 1, 0
      %v1928 = vsel %vm612, 1, 0
      %v1929 = vsel %vm613, 1, 0
      %v1930 = vsel %vm614, 1, 0
      %v1931 = vsel %vm615, 1, 0
      %v1932 = vsel %vm616, 1, 0
      %v1933 = vsel %vm617, 1, 0
      %v1934 = vsel %vm618, 1, 0
      %v1935 = vsel %vm619, 1, 0
      %v1936 = vsel %vm620, 1, 0
      %v1937 = vsel %vm621, 1, 0
      %v1938 = vsel %vm622, 1, 0
      %v1939 = vsel %vm623, 1, 0
      %v1940 = vsel %vm624, 1, 0
      %v1941 = vsel %vm625, 1, 0
      %v1942 = vsel %vm626, 1, 0
      %v1943 = vsel %vm627, 1, 0
      %v1944 = vsel %vm628, 1, 0
      %v1945 = vsel %vm629, 1, 0
      %v1946 = vsel %vm630, 1, 0
      %v1947 = vsel %vm631, 1, 0
      %v1948 = vsel %vm632, 1, 0
      %v1949 = vsel %vm633, 1, 0
      %vm1950 = vcmp.eq.s32.totalorder %v1918, 1
      %vm1951 = vcmp.eq.s32.totalorder %v1919, 1
      %vm1952 = vcmp.eq.s32.totalorder %v1920, 1
      %vm1953 = vcmp.eq.s32.totalorder %v1921, 1
      %vm1954 = vcmp.eq.s32.totalorder %v1922, 1
      %vm1955 = vcmp.eq.s32.totalorder %v1923, 1
      %vm1956 = vcmp.eq.s32.totalorder %v1924, 1
      %vm1957 = vcmp.eq.s32.totalorder %v1925, 1
      %vm1958 = vcmp.eq.s32.totalorder %v1926, 1
      %vm1959 = vcmp.eq.s32.totalorder %v1927, 1
      %vm1960 = vcmp.eq.s32.totalorder %v1928, 1
      %vm1961 = vcmp.eq.s32.totalorder %v1929, 1
      %vm1962 = vcmp.eq.s32.totalorder %v1930, 1
      %vm1963 = vcmp.eq.s32.totalorder %v1931, 1
      %vm1964 = vcmp.eq.s32.totalorder %v1932, 1
      %vm1965 = vcmp.eq.s32.totalorder %v1933, 1
      %vm1966 = vcmp.eq.s32.totalorder %v1934, 1
      %vm1967 = vcmp.eq.s32.totalorder %v1935, 1
      %vm1968 = vcmp.eq.s32.totalorder %v1936, 1
      %vm1969 = vcmp.eq.s32.totalorder %v1937, 1
      %vm1970 = vcmp.eq.s32.totalorder %v1938, 1
      %vm1971 = vcmp.eq.s32.totalorder %v1939, 1
      %vm1972 = vcmp.eq.s32.totalorder %v1940, 1
      %vm1973 = vcmp.eq.s32.totalorder %v1941, 1
      %vm1974 = vcmp.eq.s32.totalorder %v1942, 1
      %vm1975 = vcmp.eq.s32.totalorder %v1943, 1
      %vm1976 = vcmp.eq.s32.totalorder %v1944, 1
      %vm1977 = vcmp.eq.s32.totalorder %v1945, 1
      %vm1978 = vcmp.eq.s32.totalorder %v1946, 1
      %vm1979 = vcmp.eq.s32.totalorder %v1947, 1
      %vm1980 = vcmp.eq.s32.totalorder %v1948, 1
      %vm1981 = vcmp.eq.s32.totalorder %v1949, 1
      %v1982 = vsel %vm1950, %v1114, 0.0
      %v1983 = vsel %vm1951, %v1113, 0.0
      %v1984 = vsel %vm1952, %v1112, 0.0
      %v1985 = vsel %vm1953, %v1111, 0.0
      %v1986 = vsel %vm1954, %v1110, 0.0
      %v1987 = vsel %vm1955, %v1109, 0.0
      %v1988 = vsel %vm1956, %v1108, 0.0
      %v1989 = vsel %vm1957, %v1107, 0.0
      %v1990 = vsel %vm1958, %v1106, 0.0
      %v1991 = vsel %vm1959, %v1105, 0.0
      %v1992 = vsel %vm1960, %v1104, 0.0
      %v1993 = vsel %vm1961, %v1103, 0.0
      %v1994 = vsel %vm1962, %v1102, 0.0
      %v1995 = vsel %vm1963, %v1101, 0.0
      %v1996 = vsel %vm1964, %v1100, 0.0
      %v1997 = vsel %vm1965, %v1099, 0.0
      %v1998 = vsel %vm1966, %v1098, 0.0
      %v1999 = vsel %vm1967, %v1097, 0.0
      %v2000 = vsel %vm1968, %v1096, 0.0
      %v2001 = vsel %vm1969, %v1095, 0.0
      %v2002 = vsel %vm1970, %v1094, 0.0
      %v2003 = vsel %vm1971, %v1093, 0.0
      %v2004 = vsel %vm1972, %v1092, 0.0
      %v2005 = vsel %vm1973, %v1091, 0.0
      %v2006 = vsel %vm1974, %v1090, 0.0
      %v2007 = vsel %vm1975, %v1089, 0.0
      %v2008 = vsel %vm1976, %v1088, 0.0
      %v2009 = vsel %vm1977, %v1087, 0.0
      %v2010 = vsel %vm1978, %v1086, 0.0
      %v2011 = vsel %vm1979, %v1085, 0.0
      %v2012 = vsel %vm1980, %v1084, 0.0
      %v2013 = vsel %vm1981, %v1115, 0.0
      %v2014 = vpack.c.bf16 %v1983, %v1982
      %v2015 = vpack.c.bf16 %v1985, %v1984
      %v2016 = vpack.c.bf16 %v1987, %v1986
      %v2017 = vpack.c.bf16 %v1989, %v1988
      %v2018 = vpack.c.bf16 %v1991, %v1990
      %v2019 = vpack.c.bf16 %v1993, %v1992
      %v2020 = vpack.c.bf16 %v1995, %v1994
      %v2021 = vpack.c.bf16 %v1997, %v1996
      %v2022 = vpack.c.bf16 %v1999, %v1998
      %v2023 = vpack.c.bf16 %v2001, %v2000
      %v2024 = vpack.c.bf16 %v2003, %v2002
      %v2025 = vpack.c.bf16 %v2005, %v2004
      %v2026 = vpack.c.bf16 %v2007, %v2006
      %v2027 = vpack.c.bf16 %v2009, %v2008
      %v2028 = vpack.c.bf16 %v2011, %v2010
      %v2029 = vpack.c.bf16 %v2013, %v2012
      %v2062 = vunpack.c.l.b16 %v634
      %v2063 = vunpack.c.l.b16 %v635
      %v2064 = vunpack.c.l.b16 %v636
      %v2065 = vunpack.c.l.b16 %v637
      %v2066 = vunpack.c.l.b16 %v638
      %v2067 = vunpack.c.l.b16 %v639
      %v2068 = vunpack.c.l.b16 %v640
      %v2069 = vunpack.c.l.b16 %v641
      %v2070 = vunpack.c.l.b16 %v642
      %v2071 = vunpack.c.l.b16 %v643
      %v2072 = vunpack.c.l.b16 %v644
      %v2073 = vunpack.c.l.b16 %v645
      %v2074 = vunpack.c.l.b16 %v646
      %v2075 = vunpack.c.l.b16 %v647
      %v2076 = vunpack.c.l.b16 %v648
      %v2077 = vunpack.c.l.b16 %v649
      %v2078 = vunpack.c.l.b16 %v650
      %v2079 = vunpack.c.l.b16 %v651
      %v2080 = vunpack.c.l.b16 %v652
      %v2081 = vunpack.c.l.b16 %v653
      %v2082 = vunpack.c.l.b16 %v654
      %v2083 = vunpack.c.l.b16 %v655
      %v2084 = vunpack.c.l.b16 %v656
      %v2085 = vunpack.c.l.b16 %v657
      %v2086 = vunpack.c.l.b16 %v658
      %v2087 = vunpack.c.l.b16 %v659
      %v2088 = vunpack.c.l.b16 %v660
      %v2089 = vunpack.c.l.b16 %v661
      %v2090 = vunpack.c.l.b16 %v662
      %v2091 = vunpack.c.l.b16 %v663
      %v2092 = vunpack.c.l.b16 %v664
      %v2093 = vunpack.c.l.b16 %v665
      %v2094 = vpack.c.b16 %v2063, %v2062
      %v2095 = vpack.c.b16 %v2065, %v2064
      %v2096 = vpack.c.b16 %v2067, %v2066
      %v2097 = vpack.c.b16 %v2069, %v2068
      %v2098 = vpack.c.b16 %v2071, %v2070
      %v2099 = vpack.c.b16 %v2073, %v2072
      %v2100 = vpack.c.b16 %v2075, %v2074
      %v2101 = vpack.c.b16 %v2077, %v2076
      %v2102 = vpack.c.b16 %v2079, %v2078
      %v2103 = vpack.c.b16 %v2081, %v2080
      %v2104 = vpack.c.b16 %v2083, %v2082
      %v2105 = vpack.c.b16 %v2085, %v2084
      %v2106 = vpack.c.b16 %v2087, %v2086
      %v2107 = vpack.c.b16 %v2089, %v2088
      %v2108 = vpack.c.b16 %v2091, %v2090
      %v2109 = vpack.c.b16 %v2093, %v2092
      %v2126 = vld [vmem:[%s1 + $0x100] sm:$0xf]
      %v2127 = vld [vmem:[%s1 + $0x104] sm:$0xf]
      %v2128 = vld [vmem:[%s1 + $0x108] sm:$0xf]
      %v2129 = vld [vmem:[%s1 + $0x10c] sm:$0xf]
      %v2130 = vld [vmem:[%s1 + $0x110] sm:$0xf]
      %v2131 = vld [vmem:[%s1 + $0x114] sm:$0xf]
      %v2132 = vld [vmem:[%s1 + $0x118] sm:$0xf]
      %v2133 = vld [vmem:[%s1 + $0x11c] sm:$0xf]
      %v2134 = vld [vmem:[%s1 + $0x120] sm:$0xf]
      %v2135 = vld [vmem:[%s1 + $0x124] sm:$0xf]
      %v2136 = vld [vmem:[%s1 + $0x128] sm:$0xf]
      %v2137 = vld [vmem:[%s1 + $0x12c] sm:$0xf]
      %v2138 = vld [vmem:[%s1 + $0x130] sm:$0xf]
      %v2139 = vld [vmem:[%s1 + $0x134] sm:$0xf]
      %v2140 = vld [vmem:[%s1 + $0x138] sm:$0xf]
      %v2141 = vld [vmem:[%s1 + $0x13c] sm:$0xf]
      %v2142 = vld [vmem:[%s1 + $0x140] sm:$0xf]
      %v2143 = vld [vmem:[%s1 + $0x144] sm:$0xf]
      %v2144 = vld [vmem:[%s1 + $0x148] sm:$0xf]
      %v2145 = vld [vmem:[%s1 + $0x14c] sm:$0xf]
      %v2146 = vld [vmem:[%s1 + $0x150] sm:$0xf]
      %v2147 = vld [vmem:[%s1 + $0x154] sm:$0xf]
      %v2148 = vld [vmem:[%s1 + $0x158] sm:$0xf]
      %v2149 = vld [vmem:[%s1 + $0x15c] sm:$0xf]
      %v2150 = vld [vmem:[%s1 + $0x160] sm:$0xf]
      %v2151 = vld [vmem:[%s1 + $0x164] sm:$0xf]
      %v2152 = vld [vmem:[%s1 + $0x168] sm:$0xf]
      %v2153 = vld [vmem:[%s1 + $0x16c] sm:$0xf]
      %v2154 = vld [vmem:[%s1 + $0x170] sm:$0xf]
      %v2155 = vld [vmem:[%s1 + $0x174] sm:$0xf]
      %v2156 = vld [vmem:[%s1 + $0x178] sm:$0xf]
      %v2157 = vld [vmem:[%s1 + $0x17c] sm:$0xf]
      %v2190 = vunpack.c.l.b16 %v2126
      %v2191 = vunpack.c.l.b16 %v2127
      %v2192 = vunpack.c.l.b16 %v2128
      %v2193 = vunpack.c.l.b16 %v2129
      %v2194 = vunpack.c.l.b16 %v2130
      %v2195 = vunpack.c.l.b16 %v2131
      %v2196 = vunpack.c.l.b16 %v2132
      %v2197 = vunpack.c.l.b16 %v2133
      %v2198 = vunpack.c.l.b16 %v2134
      %v2199 = vunpack.c.l.b16 %v2135
      %v2200 = vunpack.c.l.b16 %v2136
      %v2201 = vunpack.c.l.b16 %v2137
      %v2202 = vunpack.c.l.b16 %v2138
      %v2203 = vunpack.c.l.b16 %v2139
      %v2204 = vunpack.c.l.b16 %v2140
      %v2205 = vunpack.c.l.b16 %v2141
      %v2206 = vunpack.c.l.b16 %v2142
      %v2207 = vunpack.c.l.b16 %v2143
      %v2208 = vunpack.c.l.b16 %v2144
      %v2209 = vunpack.c.l.b16 %v2145
      %v2210 = vunpack.c.l.b16 %v2146
      %v2211 = vunpack.c.l.b16 %v2147
      %v2212 = vunpack.c.l.b16 %v2148
      %v2213 = vunpack.c.l.b16 %v2149
      %v2214 = vunpack.c.l.b16 %v2150
      %v2215 = vunpack.c.l.b16 %v2151
      %v2216 = vunpack.c.l.b16 %v2152
      %v2217 = vunpack.c.l.b16 %v2153
      %v2218 = vunpack.c.l.b16 %v2154
      %v2219 = vunpack.c.l.b16 %v2155
      %v2220 = vunpack.c.l.b16 %v2156
      %v2221 = vunpack.c.l.b16 %v2157
      %v2222 = vpack.c.b16 %v2191, %v2190
      %v2223 = vpack.c.b16 %v2193, %v2192
      %v2224 = vpack.c.b16 %v2195, %v2194
      %v2225 = vpack.c.b16 %v2197, %v2196
      %v2226 = vpack.c.b16 %v2199, %v2198
      %v2227 = vpack.c.b16 %v2201, %v2200
      %v2228 = vpack.c.b16 %v2203, %v2202
      %v2229 = vpack.c.b16 %v2205, %v2204
      %v2230 = vpack.c.b16 %v2207, %v2206
      %v2231 = vpack.c.b16 %v2209, %v2208
      %v2232 = vpack.c.b16 %v2211, %v2210
      %v2233 = vpack.c.b16 %v2213, %v2212
      %v2234 = vpack.c.b16 %v2215, %v2214
      %v2235 = vpack.c.b16 %v2217, %v2216
      %v2236 = vpack.c.b16 %v2219, %v2218
      %v2237 = vpack.c.b16 %v2221, %v2220
      %2254 = vmatprep.subr.bf16.mxu0 0
      %2255 = vmatpush1.bf16.msra.mxu0 %v2229
      %2256 = vmatprep.subr.bf16.mxu0 0
      %2257 = vmatpush1.bf16.msra.mxu0 %v2228
      %2258 = vmatprep.subr.bf16.mxu0 0
      %2259 = vmatpush1.bf16.msra.mxu0 %v2227
      %2260 = vmatprep.subr.bf16.mxu0 0
      %2261 = vmatpush1.bf16.msra.mxu0 %v2226
      %2262 = vmatprep.subr.bf16.mxu0 0
      %2263 = vmatpush1.bf16.msra.mxu0 %v2225
      %2264 = vmatprep.subr.bf16.mxu0 0
      %2265 = vmatpush1.bf16.msra.mxu0 %v2224
      %2266 = vmatprep.subr.bf16.mxu0 0
      %2267 = vmatpush1.bf16.msra.mxu0 %v2223
      %2268 = vmatprep.subr.bf16.mxu0 0
      %2269 = vmatpush1.bf16.msra.mxu0 %v2222
      %2270 = vmatprep.subr.bf16.mxu0 0
      %2271 = vmatpush2.bf16.msra.mxu0 %v2237
      %2272 = vmatprep.subr.bf16.mxu0 0
      %2273 = vmatpush2.bf16.msra.mxu0 %v2236
      %2274 = vmatprep.subr.bf16.mxu0 0
      %2275 = vmatpush2.bf16.msra.mxu0 %v2235
      %2276 = vmatprep.subr.bf16.mxu0 0
      %2277 = vmatpush2.bf16.msra.mxu0 %v2234
      %2278 = vmatprep.subr.bf16.mxu0 0
      %2279 = vmatpush2.bf16.msra.mxu0 %v2233
      %2280 = vmatprep.subr.bf16.mxu0 0
      %2281 = vmatpush2.bf16.msra.mxu0 %v2232
      %2282 = vmatprep.subr.bf16.mxu0 0
      %2283 = vmatpush2.bf16.msra.mxu0 %v2231
      %2284 = vmatprep.subr.bf16.mxu0 0
      %2285 = vmatpush2.bf16.msra.mxu0 %v2230
      %2286 = vmatprep.mubr.bf16.mxu0 %v2014
      %2287 = vmatmul.mubr.bf16.gmra.mxu0 %v2094
      %v2288 = vpop.f32.mrf.mxu0
      %v2289 = vadd.f32 0.0, %v2288
      %v2290 = vpop.f32.mrf.mxu0
      %v2291 = vpop.f32.mrf.mxu0
      %v2292 = vadd.f32 0.0, %v2291
      %v2293 = vpop.f32.mrf.mxu0
      %2294 = vmatprep.mubr.bf16.mxu0 %v2015
      %2295 = vmatmul.mubr.bf16.gmra.mxu0 %v2095
      %v2296 = vpop.f32.mrf.mxu0
      %v2297 = vadd.f32 0.0, %v2296
      %v2298 = vpop.f32.mrf.mxu0
      %v2299 = vpop.f32.mrf.mxu0
      %v2300 = vadd.f32 0.0, %v2299
      %v2301 = vpop.f32.mrf.mxu0
      %2302 = vmatprep.mubr.bf16.mxu0 %v2016
      %2303 = vmatmul.mubr.bf16.gmra.mxu0 %v2096
      %v2304 = vpop.f32.mrf.mxu0
      %v2305 = vadd.f32 0.0, %v2304
      %v2306 = vpop.f32.mrf.mxu0
      %v2307 = vpop.f32.mrf.mxu0
      %v2308 = vadd.f32 0.0, %v2307
      %v2309 = vpop.f32.mrf.mxu0
      %2310 = vmatprep.mubr.bf16.mxu0 %v2017
      %2311 = vmatmul.mubr.bf16.gmra.mxu0 %v2097
      %v2312 = vpop.f32.mrf.mxu0
      %v2313 = vadd.f32 0.0, %v2312
      %v2314 = vpop.f32.mrf.mxu0
      %v2315 = vpop.f32.mrf.mxu0
      %v2316 = vadd.f32 0.0, %v2315
      %v2317 = vpop.f32.mrf.mxu0
      %2318 = vmatprep.mubr.bf16.mxu0 %v2018
      %2319 = vmatmul.mubr.bf16.gmra.mxu0 %v2098
      %v2320 = vpop.f32.mrf.mxu0
      %v2321 = vadd.f32 0.0, %v2320
      %v2322 = vpop.f32.mrf.mxu0
      %v2323 = vpop.f32.mrf.mxu0
      %v2324 = vadd.f32 0.0, %v2323
      %v2325 = vpop.f32.mrf.mxu0
      %2326 = vmatprep.mubr.bf16.mxu0 %v2019
      %2327 = vmatmul.mubr.bf16.gmra.mxu0 %v2099
      %v2328 = vpop.f32.mrf.mxu0
      %v2329 = vadd.f32 0.0, %v2328
      %v2330 = vpop.f32.mrf.mxu0
      %v2331 = vpop.f32.mrf.mxu0
      %v2332 = vadd.f32 0.0, %v2331
      %v2333 = vpop.f32.mrf.mxu0
      %2334 = vmatprep.mubr.bf16.mxu0 %v2020
      %2335 = vmatmul.mubr.bf16.gmra.mxu0 %v2100
      %v2336 = vpop.f32.mrf.mxu0
      %v2337 = vadd.f32 0.0, %v2336
      %v2338 = vpop.f32.mrf.mxu0
      %v2339 = vpop.f32.mrf.mxu0
      %v2340 = vadd.f32 0.0, %v2339
      %v2341 = vpop.f32.mrf.mxu0
      %2342 = vmatprep.mubr.bf16.mxu0 %v2021
      %2343 = vmatmul.mubr.bf16.gmra.mxu0 %v2101
      %v2344 = vpop.f32.mrf.mxu0
      %v2345 = vadd.f32 0.0, %v2344
      %v2346 = vpop.f32.mrf.mxu0
      %v2347 = vpop.f32.mrf.mxu0
      %v2348 = vadd.f32 0.0, %v2347
      %v2349 = vpop.f32.mrf.mxu0
      %2350 = vmatprep.mubr.bf16.mxu0 %v2022
      %2351 = vmatmul.mubr.bf16.gmra.mxu0 %v2102
      %v2352 = vpop.f32.mrf.mxu0
      %v2353 = vadd.f32 0.0, %v2352
      %v2354 = vpop.f32.mrf.mxu0
      %v2355 = vpop.f32.mrf.mxu0
      %v2356 = vadd.f32 0.0, %v2355
      %v2357 = vpop.f32.mrf.mxu0
      %2358 = vmatprep.mubr.bf16.mxu0 %v2023
      %2359 = vmatmul.mubr.bf16.gmra.mxu0 %v2103
      %v2360 = vpop.f32.mrf.mxu0
      %v2361 = vadd.f32 0.0, %v2360
      %v2362 = vpop.f32.mrf.mxu0
      %v2363 = vpop.f32.mrf.mxu0
      %v2364 = vadd.f32 0.0, %v2363
      %v2365 = vpop.f32.mrf.mxu0
      %2366 = vmatprep.mubr.bf16.mxu0 %v2024
      %2367 = vmatmul.mubr.bf16.gmra.mxu0 %v2104
      %v2368 = vpop.f32.mrf.mxu0
      %v2369 = vadd.f32 0.0, %v2368
      %v2370 = vpop.f32.mrf.mxu0
      %v2371 = vpop.f32.mrf.mxu0
      %v2372 = vadd.f32 0.0, %v2371
      %v2373 = vpop.f32.mrf.mxu0
      %2374 = vmatprep.mubr.bf16.mxu0 %v2025
      %2375 = vmatmul.mubr.bf16.gmra.mxu0 %v2105
      %v2376 = vpop.f32.mrf.mxu0
      %v2377 = vadd.f32 0.0, %v2376
      %v2378 = vpop.f32.mrf.mxu0
      %v2379 = vpop.f32.mrf.mxu0
      %v2380 = vadd.f32 0.0, %v2379
      %v2381 = vpop.f32.mrf.mxu0
      %2382 = vmatprep.mubr.bf16.mxu0 %v2026
      %2383 = vmatmul.mubr.bf16.gmra.mxu0 %v2106
      %v2384 = vpop.f32.mrf.mxu0
      %v2385 = vadd.f32 0.0, %v2384
      %v2386 = vpop.f32.mrf.mxu0
      %v2387 = vpop.f32.mrf.mxu0
      %v2388 = vadd.f32 0.0, %v2387
      %v2389 = vpop.f32.mrf.mxu0
      %2390 = vmatprep.mubr.bf16.mxu0 %v2027
      %2391 = vmatmul.mubr.bf16.gmra.mxu0 %v2107
      %v2392 = vpop.f32.mrf.mxu0
      %v2393 = vadd.f32 0.0, %v2392
      %v2394 = vpop.f32.mrf.mxu0
      %v2395 = vpop.f32.mrf.mxu0
      %v2396 = vadd.f32 0.0, %v2395
      %v2397 = vpop.f32.mrf.mxu0
      %2398 = vmatprep.mubr.bf16.mxu0 %v2028
      %2399 = vmatmul.mubr.bf16.gmra.mxu0 %v2108
      %v2400 = vpop.f32.mrf.mxu0
      %v2401 = vadd.f32 0.0, %v2400
      %v2402 = vpop.f32.mrf.mxu0
      %v2403 = vpop.f32.mrf.mxu0
      %v2404 = vadd.f32 0.0, %v2403
      %v2405 = vpop.f32.mrf.mxu0
      %2406 = vmatprep.mubr.bf16.mxu0 %v2029
      %2407 = vmatmul.mubr.bf16.gmra.mxu0 %v2109
      %v2408 = vpop.f32.mrf.mxu0
      %v2409 = vadd.f32 0.0, %v2408
      %v2410 = vpop.f32.mrf.mxu0
      %v2411 = vpop.f32.mrf.mxu0
      %v2412 = vadd.f32 0.0, %v2411
      %v2413 = vpop.f32.mrf.mxu0
      %2414 = vdwg.mxu0
      %v2415 = vadd.f32 %v1792, %v2289
      %v2416 = vadd.f32 %v1795, %v2292
      %v2417 = vadd.f32 %v1800, %v2297
      %v2418 = vadd.f32 %v1803, %v2300
      %v2419 = vadd.f32 %v1808, %v2305
      %v2420 = vadd.f32 %v1811, %v2308
      %v2421 = vadd.f32 %v1816, %v2313
      %v2422 = vadd.f32 %v1819, %v2316
      %v2423 = vadd.f32 %v1824, %v2321
      %v2424 = vadd.f32 %v1827, %v2324
      %v2425 = vadd.f32 %v1832, %v2329
      %v2426 = vadd.f32 %v1835, %v2332
      %v2427 = vadd.f32 %v1840, %v2337
      %v2428 = vadd.f32 %v1843, %v2340
      %v2429 = vadd.f32 %v1848, %v2345
      %v2430 = vadd.f32 %v1851, %v2348
      %v2431 = vadd.f32 %v1856, %v2353
      %v2432 = vadd.f32 %v1859, %v2356
      %v2433 = vadd.f32 %v1864, %v2361
      %v2434 = vadd.f32 %v1867, %v2364
      %v2435 = vadd.f32 %v1872, %v2369
      %v2436 = vadd.f32 %v1875, %v2372
      %v2437 = vadd.f32 %v1880, %v2377
      %v2438 = vadd.f32 %v1883, %v2380
      %v2439 = vadd.f32 %v1888, %v2385
      %v2440 = vadd.f32 %v1891, %v2388
      %v2441 = vadd.f32 %v1896, %v2393
      %v2442 = vadd.f32 %v1899, %v2396
      %v2443 = vadd.f32 %v1904, %v2401
      %v2444 = vadd.f32 %v1907, %v2404
      %v2445 = vadd.f32 %v1912, %v2409
      %v2446 = vadd.f32 %v1915, %v2412
      %vm2447 = vmand %vm538, %vm570
      %vm2448 = vmand %vm539, %vm571
      %vm2449 = vmand %vm540, %vm572
      %vm2450 = vmand %vm541, %vm573
      %vm2451 = vmand %vm542, %vm574
      %vm2452 = vmand %vm543, %vm575
      %vm2453 = vmand %vm544, %vm576
      %vm2454 = vmand %vm545, %vm577
      %vm2455 = vmand %vm546, %vm578
      %vm2456 = vmand %vm547, %vm579
      %vm2457 = vmand %vm548, %vm580
      %vm2458 = vmand %vm549, %vm581
      %vm2459 = vmand %vm550, %vm582
      %vm2460 = vmand %vm551, %vm583
      %vm2461 = vmand %vm552, %vm584
      %vm2462 = vmand %vm553, %vm585
      %vm2463 = vmand %vm554, %vm586
      %vm2464 = vmand %vm555, %vm587
      %vm2465 = vmand %vm556, %vm588
      %vm2466 = vmand %vm557, %vm589
      %vm2467 = vmand %vm558, %vm590
      %vm2468 = vmand %vm559, %vm591
      %vm2469 = vmand %vm560, %vm592
      %vm2470 = vmand %vm561, %vm593
      %vm2471 = vmand %vm562, %vm594
      %vm2472 = vmand %vm563, %vm595
      %vm2473 = vmand %vm564, %vm596
      %vm2474 = vmand %vm565, %vm597
      %vm2475 = vmand %vm566, %vm598
      %vm2476 = vmand %vm567, %vm599
      %vm2477 = vmand %vm568, %vm600
      %vm2478 = vmand %vm569, %vm601
      %v2479 = vsel %vm2447, 1, 0
      %v2480 = vsel %vm2448, 1, 0
      %v2481 = vsel %vm2449, 1, 0
      %v2482 = vsel %vm2450, 1, 0
      %v2483 = vsel %vm2451, 1, 0
      %v2484 = vsel %vm2452, 1, 0
      %v2485 = vsel %vm2453, 1, 0
      %v2486 = vsel %vm2454, 1, 0
      %v2487 = vsel %vm2455, 1, 0
      %v2488 = vsel %vm2456, 1, 0
      %v2489 = vsel %vm2457, 1, 0
      %v2490 = vsel %vm2458, 1, 0
      %v2491 = vsel %vm2459, 1, 0
      %v2492 = vsel %vm2460, 1, 0
      %v2493 = vsel %vm2461, 1, 0
      %v2494 = vsel %vm2462, 1, 0
      %v2495 = vsel %vm2463, 1, 0
      %v2496 = vsel %vm2464, 1, 0
      %v2497 = vsel %vm2465, 1, 0
      %v2498 = vsel %vm2466, 1, 0
      %v2499 = vsel %vm2467, 1, 0
      %v2500 = vsel %vm2468, 1, 0
      %v2501 = vsel %vm2469, 1, 0
      %v2502 = vsel %vm2470, 1, 0
      %v2503 = vsel %vm2471, 1, 0
      %v2504 = vsel %vm2472, 1, 0
      %v2505 = vsel %vm2473, 1, 0
      %v2506 = vsel %vm2474, 1, 0
      %v2507 = vsel %vm2475, 1, 0
      %v2508 = vsel %vm2476, 1, 0
      %v2509 = vsel %vm2477, 1, 0
      %v2510 = vsel %vm2478, 1, 0
      %vm2511 = vcmp.eq.s32.totalorder %v2479, 1
      %vm2512 = vcmp.eq.s32.totalorder %v2480, 1
      %vm2513 = vcmp.eq.s32.totalorder %v2481, 1
      %vm2514 = vcmp.eq.s32.totalorder %v2482, 1
      %vm2515 = vcmp.eq.s32.totalorder %v2483, 1
      %vm2516 = vcmp.eq.s32.totalorder %v2484, 1
      %vm2517 = vcmp.eq.s32.totalorder %v2485, 1
      %vm2518 = vcmp.eq.s32.totalorder %v2486, 1
      %vm2519 = vcmp.eq.s32.totalorder %v2487, 1
      %vm2520 = vcmp.eq.s32.totalorder %v2488, 1
      %vm2521 = vcmp.eq.s32.totalorder %v2489, 1
      %vm2522 = vcmp.eq.s32.totalorder %v2490, 1
      %vm2523 = vcmp.eq.s32.totalorder %v2491, 1
      %vm2524 = vcmp.eq.s32.totalorder %v2492, 1
      %vm2525 = vcmp.eq.s32.totalorder %v2493, 1
      %vm2526 = vcmp.eq.s32.totalorder %v2494, 1
      %vm2527 = vcmp.eq.s32.totalorder %v2495, 1
      %vm2528 = vcmp.eq.s32.totalorder %v2496, 1
      %vm2529 = vcmp.eq.s32.totalorder %v2497, 1
      %vm2530 = vcmp.eq.s32.totalorder %v2498, 1
      %vm2531 = vcmp.eq.s32.totalorder %v2499, 1
      %vm2532 = vcmp.eq.s32.totalorder %v2500, 1
      %vm2533 = vcmp.eq.s32.totalorder %v2501, 1
      %vm2534 = vcmp.eq.s32.totalorder %v2502, 1
      %vm2535 = vcmp.eq.s32.totalorder %v2503, 1
      %vm2536 = vcmp.eq.s32.totalorder %v2504, 1
      %vm2537 = vcmp.eq.s32.totalorder %v2505, 1
      %vm2538 = vcmp.eq.s32.totalorder %v2506, 1
      %vm2539 = vcmp.eq.s32.totalorder %v2507, 1
      %vm2540 = vcmp.eq.s32.totalorder %v2508, 1
      %vm2541 = vcmp.eq.s32.totalorder %v2509, 1
      %vm2542 = vcmp.eq.s32.totalorder %v2510, 1
      %v2543 = vsel %vm2511, %v760, 0.0
      %v2544 = vsel %vm2512, %v759, 0.0
      %v2545 = vsel %vm2513, %v758, 0.0
      %v2546 = vsel %vm2514, %v757, 0.0
      %v2547 = vsel %vm2515, %v756, 0.0
      %v2548 = vsel %vm2516, %v755, 0.0
      %v2549 = vsel %vm2517, %v754, 0.0
      %v2550 = vsel %vm2518, %v753, 0.0
      %v2551 = vsel %vm2519, %v752, 0.0
      %v2552 = vsel %vm2520, %v751, 0.0
      %v2553 = vsel %vm2521, %v750, 0.0
      %v2554 = vsel %vm2522, %v749, 0.0
      %v2555 = vsel %vm2523, %v748, 0.0
      %v2556 = vsel %vm2524, %v747, 0.0
      %v2557 = vsel %vm2525, %v746, 0.0
      %v2558 = vsel %vm2526, %v745, 0.0
      %v2559 = vsel %vm2527, %v744, 0.0
      %v2560 = vsel %vm2528, %v743, 0.0
      %v2561 = vsel %vm2529, %v742, 0.0
      %v2562 = vsel %vm2530, %v741, 0.0
      %v2563 = vsel %vm2531, %v740, 0.0
      %v2564 = vsel %vm2532, %v739, 0.0
      %v2565 = vsel %vm2533, %v738, 0.0
      %v2566 = vsel %vm2534, %v737, 0.0
      %v2567 = vsel %vm2535, %v736, 0.0
      %v2568 = vsel %vm2536, %v735, 0.0
      %v2569 = vsel %vm2537, %v734, 0.0
      %v2570 = vsel %vm2538, %v733, 0.0
      %v2571 = vsel %vm2539, %v732, 0.0
      %v2572 = vsel %vm2540, %v731, 0.0
      %v2573 = vsel %vm2541, %v762, 0.0
      %v2574 = vsel %vm2542, %v761, 0.0
      %v2575 = vpack.c.bf16 %v2544, %v2543
      %v2576 = vpack.c.bf16 %v2546, %v2545
      %v2577 = vpack.c.bf16 %v2548, %v2547
      %v2578 = vpack.c.bf16 %v2550, %v2549
      %v2579 = vpack.c.bf16 %v2552, %v2551
      %v2580 = vpack.c.bf16 %v2554, %v2553
      %v2581 = vpack.c.bf16 %v2556, %v2555
      %v2582 = vpack.c.bf16 %v2558, %v2557
      %v2583 = vpack.c.bf16 %v2560, %v2559
      %v2584 = vpack.c.bf16 %v2562, %v2561
      %v2585 = vpack.c.bf16 %v2564, %v2563
      %v2586 = vpack.c.bf16 %v2566, %v2565
      %v2587 = vpack.c.bf16 %v2568, %v2567
      %v2588 = vpack.c.bf16 %v2570, %v2569
      %v2589 = vpack.c.bf16 %v2572, %v2571
      %v2590 = vpack.c.bf16 %v2574, %v2573
      %v2591 = vsel %vm538, 1, 0
      %v2592 = vsel %vm539, 1, 0
      %v2593 = vsel %vm540, 1, 0
      %v2594 = vsel %vm541, 1, 0
      %v2595 = vsel %vm542, 1, 0
      %v2596 = vsel %vm543, 1, 0
      %v2597 = vsel %vm544, 1, 0
      %v2598 = vsel %vm545, 1, 0
      %v2599 = vsel %vm546, 1, 0
      %v2600 = vsel %vm547, 1, 0
      %v2601 = vsel %vm548, 1, 0
      %v2602 = vsel %vm549, 1, 0
      %v2603 = vsel %vm550, 1, 0
      %v2604 = vsel %vm551, 1, 0
      %v2605 = vsel %vm552, 1, 0
      %v2606 = vsel %vm553, 1, 0
      %v2607 = vsel %vm554, 1, 0
      %v2608 = vsel %vm555, 1, 0
      %v2609 = vsel %vm556, 1, 0
      %v2610 = vsel %vm557, 1, 0
      %v2611 = vsel %vm558, 1, 0
      %v2612 = vsel %vm559, 1, 0
      %v2613 = vsel %vm560, 1, 0
      %v2614 = vsel %vm561, 1, 0
      %v2615 = vsel %vm562, 1, 0
      %v2616 = vsel %vm563, 1, 0
      %v2617 = vsel %vm564, 1, 0
      %v2618 = vsel %vm565, 1, 0
      %v2619 = vsel %vm566, 1, 0
      %v2620 = vsel %vm567, 1, 0
      %v2621 = vsel %vm568, 1, 0
      %v2622 = vsel %vm569, 1, 0
      %vm2623 = vcmp.eq.s32.totalorder %v2591, 1
      %vm2624 = vcmp.eq.s32.totalorder %v2592, 1
      %vm2625 = vcmp.eq.s32.totalorder %v2593, 1
      %vm2626 = vcmp.eq.s32.totalorder %v2594, 1
      %vm2627 = vcmp.eq.s32.totalorder %v2595, 1
      %vm2628 = vcmp.eq.s32.totalorder %v2596, 1
      %vm2629 = vcmp.eq.s32.totalorder %v2597, 1
      %vm2630 = vcmp.eq.s32.totalorder %v2598, 1
      %vm2631 = vcmp.eq.s32.totalorder %v2599, 1
      %vm2632 = vcmp.eq.s32.totalorder %v2600, 1
      %vm2633 = vcmp.eq.s32.totalorder %v2601, 1
      %vm2634 = vcmp.eq.s32.totalorder %v2602, 1
      %vm2635 = vcmp.eq.s32.totalorder %v2603, 1
      %vm2636 = vcmp.eq.s32.totalorder %v2604, 1
      %vm2637 = vcmp.eq.s32.totalorder %v2605, 1
      %vm2638 = vcmp.eq.s32.totalorder %v2606, 1
      %vm2639 = vcmp.eq.s32.totalorder %v2607, 1
      %vm2640 = vcmp.eq.s32.totalorder %v2608, 1
      %vm2641 = vcmp.eq.s32.totalorder %v2609, 1
      %vm2642 = vcmp.eq.s32.totalorder %v2610, 1
      %vm2643 = vcmp.eq.s32.totalorder %v2611, 1
      %vm2644 = vcmp.eq.s32.totalorder %v2612, 1
      %vm2645 = vcmp.eq.s32.totalorder %v2613, 1
      %vm2646 = vcmp.eq.s32.totalorder %v2614, 1
      %vm2647 = vcmp.eq.s32.totalorder %v2615, 1
      %vm2648 = vcmp.eq.s32.totalorder %v2616, 1
      %vm2649 = vcmp.eq.s32.totalorder %v2617, 1
      %vm2650 = vcmp.eq.s32.totalorder %v2618, 1
      %vm2651 = vcmp.eq.s32.totalorder %v2619, 1
      %vm2652 = vcmp.eq.s32.totalorder %v2620, 1
      %vm2653 = vcmp.eq.s32.totalorder %v2621, 1
      %vm2654 = vcmp.eq.s32.totalorder %v2622, 1
      %v2655 = vsel %vm2623, %v668, 0.0
      %v2656 = vsel %vm2624, %v669, 0.0
      %v2657 = vsel %vm2625, %v670, 0.0
      %v2658 = vsel %vm2626, %v671, 0.0
      %v2659 = vsel %vm2627, %v672, 0.0
      %v2660 = vsel %vm2628, %v673, 0.0
      %v2661 = vsel %vm2629, %v674, 0.0
      %v2662 = vsel %vm2630, %v675, 0.0
      %v2663 = vsel %vm2631, %v676, 0.0
      %v2664 = vsel %vm2632, %v677, 0.0
      %v2665 = vsel %vm2633, %v678, 0.0
      %v2666 = vsel %vm2634, %v679, 0.0
      %v2667 = vsel %vm2635, %v680, 0.0
      %v2668 = vsel %vm2636, %v681, 0.0
      %v2669 = vsel %vm2637, %v682, 0.0
      %v2670 = vsel %vm2638, %v683, 0.0
      %v2671 = vsel %vm2639, %v684, 0.0
      %v2672 = vsel %vm2640, %v685, 0.0
      %v2673 = vsel %vm2641, %v686, 0.0
      %v2674 = vsel %vm2642, %v687, 0.0
      %v2675 = vsel %vm2643, %v688, 0.0
      %v2676 = vsel %vm2644, %v689, 0.0
      %v2677 = vsel %vm2645, %v690, 0.0
      %v2678 = vsel %vm2646, %v691, 0.0
      %v2679 = vsel %vm2647, %v692, 0.0
      %v2680 = vsel %vm2648, %v693, 0.0
      %v2681 = vsel %vm2649, %v694, 0.0
      %v2682 = vsel %vm2650, %v695, 0.0
      %v2683 = vsel %vm2651, %v696, 0.0
      %v2684 = vsel %vm2652, %v697, 0.0
      %v2685 = vsel %vm2653, %v666, 0.0
      %v2686 = vsel %vm2654, %v667, 0.0
      %v2687 = vpack.c.bf16 %v2656, %v2655
      %v2688 = vpack.c.bf16 %v2658, %v2657
      %v2689 = vpack.c.bf16 %v2660, %v2659
      %v2690 = vpack.c.bf16 %v2662, %v2661
      %v2691 = vpack.c.bf16 %v2664, %v2663
      %v2692 = vpack.c.bf16 %v2666, %v2665
      %v2693 = vpack.c.bf16 %v2668, %v2667
      %v2694 = vpack.c.bf16 %v2670, %v2669
      %v2695 = vpack.c.bf16 %v2672, %v2671
      %v2696 = vpack.c.bf16 %v2674, %v2673
      %v2697 = vpack.c.bf16 %v2676, %v2675
      %v2698 = vpack.c.bf16 %v2678, %v2677
      %v2699 = vpack.c.bf16 %v2680, %v2679
      %v2700 = vpack.c.bf16 %v2682, %v2681
      %v2701 = vpack.c.bf16 %v2684, %v2683
      %v2702 = vpack.c.bf16 %v2686, %v2685
      %v2703 = vld [vmem:[%s1 + $0x180] sm:$0xf]
      %v2704 = vld [vmem:[%s1 + $0x184] sm:$0xf]
      %v2705 = vld [vmem:[%s1 + $0x188] sm:$0xf]
      %v2706 = vld [vmem:[%s1 + $0x18c] sm:$0xf]
      %v2707 = vld [vmem:[%s1 + $0x190] sm:$0xf]
      %v2708 = vld [vmem:[%s1 + $0x194] sm:$0xf]
      %v2709 = vld [vmem:[%s1 + $0x198] sm:$0xf]
      %v2710 = vld [vmem:[%s1 + $0x19c] sm:$0xf]
      %v2711 = vld [vmem:[%s1 + $0x1a0] sm:$0xf]
      %v2712 = vld [vmem:[%s1 + $0x1a4] sm:$0xf]
      %v2713 = vld [vmem:[%s1 + $0x1a8] sm:$0xf]
      %v2714 = vld [vmem:[%s1 + $0x1ac] sm:$0xf]
      %v2715 = vld [vmem:[%s1 + $0x1b0] sm:$0xf]
      %v2716 = vld [vmem:[%s1 + $0x1b4] sm:$0xf]
      %v2717 = vld [vmem:[%s1 + $0x1b8] sm:$0xf]
      %v2718 = vld [vmem:[%s1 + $0x1bc] sm:$0xf]
      %v2719 = vld [vmem:[%s1 + $0x1c0] sm:$0xf]
      %v2720 = vld [vmem:[%s1 + $0x1c4] sm:$0xf]
      %v2721 = vld [vmem:[%s1 + $0x1c8] sm:$0xf]
      %v2722 = vld [vmem:[%s1 + $0x1cc] sm:$0xf]
      %v2723 = vld [vmem:[%s1 + $0x1d0] sm:$0xf]
      %v2724 = vld [vmem:[%s1 + $0x1d4] sm:$0xf]
      %v2725 = vld [vmem:[%s1 + $0x1d8] sm:$0xf]
      %v2726 = vld [vmem:[%s1 + $0x1dc] sm:$0xf]
      %v2727 = vld [vmem:[%s1 + $0x1e0] sm:$0xf]
      %v2728 = vld [vmem:[%s1 + $0x1e4] sm:$0xf]
      %v2729 = vld [vmem:[%s1 + $0x1e8] sm:$0xf]
      %v2730 = vld [vmem:[%s1 + $0x1ec] sm:$0xf]
      %v2731 = vld [vmem:[%s1 + $0x1f0] sm:$0xf]
      %v2732 = vld [vmem:[%s1 + $0x1f4] sm:$0xf]
      %v2733 = vld [vmem:[%s1 + $0x1f8] sm:$0xf]
      %v2734 = vld [vmem:[%s1 + $0x1fc] sm:$0xf]
      %v2767 = vunpack.c.l.b16 %v2703
      %v2768 = vunpack.c.l.b16 %v2704
      %v2769 = vunpack.c.l.b16 %v2705
      %v2770 = vunpack.c.l.b16 %v2706
      %v2771 = vunpack.c.l.b16 %v2707
      %v2772 = vunpack.c.l.b16 %v2708
      %v2773 = vunpack.c.l.b16 %v2709
      %v2774 = vunpack.c.l.b16 %v2710
      %v2775 = vunpack.c.l.b16 %v2711
      %v2776 = vunpack.c.l.b16 %v2712
      %v2777 = vunpack.c.l.b16 %v2713
      %v2778 = vunpack.c.l.b16 %v2714
      %v2779 = vunpack.c.l.b16 %v2715
      %v2780 = vunpack.c.l.b16 %v2716
      %v2781 = vunpack.c.l.b16 %v2717
      %v2782 = vunpack.c.l.b16 %v2718
      %v2783 = vunpack.c.l.b16 %v2719
      %v2784 = vunpack.c.l.b16 %v2720
      %v2785 = vunpack.c.l.b16 %v2721
      %v2786 = vunpack.c.l.b16 %v2722
      %v2787 = vunpack.c.l.b16 %v2723
      %v2788 = vunpack.c.l.b16 %v2724
      %v2789 = vunpack.c.l.b16 %v2725
      %v2790 = vunpack.c.l.b16 %v2726
      %v2791 = vunpack.c.l.b16 %v2727
      %v2792 = vunpack.c.l.b16 %v2728
      %v2793 = vunpack.c.l.b16 %v2729
      %v2794 = vunpack.c.l.b16 %v2730
      %v2795 = vunpack.c.l.b16 %v2731
      %v2796 = vunpack.c.l.b16 %v2732
      %v2797 = vunpack.c.l.b16 %v2733
      %v2798 = vunpack.c.l.b16 %v2734
      %v2799 = vpack.c.b16 %v2768, %v2767
      %v2800 = vpack.c.b16 %v2770, %v2769
      %v2801 = vpack.c.b16 %v2772, %v2771
      %v2802 = vpack.c.b16 %v2774, %v2773
      %v2803 = vpack.c.b16 %v2776, %v2775
      %v2804 = vpack.c.b16 %v2778, %v2777
      %v2805 = vpack.c.b16 %v2780, %v2779
      %v2806 = vpack.c.b16 %v2782, %v2781
      %v2807 = vpack.c.b16 %v2784, %v2783
      %v2808 = vpack.c.b16 %v2786, %v2785
      %v2809 = vpack.c.b16 %v2788, %v2787
      %v2810 = vpack.c.b16 %v2790, %v2789
      %v2811 = vpack.c.b16 %v2792, %v2791
      %v2812 = vpack.c.b16 %v2794, %v2793
      %v2813 = vpack.c.b16 %v2796, %v2795
      %v2814 = vpack.c.b16 %v2798, %v2797
      %2831 = vmatprep.subr.bf16.mxu0 0
      %2832 = vmatpush1.bf16.msra.mxu0 %v2806
      %2833 = vmatprep.subr.bf16.mxu0 0
      %2834 = vmatpush1.bf16.msra.mxu0 %v2805
      %2835 = vmatprep.subr.bf16.mxu0 0
      %2836 = vmatpush1.bf16.msra.mxu0 %v2804
      %2837 = vmatprep.subr.bf16.mxu0 0
      %2838 = vmatpush1.bf16.msra.mxu0 %v2803
      %2839 = vmatprep.subr.bf16.mxu0 0
      %2840 = vmatpush1.bf16.msra.mxu0 %v2802
      %2841 = vmatprep.subr.bf16.mxu0 0
      %2842 = vmatpush1.bf16.msra.mxu0 %v2801
      %2843 = vmatprep.subr.bf16.mxu0 0
      %2844 = vmatpush1.bf16.msra.mxu0 %v2800
      %2845 = vmatprep.subr.bf16.mxu0 0
      %2846 = vmatpush1.bf16.msra.mxu0 %v2799
      %2847 = vmatprep.subr.bf16.mxu0 0
      %2848 = vmatpush2.bf16.msra.mxu0 %v2814
      %2849 = vmatprep.subr.bf16.mxu0 0
      %2850 = vmatpush2.bf16.msra.mxu0 %v2813
      %2851 = vmatprep.subr.bf16.mxu0 0
      %2852 = vmatpush2.bf16.msra.mxu0 %v2812
      %2853 = vmatprep.subr.bf16.mxu0 0
      %2854 = vmatpush2.bf16.msra.mxu0 %v2811
      %2855 = vmatprep.subr.bf16.mxu0 0
      %2856 = vmatpush2.bf16.msra.mxu0 %v2810
      %2857 = vmatprep.subr.bf16.mxu0 0
      %2858 = vmatpush2.bf16.msra.mxu0 %v2809
      %2859 = vmatprep.subr.bf16.mxu0 0
      %2860 = vmatpush2.bf16.msra.mxu0 %v2808
      %2861 = vmatprep.subr.bf16.mxu0 0
      %2862 = vmatpush2.bf16.msra.mxu0 %v2807
      %2863 = vmatprep.mubr.bf16.mxu0 %v2687
      %2864 = vmatmul.mubr.bf16.gmra.mxu0 %v2575
      %v2865 = vpop.f32.mrf.mxu0
      %v2866 = vadd.f32 0.0, %v2865
      %v2867 = vpop.f32.mrf.mxu0
      %v2868 = vpop.f32.mrf.mxu0
      %v2869 = vadd.f32 0.0, %v2868
      %v2870 = vpop.f32.mrf.mxu0
      %2871 = vmatprep.mubr.bf16.mxu0 %v2688
      %2872 = vmatmul.mubr.bf16.gmra.mxu0 %v2576
      %v2873 = vpop.f32.mrf.mxu0
      %v2874 = vadd.f32 0.0, %v2873
      %v2875 = vpop.f32.mrf.mxu0
      %v2876 = vpop.f32.mrf.mxu0
      %v2877 = vadd.f32 0.0, %v2876
      %v2878 = vpop.f32.mrf.mxu0
      %2879 = vmatprep.mubr.bf16.mxu0 %v2689
      %2880 = vmatmul.mubr.bf16.gmra.mxu0 %v2577
      %v2881 = vpop.f32.mrf.mxu0
      %v2882 = vadd.f32 0.0, %v2881
      %v2883 = vpop.f32.mrf.mxu0
      %v2884 = vpop.f32.mrf.mxu0
      %v2885 = vadd.f32 0.0, %v2884
      %v2886 = vpop.f32.mrf.mxu0
      %2887 = vmatprep.mubr.bf16.mxu0 %v2690
      %2888 = vmatmul.mubr.bf16.gmra.mxu0 %v2578
      %v2889 = vpop.f32.mrf.mxu0
      %v2890 = vadd.f32 0.0, %v2889
      %v2891 = vpop.f32.mrf.mxu0
      %v2892 = vpop.f32.mrf.mxu0
      %v2893 = vadd.f32 0.0, %v2892
      %v2894 = vpop.f32.mrf.mxu0
      %2895 = vmatprep.mubr.bf16.mxu0 %v2691
      %2896 = vmatmul.mubr.bf16.gmra.mxu0 %v2579
      %v2897 = vpop.f32.mrf.mxu0
      %v2898 = vadd.f32 0.0, %v2897
      %v2899 = vpop.f32.mrf.mxu0
      %v2900 = vpop.f32.mrf.mxu0
      %v2901 = vadd.f32 0.0, %v2900
      %v2902 = vpop.f32.mrf.mxu0
      %2903 = vmatprep.mubr.bf16.mxu0 %v2692
      %2904 = vmatmul.mubr.bf16.gmra.mxu0 %v2580
      %v2905 = vpop.f32.mrf.mxu0
      %v2906 = vadd.f32 0.0, %v2905
      %v2907 = vpop.f32.mrf.mxu0
      %v2908 = vpop.f32.mrf.mxu0
      %v2909 = vadd.f32 0.0, %v2908
      %v2910 = vpop.f32.mrf.mxu0
      %2911 = vmatprep.mubr.bf16.mxu0 %v2693
      %2912 = vmatmul.mubr.bf16.gmra.mxu0 %v2581
      %v2913 = vpop.f32.mrf.mxu0
      %v2914 = vadd.f32 0.0, %v2913
      %v2915 = vpop.f32.mrf.mxu0
      %v2916 = vpop.f32.mrf.mxu0
      %v2917 = vadd.f32 0.0, %v2916
      %v2918 = vpop.f32.mrf.mxu0
      %2919 = vmatprep.mubr.bf16.mxu0 %v2694
      %2920 = vmatmul.mubr.bf16.gmra.mxu0 %v2582
      %v2921 = vpop.f32.mrf.mxu0
      %v2922 = vadd.f32 0.0, %v2921
      %v2923 = vpop.f32.mrf.mxu0
      %v2924 = vpop.f32.mrf.mxu0
      %v2925 = vadd.f32 0.0, %v2924
      %v2926 = vpop.f32.mrf.mxu0
      %2927 = vmatprep.mubr.bf16.mxu0 %v2695
      %2928 = vmatmul.mubr.bf16.gmra.mxu0 %v2583
      %v2929 = vpop.f32.mrf.mxu0
      %v2930 = vadd.f32 0.0, %v2929
      %v2931 = vpop.f32.mrf.mxu0
      %v2932 = vpop.f32.mrf.mxu0
      %v2933 = vadd.f32 0.0, %v2932
      %v2934 = vpop.f32.mrf.mxu0
      %2935 = vmatprep.mubr.bf16.mxu0 %v2696
      %2936 = vmatmul.mubr.bf16.gmra.mxu0 %v2584
      %v2937 = vpop.f32.mrf.mxu0
      %v2938 = vadd.f32 0.0, %v2937
      %v2939 = vpop.f32.mrf.mxu0
      %v2940 = vpop.f32.mrf.mxu0
      %v2941 = vadd.f32 0.0, %v2940
      %v2942 = vpop.f32.mrf.mxu0
      %2943 = vmatprep.mubr.bf16.mxu0 %v2697
      %2944 = vmatmul.mubr.bf16.gmra.mxu0 %v2585
      %v2945 = vpop.f32.mrf.mxu0
      %v2946 = vadd.f32 0.0, %v2945
      %v2947 = vpop.f32.mrf.mxu0
      %v2948 = vpop.f32.mrf.mxu0
      %v2949 = vadd.f32 0.0, %v2948
      %v2950 = vpop.f32.mrf.mxu0
      %2951 = vmatprep.mubr.bf16.mxu0 %v2698
      %2952 = vmatmul.mubr.bf16.gmra.mxu0 %v2586
      %v2953 = vpop.f32.mrf.mxu0
      %v2954 = vadd.f32 0.0, %v2953
      %v2955 = vpop.f32.mrf.mxu0
      %v2956 = vpop.f32.mrf.mxu0
      %v2957 = vadd.f32 0.0, %v2956
      %v2958 = vpop.f32.mrf.mxu0
      %2959 = vmatprep.mubr.bf16.mxu0 %v2699
      %2960 = vmatmul.mubr.bf16.gmra.mxu0 %v2587
      %v2961 = vpop.f32.mrf.mxu0
      %v2962 = vadd.f32 0.0, %v2961
      %v2963 = vpop.f32.mrf.mxu0
      %v2964 = vpop.f32.mrf.mxu0
      %v2965 = vadd.f32 0.0, %v2964
      %v2966 = vpop.f32.mrf.mxu0
      %2967 = vmatprep.mubr.bf16.mxu0 %v2700
      %2968 = vmatmul.mubr.bf16.gmra.mxu0 %v2588
      %v2969 = vpop.f32.mrf.mxu0
      %v2970 = vadd.f32 0.0, %v2969
      %v2971 = vpop.f32.mrf.mxu0
      %v2972 = vpop.f32.mrf.mxu0
      %v2973 = vadd.f32 0.0, %v2972
      %v2974 = vpop.f32.mrf.mxu0
      %2975 = vmatprep.mubr.bf16.mxu0 %v2701
      %2976 = vmatmul.mubr.bf16.gmra.mxu0 %v2589
      %v2977 = vpop.f32.mrf.mxu0
      %v2978 = vadd.f32 0.0, %v2977
      %v2979 = vpop.f32.mrf.mxu0
      %v2980 = vpop.f32.mrf.mxu0
      %v2981 = vadd.f32 0.0, %v2980
      %v2982 = vpop.f32.mrf.mxu0
      %2983 = vmatprep.mubr.bf16.mxu0 %v2702
      %2984 = vmatmul.mubr.bf16.gmra.mxu0 %v2590
      %v2985 = vpop.f32.mrf.mxu0
      %v2986 = vadd.f32 0.0, %v2985
      %v2987 = vpop.f32.mrf.mxu0
      %v2988 = vpop.f32.mrf.mxu0
      %v2989 = vadd.f32 0.0, %v2988
      %v2990 = vpop.f32.mrf.mxu0
      %2991 = vdwg.mxu0
      %v2992 = vadd.f32 %v2415, %v2866
      %v2993 = vadd.f32 %v2416, %v2869
      %v2994 = vadd.f32 %v2417, %v2874
      %v2995 = vadd.f32 %v2418, %v2877
      %v2996 = vadd.f32 %v2419, %v2882
      %v2997 = vadd.f32 %v2420, %v2885
      %v2998 = vadd.f32 %v2421, %v2890
      %v2999 = vadd.f32 %v2422, %v2893
      %v3000 = vadd.f32 %v2423, %v2898
      %v3001 = vadd.f32 %v2424, %v2901
      %v3002 = vadd.f32 %v2425, %v2906
      %v3003 = vadd.f32 %v2426, %v2909
      %v3004 = vadd.f32 %v2427, %v2914
      %v3005 = vadd.f32 %v2428, %v2917
      %v3006 = vadd.f32 %v2429, %v2922
      %v3007 = vadd.f32 %v2430, %v2925
      %v3008 = vadd.f32 %v2431, %v2930
      %v3009 = vadd.f32 %v2432, %v2933
      %v3010 = vadd.f32 %v2433, %v2938
      %v3011 = vadd.f32 %v2434, %v2941
      %v3012 = vadd.f32 %v2435, %v2946
      %v3013 = vadd.f32 %v2436, %v2949
      %v3014 = vadd.f32 %v2437, %v2954
      %v3015 = vadd.f32 %v2438, %v2957
      %v3016 = vadd.f32 %v2439, %v2962
      %v3017 = vadd.f32 %v2440, %v2965
      %v3018 = vadd.f32 %v2441, %v2970
      %v3019 = vadd.f32 %v2442, %v2973
      %v3020 = vadd.f32 %v2443, %v2978
      %v3021 = vadd.f32 %v2444, %v2981
      %v3022 = vadd.f32 %v2445, %v2986
      %v3023 = vadd.f32 %v2446, %v2989
      %vm3024 = vmand %vm538, %vm602
      %vm3025 = vmand %vm539, %vm603
      %vm3026 = vmand %vm540, %vm604
      %vm3027 = vmand %vm541, %vm605
      %vm3028 = vmand %vm542, %vm606
      %vm3029 = vmand %vm543, %vm607
      %vm3030 = vmand %vm544, %vm608
      %vm3031 = vmand %vm545, %vm609
      %vm3032 = vmand %vm546, %vm610
      %vm3033 = vmand %vm547, %vm611
      %vm3034 = vmand %vm548, %vm612
      %vm3035 = vmand %vm549, %vm613
      %vm3036 = vmand %vm550, %vm614
      %vm3037 = vmand %vm551, %vm615
      %vm3038 = vmand %vm552, %vm616
      %vm3039 = vmand %vm553, %vm617
      %vm3040 = vmand %vm554, %vm618
      %vm3041 = vmand %vm555, %vm619
      %vm3042 = vmand %vm556, %vm620
      %vm3043 = vmand %vm557, %vm621
      %vm3044 = vmand %vm558, %vm622
      %vm3045 = vmand %vm559, %vm623
      %vm3046 = vmand %vm560, %vm624
      %vm3047 = vmand %vm561, %vm625
      %vm3048 = vmand %vm562, %vm626
      %vm3049 = vmand %vm563, %vm627
      %vm3050 = vmand %vm564, %vm628
      %vm3051 = vmand %vm565, %vm629
      %vm3052 = vmand %vm566, %vm630
      %vm3053 = vmand %vm567, %vm631
      %vm3054 = vmand %vm568, %vm632
      %vm3055 = vmand %vm569, %vm633
      %v3056 = vsel %vm3024, 1, 0
      %v3057 = vsel %vm3025, 1, 0
      %v3058 = vsel %vm3026, 1, 0
      %v3059 = vsel %vm3027, 1, 0
      %v3060 = vsel %vm3028, 1, 0
      %v3061 = vsel %vm3029, 1, 0
      %v3062 = vsel %vm3030, 1, 0
      %v3063 = vsel %vm3031, 1, 0
      %v3064 = vsel %vm3032, 1, 0
      %v3065 = vsel %vm3033, 1, 0
      %v3066 = vsel %vm3034, 1, 0
      %v3067 = vsel %vm3035, 1, 0
      %v3068 = vsel %vm3036, 1, 0
      %v3069 = vsel %vm3037, 1, 0
      %v3070 = vsel %vm3038, 1, 0
      %v3071 = vsel %vm3039, 1, 0
      %v3072 = vsel %vm3040, 1, 0
      %v3073 = vsel %vm3041, 1, 0
      %v3074 = vsel %vm3042, 1, 0
      %v3075 = vsel %vm3043, 1, 0
      %v3076 = vsel %vm3044, 1, 0
      %v3077 = vsel %vm3045, 1, 0
      %v3078 = vsel %vm3046, 1, 0
      %v3079 = vsel %vm3047, 1, 0
      %v3080 = vsel %vm3048, 1, 0
      %v3081 = vsel %vm3049, 1, 0
      %v3082 = vsel %vm3050, 1, 0
      %v3083 = vsel %vm3051, 1, 0
      %v3084 = vsel %vm3052, 1, 0
      %v3085 = vsel %vm3053, 1, 0
      %v3086 = vsel %vm3054, 1, 0
      %v3087 = vsel %vm3055, 1, 0
      %vm3088 = vcmp.eq.s32.totalorder %v3056, 1
      %vm3089 = vcmp.eq.s32.totalorder %v3057, 1
      %vm3090 = vcmp.eq.s32.totalorder %v3058, 1
      %vm3091 = vcmp.eq.s32.totalorder %v3059, 1
      %vm3092 = vcmp.eq.s32.totalorder %v3060, 1
      %vm3093 = vcmp.eq.s32.totalorder %v3061, 1
      %vm3094 = vcmp.eq.s32.totalorder %v3062, 1
      %vm3095 = vcmp.eq.s32.totalorder %v3063, 1
      %vm3096 = vcmp.eq.s32.totalorder %v3064, 1
      %vm3097 = vcmp.eq.s32.totalorder %v3065, 1
      %vm3098 = vcmp.eq.s32.totalorder %v3066, 1
      %vm3099 = vcmp.eq.s32.totalorder %v3067, 1
      %vm3100 = vcmp.eq.s32.totalorder %v3068, 1
      %vm3101 = vcmp.eq.s32.totalorder %v3069, 1
      %vm3102 = vcmp.eq.s32.totalorder %v3070, 1
      %vm3103 = vcmp.eq.s32.totalorder %v3071, 1
      %vm3104 = vcmp.eq.s32.totalorder %v3072, 1
      %vm3105 = vcmp.eq.s32.totalorder %v3073, 1
      %vm3106 = vcmp.eq.s32.totalorder %v3074, 1
      %vm3107 = vcmp.eq.s32.totalorder %v3075, 1
      %vm3108 = vcmp.eq.s32.totalorder %v3076, 1
      %vm3109 = vcmp.eq.s32.totalorder %v3077, 1
      %vm3110 = vcmp.eq.s32.totalorder %v3078, 1
      %vm3111 = vcmp.eq.s32.totalorder %v3079, 1
      %vm3112 = vcmp.eq.s32.totalorder %v3080, 1
      %vm3113 = vcmp.eq.s32.totalorder %v3081, 1
      %vm3114 = vcmp.eq.s32.totalorder %v3082, 1
      %vm3115 = vcmp.eq.s32.totalorder %v3083, 1
      %vm3116 = vcmp.eq.s32.totalorder %v3084, 1
      %vm3117 = vcmp.eq.s32.totalorder %v3085, 1
      %vm3118 = vcmp.eq.s32.totalorder %v3086, 1
      %vm3119 = vcmp.eq.s32.totalorder %v3087, 1
      %v3120 = vsel %vm3088, %v1112, 0.0
      %v3121 = vsel %vm3089, %v1111, 0.0
      %v3122 = vsel %vm3090, %v1110, 0.0
      %v3123 = vsel %vm3091, %v1109, 0.0
      %v3124 = vsel %vm3092, %v1108, 0.0
      %v3125 = vsel %vm3093, %v1107, 0.0
      %v3126 = vsel %vm3094, %v1106, 0.0
      %v3127 = vsel %vm3095, %v1105, 0.0
      %v3128 = vsel %vm3096, %v1104, 0.0
      %v3129 = vsel %vm3097, %v1103, 0.0
      %v3130 = vsel %vm3098, %v1102, 0.0
      %v3131 = vsel %vm3099, %v1101, 0.0
      %v3132 = vsel %vm3100, %v1100, 0.0
      %v3133 = vsel %vm3101, %v1099, 0.0
      %v3134 = vsel %vm3102, %v1098, 0.0
      %v3135 = vsel %vm3103, %v1097, 0.0
      %v3136 = vsel %vm3104, %v1096, 0.0
      %v3137 = vsel %vm3105, %v1095, 0.0
      %v3138 = vsel %vm3106, %v1094, 0.0
      %v3139 = vsel %vm3107, %v1093, 0.0
      %v3140 = vsel %vm3108, %v1092, 0.0
      %v3141 = vsel %vm3109, %v1091, 0.0
      %v3142 = vsel %vm3110, %v1090, 0.0
      %v3143 = vsel %vm3111, %v1089, 0.0
      %v3144 = vsel %vm3112, %v1088, 0.0
      %v3145 = vsel %vm3113, %v1087, 0.0
      %v3146 = vsel %vm3114, %v1086, 0.0
      %v3147 = vsel %vm3115, %v1085, 0.0
      %v3148 = vsel %vm3116, %v1084, 0.0
      %v3149 = vsel %vm3117, %v1115, 0.0
      %v3150 = vsel %vm3118, %v1114, 0.0
      %v3151 = vsel %vm3119, %v1113, 0.0
      %v3152 = vpack.c.bf16 %v3121, %v3120
      %v3153 = vpack.c.bf16 %v3123, %v3122
      %v3154 = vpack.c.bf16 %v3125, %v3124
      %v3155 = vpack.c.bf16 %v3127, %v3126
      %v3156 = vpack.c.bf16 %v3129, %v3128
      %v3157 = vpack.c.bf16 %v3131, %v3130
      %v3158 = vpack.c.bf16 %v3133, %v3132
      %v3159 = vpack.c.bf16 %v3135, %v3134
      %v3160 = vpack.c.bf16 %v3137, %v3136
      %v3161 = vpack.c.bf16 %v3139, %v3138
      %v3162 = vpack.c.bf16 %v3141, %v3140
      %v3163 = vpack.c.bf16 %v3143, %v3142
      %v3164 = vpack.c.bf16 %v3145, %v3144
      %v3165 = vpack.c.bf16 %v3147, %v3146
      %v3166 = vpack.c.bf16 %v3149, %v3148
      %v3167 = vpack.c.bf16 %v3151, %v3150
      %v3168 = vld [vmem:[%s1 + $0x200] sm:$0xf]
      %v3169 = vld [vmem:[%s1 + $0x204] sm:$0xf]
      %v3170 = vld [vmem:[%s1 + $0x208] sm:$0xf]
      %v3171 = vld [vmem:[%s1 + $0x20c] sm:$0xf]
      %v3172 = vld [vmem:[%s1 + $0x210] sm:$0xf]
      %v3173 = vld [vmem:[%s1 + $0x214] sm:$0xf]
      %v3174 = vld [vmem:[%s1 + $0x218] sm:$0xf]
      %v3175 = vld [vmem:[%s1 + $0x21c] sm:$0xf]
      %v3176 = vld [vmem:[%s1 + $0x220] sm:$0xf]
      %v3177 = vld [vmem:[%s1 + $0x224] sm:$0xf]
      %v3178 = vld [vmem:[%s1 + $0x228] sm:$0xf]
      %v3179 = vld [vmem:[%s1 + $0x22c] sm:$0xf]
      %v3180 = vld [vmem:[%s1 + $0x230] sm:$0xf]
      %v3181 = vld [vmem:[%s1 + $0x234] sm:$0xf]
      %v3182 = vld [vmem:[%s1 + $0x238] sm:$0xf]
      %v3183 = vld [vmem:[%s1 + $0x23c] sm:$0xf]
      %v3200 = vunpack.c.l.b16 %v3168
      %v3201 = vunpack.c.l.b16 %v3169
      %v3202 = vunpack.c.l.b16 %v3170
      %v3203 = vunpack.c.l.b16 %v3171
      %v3204 = vunpack.c.l.b16 %v3172
      %v3205 = vunpack.c.l.b16 %v3173
      %v3206 = vunpack.c.l.b16 %v3174
      %v3207 = vunpack.c.l.b16 %v3175
      %v3208 = vunpack.c.l.b16 %v3176
      %v3209 = vunpack.c.l.b16 %v3177
      %v3210 = vunpack.c.l.b16 %v3178
      %v3211 = vunpack.c.l.b16 %v3179
      %v3212 = vunpack.c.l.b16 %v3180
      %v3213 = vunpack.c.l.b16 %v3181
      %v3214 = vunpack.c.l.b16 %v3182
      %v3215 = vunpack.c.l.b16 %v3183
      %v3216 = vpack.c.b16 %v3201, %v3200
      %v3217 = vpack.c.b16 %v3203, %v3202
      %v3218 = vpack.c.b16 %v3205, %v3204
      %v3219 = vpack.c.b16 %v3207, %v3206
      %v3220 = vpack.c.b16 %v3209, %v3208
      %v3221 = vpack.c.b16 %v3211, %v3210
      %v3222 = vpack.c.b16 %v3213, %v3212
      %v3223 = vpack.c.b16 %v3215, %v3214
      %3232 = vmatprep.subr.bf16.mxu0 0
      %3233 = vmatpush1.bf16.msra.mxu0 %v3223
      %3234 = vmatprep.subr.bf16.mxu0 0
      %3235 = vmatpush1.bf16.msra.mxu0 %v3222
      %3236 = vmatprep.subr.bf16.mxu0 0
      %3237 = vmatpush1.bf16.msra.mxu0 %v3221
      %3238 = vmatprep.subr.bf16.mxu0 0
      %3239 = vmatpush1.bf16.msra.mxu0 %v3220
      %3240 = vmatprep.subr.bf16.mxu0 0
      %3241 = vmatpush1.bf16.msra.mxu0 %v3219
      %3242 = vmatprep.subr.bf16.mxu0 0
      %3243 = vmatpush1.bf16.msra.mxu0 %v3218
      %3244 = vmatprep.subr.bf16.mxu0 0
      %3245 = vmatpush1.bf16.msra.mxu0 %v3217
      %3246 = vmatprep.subr.bf16.mxu0 0
      %3247 = vmatpush1.bf16.msra.mxu0 %v3216
      %3248 = vmatprep.subr.bf16.mxu0 0
      %3249 = vmatpush2.bf16.msra.mxu0 0
      %3250 = vmatprep.subr.bf16.mxu0 0
      %3251 = vmatpush2.bf16.msra.mxu0 0
      %3252 = vmatprep.subr.bf16.mxu0 0
      %3253 = vmatpush2.bf16.msra.mxu0 0
      %3254 = vmatprep.subr.bf16.mxu0 0
      %3255 = vmatpush2.bf16.msra.mxu0 0
      %3256 = vmatprep.subr.bf16.mxu0 0
      %3257 = vmatpush2.bf16.msra.mxu0 0
      %3258 = vmatprep.subr.bf16.mxu0 0
      %3259 = vmatpush2.bf16.msra.mxu0 0
      %3260 = vmatprep.subr.bf16.mxu0 0
      %3261 = vmatpush2.bf16.msra.mxu0 0
      %3262 = vmatprep.subr.bf16.mxu0 0
      %3263 = vmatpush2.bf16.msra.mxu0 0
      %3264 = vmatprep.mubr.bf16.mxu0 0
      %3265 = vmatmul.mubr.bf16.gmra.mxu0 %v3152
      %v3266 = vpop.f32.mrf.mxu0
      %v3267 = vadd.f32 0.0, %v3266
      %v3268 = vpop.f32.mrf.mxu0
      %v3269 = vpop.f32.mrf.mxu0
      %v3270 = vadd.f32 0.0, %v3269
      %v3271 = vpop.f32.mrf.mxu0
      %3272 = vmatprep.mubr.bf16.mxu0 0
      %3273 = vmatmul.mubr.bf16.gmra.mxu0 %v3153
      %v3274 = vpop.f32.mrf.mxu0
      %v3275 = vadd.f32 0.0, %v3274
      %v3276 = vpop.f32.mrf.mxu0
      %v3277 = vpop.f32.mrf.mxu0
      %v3278 = vadd.f32 0.0, %v3277
      %v3279 = vpop.f32.mrf.mxu0
      %3280 = vmatprep.mubr.bf16.mxu0 0
      %3281 = vmatmul.mubr.bf16.gmra.mxu0 %v3154
      %v3282 = vpop.f32.mrf.mxu0
      %v3283 = vadd.f32 0.0, %v3282
      %v3284 = vpop.f32.mrf.mxu0
      %v3285 = vpop.f32.mrf.mxu0
      %v3286 = vadd.f32 0.0, %v3285
      %v3287 = vpop.f32.mrf.mxu0
      %3288 = vmatprep.mubr.bf16.mxu0 0
      %3289 = vmatmul.mubr.bf16.gmra.mxu0 %v3155
      %v3290 = vpop.f32.mrf.mxu0
      %v3291 = vadd.f32 0.0, %v3290
      %v3292 = vpop.f32.mrf.mxu0
      %v3293 = vpop.f32.mrf.mxu0
      %v3294 = vadd.f32 0.0, %v3293
      %v3295 = vpop.f32.mrf.mxu0
      %3296 = vmatprep.mubr.bf16.mxu0 0
      %3297 = vmatmul.mubr.bf16.gmra.mxu0 %v3156
      %v3298 = vpop.f32.mrf.mxu0
      %v3299 = vadd.f32 0.0, %v3298
      %v3300 = vpop.f32.mrf.mxu0
      %v3301 = vpop.f32.mrf.mxu0
      %v3302 = vadd.f32 0.0, %v3301
      %v3303 = vpop.f32.mrf.mxu0
      %3304 = vmatprep.mubr.bf16.mxu0 0
      %3305 = vmatmul.mubr.bf16.gmra.mxu0 %v3157
      %v3306 = vpop.f32.mrf.mxu0
      %v3307 = vadd.f32 0.0, %v3306
      %v3308 = vpop.f32.mrf.mxu0
      %v3309 = vpop.f32.mrf.mxu0
      %v3310 = vadd.f32 0.0, %v3309
      %v3311 = vpop.f32.mrf.mxu0
      %3312 = vmatprep.mubr.bf16.mxu0 0
      %3313 = vmatmul.mubr.bf16.gmra.mxu0 %v3158
      %v3314 = vpop.f32.mrf.mxu0
      %v3315 = vadd.f32 0.0, %v3314
      %v3316 = vpop.f32.mrf.mxu0
      %v3317 = vpop.f32.mrf.mxu0
      %v3318 = vadd.f32 0.0, %v3317
      %v3319 = vpop.f32.mrf.mxu0
      %3320 = vmatprep.mubr.bf16.mxu0 0
      %3321 = vmatmul.mubr.bf16.gmra.mxu0 %v3159
      %v3322 = vpop.f32.mrf.mxu0
      %v3323 = vadd.f32 0.0, %v3322
      %v3324 = vpop.f32.mrf.mxu0
      %v3325 = vpop.f32.mrf.mxu0
      %v3326 = vadd.f32 0.0, %v3325
      %v3327 = vpop.f32.mrf.mxu0
      %3328 = vmatprep.mubr.bf16.mxu0 0
      %3329 = vmatmul.mubr.bf16.gmra.mxu0 %v3160
      %v3330 = vpop.f32.mrf.mxu0
      %v3331 = vadd.f32 0.0, %v3330
      %v3332 = vpop.f32.mrf.mxu0
      %v3333 = vpop.f32.mrf.mxu0
      %v3334 = vadd.f32 0.0, %v3333
      %v3335 = vpop.f32.mrf.mxu0
      %3336 = vmatprep.mubr.bf16.mxu0 0
      %3337 = vmatmul.mubr.bf16.gmra.mxu0 %v3161
      %v3338 = vpop.f32.mrf.mxu0
      %v3339 = vadd.f32 0.0, %v3338
      %v3340 = vpop.f32.mrf.mxu0
      %v3341 = vpop.f32.mrf.mxu0
      %v3342 = vadd.f32 0.0, %v3341
      %v3343 = vpop.f32.mrf.mxu0
      %3344 = vmatprep.mubr.bf16.mxu0 0
      %3345 = vmatmul.mubr.bf16.gmra.mxu0 %v3162
      %v3346 = vpop.f32.mrf.mxu0
      %v3347 = vadd.f32 0.0, %v3346
      %v3348 = vpop.f32.mrf.mxu0
      %v3349 = vpop.f32.mrf.mxu0
      %v3350 = vadd.f32 0.0, %v3349
      %v3351 = vpop.f32.mrf.mxu0
      %3352 = vmatprep.mubr.bf16.mxu0 0
      %3353 = vmatmul.mubr.bf16.gmra.mxu0 %v3163
      %v3354 = vpop.f32.mrf.mxu0
      %v3355 = vadd.f32 0.0, %v3354
      %v3356 = vpop.f32.mrf.mxu0
      %v3357 = vpop.f32.mrf.mxu0
      %v3358 = vadd.f32 0.0, %v3357
      %v3359 = vpop.f32.mrf.mxu0
      %3360 = vmatprep.mubr.bf16.mxu0 0
      %3361 = vmatmul.mubr.bf16.gmra.mxu0 %v3164
      %v3362 = vpop.f32.mrf.mxu0
      %v3363 = vadd.f32 0.0, %v3362
      %v3364 = vpop.f32.mrf.mxu0
      %v3365 = vpop.f32.mrf.mxu0
      %v3366 = vadd.f32 0.0, %v3365
      %v3367 = vpop.f32.mrf.mxu0
      %3368 = vmatprep.mubr.bf16.mxu0 0
      %3369 = vmatmul.mubr.bf16.gmra.mxu0 %v3165
      %v3370 = vpop.f32.mrf.mxu0
      %v3371 = vadd.f32 0.0, %v3370
      %v3372 = vpop.f32.mrf.mxu0
      %v3373 = vpop.f32.mrf.mxu0
      %v3374 = vadd.f32 0.0, %v3373
      %v3375 = vpop.f32.mrf.mxu0
      %3376 = vmatprep.mubr.bf16.mxu0 0
      %3377 = vmatmul.mubr.bf16.gmra.mxu0 %v3166
      %v3378 = vpop.f32.mrf.mxu0
      %v3379 = vadd.f32 0.0, %v3378
      %v3380 = vpop.f32.mrf.mxu0
      %v3381 = vpop.f32.mrf.mxu0
      %v3382 = vadd.f32 0.0, %v3381
      %v3383 = vpop.f32.mrf.mxu0
      %3384 = vmatprep.mubr.bf16.mxu0 0
      %3385 = vmatmul.mubr.bf16.gmra.mxu0 %v3167
      %v3386 = vpop.f32.mrf.mxu0
      %v3387 = vadd.f32 0.0, %v3386
      %v3388 = vpop.f32.mrf.mxu0
      %v3389 = vpop.f32.mrf.mxu0
      %v3390 = vadd.f32 0.0, %v3389
      %v3391 = vpop.f32.mrf.mxu0
      %3392 = vdwg.mxu0
      %v3393 = vadd.f32 %v2992, %v3267
      %v3394 = vadd.f32 %v2993, %v3270
      %v3395 = vadd.f32 %v2994, %v3275
      %v3396 = vadd.f32 %v2995, %v3278
      %v3397 = vadd.f32 %v2996, %v3283
      %v3398 = vadd.f32 %v2997, %v3286
      %v3399 = vadd.f32 %v2998, %v3291
      %v3400 = vadd.f32 %v2999, %v3294
      %v3401 = vadd.f32 %v3000, %v3299
      %v3402 = vadd.f32 %v3001, %v3302
      %v3403 = vadd.f32 %v3002, %v3307
      %v3404 = vadd.f32 %v3003, %v3310
      %v3405 = vadd.f32 %v3004, %v3315
      %v3406 = vadd.f32 %v3005, %v3318
      %v3407 = vadd.f32 %v3006, %v3323
      %v3408 = vadd.f32 %v3007, %v3326
      %v3409 = vadd.f32 %v3008, %v3331
      %v3410 = vadd.f32 %v3009, %v3334
      %v3411 = vadd.f32 %v3010, %v3339
      %v3412 = vadd.f32 %v3011, %v3342
      %v3413 = vadd.f32 %v3012, %v3347
      %v3414 = vadd.f32 %v3013, %v3350
      %v3415 = vadd.f32 %v3014, %v3355
      %v3416 = vadd.f32 %v3015, %v3358
      %v3417 = vadd.f32 %v3016, %v3363
      %v3418 = vadd.f32 %v3017, %v3366
      %v3419 = vadd.f32 %v3018, %v3371
      %v3420 = vadd.f32 %v3019, %v3374
      %v3421 = vadd.f32 %v3020, %v3379
      %v3422 = vadd.f32 %v3021, %v3382
      %v3423 = vadd.f32 %v3022, %v3387
      %v3424 = vadd.f32 %v3023, %v3390
      %v3425 = vld [vmem:[%s2] sm:$0x1]
      %v3427 = vlaneseq
      %v3428 = vshrl.u32 %v3427, 7
      %v3429 = vsub.s32 0, %v3428
      %v3430 = vrot.slane %v3425, %v3429
      %v3432 = vmul.f32 %v3393, %v3430
      %v3433 = vmul.f32 %v3394, %v3430
      %v3434 = vmul.f32 %v3395, %v3430
      %v3435 = vmul.f32 %v3396, %v3430
      %v3436 = vmul.f32 %v3397, %v3430
      %v3437 = vmul.f32 %v3398, %v3430
      %v3438 = vmul.f32 %v3399, %v3430
      %v3439 = vmul.f32 %v3400, %v3430
      %v3440 = vmul.f32 %v3401, %v3430
      %v3441 = vmul.f32 %v3402, %v3430
      %v3442 = vmul.f32 %v3403, %v3430
      %v3443 = vmul.f32 %v3404, %v3430
      %v3444 = vmul.f32 %v3405, %v3430
      %v3445 = vmul.f32 %v3406, %v3430
      %v3446 = vmul.f32 %v3407, %v3430
      %v3447 = vmul.f32 %v3408, %v3430
      %v3448 = vmul.f32 %v3409, %v3430
      %v3449 = vmul.f32 %v3410, %v3430
      %v3450 = vmul.f32 %v3411, %v3430
      %v3451 = vmul.f32 %v3412, %v3430
      %v3452 = vmul.f32 %v3413, %v3430
      %v3453 = vmul.f32 %v3414, %v3430
      %v3454 = vmul.f32 %v3415, %v3430
      %v3455 = vmul.f32 %v3416, %v3430
      %v3456 = vmul.f32 %v3417, %v3430
      %v3457 = vmul.f32 %v3418, %v3430
      %v3458 = vmul.f32 %v3419, %v3430
      %v3459 = vmul.f32 %v3420, %v3430
      %v3460 = vmul.f32 %v3421, %v3430
      %v3461 = vmul.f32 %v3422, %v3430
      %v3462 = vmul.f32 %v3423, %v3430
      %v3463 = vmul.f32 %v3424, %v3430
      %v3464 = vld [vmem:[%s3] sm:$0x1]
      %v3466 = vlaneseq
      %v3467 = vshrl.u32 %v3466, 7
      %v3468 = vsub.s32 0, %v3467
      %v3469 = vrot.slane %v3464, %v3468
      %v3471 = vadd.f32 %v3432, %v3469
      %v3472 = vadd.f32 %v3433, %v3469
      %v3473 = vadd.f32 %v3434, %v3469
      %v3474 = vadd.f32 %v3435, %v3469
      %v3475 = vadd.f32 %v3436, %v3469
      %v3476 = vadd.f32 %v3437, %v3469
      %v3477 = vadd.f32 %v3438, %v3469
      %v3478 = vadd.f32 %v3439, %v3469
      %v3479 = vadd.f32 %v3440, %v3469
      %v3480 = vadd.f32 %v3441, %v3469
      %v3481 = vadd.f32 %v3442, %v3469
      %v3482 = vadd.f32 %v3443, %v3469
      %v3483 = vadd.f32 %v3444, %v3469
      %v3484 = vadd.f32 %v3445, %v3469
      %v3485 = vadd.f32 %v3446, %v3469
      %v3486 = vadd.f32 %v3447, %v3469
      %v3487 = vadd.f32 %v3448, %v3469
      %v3488 = vadd.f32 %v3449, %v3469
      %v3489 = vadd.f32 %v3450, %v3469
      %v3490 = vadd.f32 %v3451, %v3469
      %v3491 = vadd.f32 %v3452, %v3469
      %v3492 = vadd.f32 %v3453, %v3469
      %v3493 = vadd.f32 %v3454, %v3469
      %v3494 = vadd.f32 %v3455, %v3469
      %v3495 = vadd.f32 %v3456, %v3469
      %v3496 = vadd.f32 %v3457, %v3469
      %v3497 = vadd.f32 %v3458, %v3469
      %v3498 = vadd.f32 %v3459, %v3469
      %v3499 = vadd.f32 %v3460, %v3469
      %v3500 = vadd.f32 %v3461, %v3469
      %v3501 = vadd.f32 %v3462, %v3469
      %v3502 = vadd.f32 %v3463, %v3469
      %v3503 = vmax.f32 %v3471, 0.0
      %v3504 = vmax.f32 %v3472, 0.0
      %v3505 = vmax.f32 %v3473, 0.0
      %v3506 = vmax.f32 %v3474, 0.0
      %v3507 = vmax.f32 %v3475, 0.0
      %v3508 = vmax.f32 %v3476, 0.0
      %v3509 = vmax.f32 %v3477, 0.0
      %v3510 = vmax.f32 %v3478, 0.0
      %v3511 = vmax.f32 %v3479, 0.0
      %v3512 = vmax.f32 %v3480, 0.0
      %v3513 = vmax.f32 %v3481, 0.0
      %v3514 = vmax.f32 %v3482, 0.0
      %v3515 = vmax.f32 %v3483, 0.0
      %v3516 = vmax.f32 %v3484, 0.0
      %v3517 = vmax.f32 %v3485, 0.0
      %v3518 = vmax.f32 %v3486, 0.0
      %v3519 = vmax.f32 %v3487, 0.0
      %v3520 = vmax.f32 %v3488, 0.0
      %v3521 = vmax.f32 %v3489, 0.0
      %v3522 = vmax.f32 %v3490, 0.0
      %v3523 = vmax.f32 %v3491, 0.0
      %v3524 = vmax.f32 %v3492, 0.0
      %v3525 = vmax.f32 %v3493, 0.0
      %v3526 = vmax.f32 %v3494, 0.0
      %v3527 = vmax.f32 %v3495, 0.0
      %v3528 = vmax.f32 %v3496, 0.0
      %v3529 = vmax.f32 %v3497, 0.0
      %v3530 = vmax.f32 %v3498, 0.0
      %v3531 = vmax.f32 %v3499, 0.0
      %v3532 = vmax.f32 %v3500, 0.0
      %v3533 = vmax.f32 %v3501, 0.0
      %v3534 = vmax.f32 %v3502, 0.0
      %v3535 = vrot.slane %v3503, 7
      %v3536 = vrot.slane %v3504, 7
      %v3537 = vrot.slane %v3505, 7
      %v3538 = vrot.slane %v3506, 7
      %v3539 = vrot.slane %v3507, 7
      %v3540 = vrot.slane %v3508, 7
      %v3541 = vrot.slane %v3509, 7
      %v3542 = vrot.slane %v3510, 7
      %v3543 = vrot.slane %v3511, 7
      %v3544 = vrot.slane %v3512, 7
      %v3545 = vrot.slane %v3513, 7
      %v3546 = vrot.slane %v3514, 7
      %v3547 = vrot.slane %v3515, 7
      %v3548 = vrot.slane %v3516, 7
      %v3549 = vrot.slane %v3517, 7
      %v3550 = vrot.slane %v3518, 7
      %v3551 = vrot.slane %v3519, 7
      %v3552 = vrot.slane %v3520, 7
      %v3553 = vrot.slane %v3521, 7
      %v3554 = vrot.slane %v3522, 7
      %v3555 = vrot.slane %v3523, 7
      %v3556 = vrot.slane %v3524, 7
      %v3557 = vrot.slane %v3525, 7
      %v3558 = vrot.slane %v3526, 7
      %v3559 = vrot.slane %v3527, 7
      %v3560 = vrot.slane %v3528, 7
      %v3561 = vrot.slane %v3529, 7
      %v3562 = vrot.slane %v3530, 7
      %v3563 = vrot.slane %v3531, 7
      %v3564 = vrot.slane %v3532, 7
      %v3565 = vrot.slane %v3533, 7
      %v3566 = vrot.slane %v3534, 7
      %v3567 = vsel %vm730, %v3565, %v3566
      %v3568 = vsel %vm730, %v3564, %v3565
      %v3569 = vsel %vm730, %v3563, %v3564
      %v3570 = vsel %vm730, %v3562, %v3563
      %v3571 = vsel %vm730, %v3561, %v3562
      %v3572 = vsel %vm730, %v3560, %v3561
      %v3573 = vsel %vm730, %v3559, %v3560
      %v3574 = vsel %vm730, %v3558, %v3559
      %v3575 = vsel %vm730, %v3557, %v3558
      %v3576 = vsel %vm730, %v3556, %v3557
      %v3577 = vsel %vm730, %v3555, %v3556
      %v3578 = vsel %vm730, %v3554, %v3555
      %v3579 = vsel %vm730, %v3553, %v3554
      %v3580 = vsel %vm730, %v3552, %v3553
      %v3581 = vsel %vm730, %v3551, %v3552
      %v3582 = vsel %vm730, %v3550, %v3551
      %v3583 = vsel %vm730, %v3549, %v3550
      %v3584 = vsel %vm730, %v3548, %v3549
      %v3585 = vsel %vm730, %v3547, %v3548
      %v3586 = vsel %vm730, %v3546, %v3547
      %v3587 = vsel %vm730, %v3545, %v3546
      %v3588 = vsel %vm730, %v3544, %v3545
      %v3589 = vsel %vm730, %v3543, %v3544
      %v3590 = vsel %vm730, %v3542, %v3543
      %v3591 = vsel %vm730, %v3541, %v3542
      %v3592 = vsel %vm730, %v3540, %v3541
      %v3593 = vsel %vm730, %v3539, %v3540
      %v3594 = vsel %vm730, %v3538, %v3539
      %v3595 = vsel %vm730, %v3537, %v3538
      %v3596 = vsel %vm730, %v3536, %v3537
      %v3597 = vsel %vm730, %v3535, %v3536
      %v3598 = vsel %vm730, %v3566, %v3535
      %v3599 = vsel %vm827, %v3568, 0.0
      %v3600 = vsel %vm828, %v3567, 0.0
      %v3601 = vsel %vm829, %v3598, 0.0
      %v3602 = vsel %vm830, %v3597, 0.0
      %v3603 = vsel %vm831, %v3596, 0.0
      %v3604 = vsel %vm832, %v3595, 0.0
      %v3605 = vsel %vm833, %v3594, 0.0
      %v3606 = vsel %vm834, %v3593, 0.0
      %v3607 = vsel %vm835, %v3592, 0.0
      %v3608 = vsel %vm836, %v3591, 0.0
      %v3609 = vsel %vm837, %v3590, 0.0
      %v3610 = vsel %vm838, %v3589, 0.0
      %v3611 = vsel %vm839, %v3588, 0.0
      %v3612 = vsel %vm840, %v3587, 0.0
      %v3613 = vsel %vm841, %v3586, 0.0
      %v3614 = vsel %vm842, %v3585, 0.0
      %v3615 = vsel %vm843, %v3584, 0.0
      %v3616 = vsel %vm844, %v3583, 0.0
      %v3617 = vsel %vm845, %v3582, 0.0
      %v3618 = vsel %vm846, %v3581, 0.0
      %v3619 = vsel %vm847, %v3580, 0.0
      %v3620 = vsel %vm848, %v3579, 0.0
      %v3621 = vsel %vm849, %v3578, 0.0
      %v3622 = vsel %vm850, %v3577, 0.0
      %v3623 = vsel %vm851, %v3576, 0.0
      %v3624 = vsel %vm852, %v3575, 0.0
      %v3625 = vsel %vm853, %v3574, 0.0
      %v3626 = vsel %vm854, %v3573, 0.0
      %v3627 = vsel %vm855, %v3572, 0.0
      %v3628 = vsel %vm856, %v3571, 0.0
      %v3629 = vsel %vm857, %v3570, 0.0
      %v3630 = vsel %vm858, %v3569, 0.0
      %v3631 = vpack.c.bf16 %v3600, %v3599
      %v3632 = vpack.c.bf16 %v3602, %v3601
      %v3633 = vpack.c.bf16 %v3604, %v3603
      %v3634 = vpack.c.bf16 %v3606, %v3605
      %v3635 = vpack.c.bf16 %v3608, %v3607
      %v3636 = vpack.c.bf16 %v3610, %v3609
      %v3637 = vpack.c.bf16 %v3612, %v3611
      %v3638 = vpack.c.bf16 %v3614, %v3613
      %v3639 = vpack.c.bf16 %v3616, %v3615
      %v3640 = vpack.c.bf16 %v3618, %v3617
      %v3641 = vpack.c.bf16 %v3620, %v3619
      %v3642 = vpack.c.bf16 %v3622, %v3621
      %v3643 = vpack.c.bf16 %v3624, %v3623
      %v3644 = vpack.c.bf16 %v3626, %v3625
      %v3645 = vpack.c.bf16 %v3628, %v3627
      %v3646 = vpack.c.bf16 %v3630, %v3629
      %v3647 = vsel %vm939, %v3533, 0.0
      %v3648 = vsel %vm940, %v3534, 0.0
      %v3649 = vsel %vm941, %v3503, 0.0
      %v3650 = vsel %vm942, %v3504, 0.0
      %v3651 = vsel %vm943, %v3505, 0.0
      %v3652 = vsel %vm944, %v3506, 0.0
      %v3653 = vsel %vm945, %v3507, 0.0
      %v3654 = vsel %vm946, %v3508, 0.0
      %v3655 = vsel %vm947, %v3509, 0.0
      %v3656 = vsel %vm948, %v3510, 0.0
      %v3657 = vsel %vm949, %v3511, 0.0
      %v3658 = vsel %vm950, %v3512, 0.0
      %v3659 = vsel %vm951, %v3513, 0.0
      %v3660 = vsel %vm952, %v3514, 0.0
      %v3661 = vsel %vm953, %v3515, 0.0
      %v3662 = vsel %vm954, %v3516, 0.0
      %v3663 = vsel %vm955, %v3517, 0.0
      %v3664 = vsel %vm956, %v3518, 0.0
      %v3665 = vsel %vm957, %v3519, 0.0
      %v3666 = vsel %vm958, %v3520, 0.0
      %v3667 = vsel %vm959, %v3521, 0.0
      %v3668 = vsel %vm960, %v3522, 0.0
      %v3669 = vsel %vm961, %v3523, 0.0
      %v3670 = vsel %vm962, %v3524, 0.0
      %v3671 = vsel %vm963, %v3525, 0.0
      %v3672 = vsel %vm964, %v3526, 0.0
      %v3673 = vsel %vm965, %v3527, 0.0
      %v3674 = vsel %vm966, %v3528, 0.0
      %v3675 = vsel %vm967, %v3529, 0.0
      %v3676 = vsel %vm968, %v3530, 0.0
      %v3677 = vsel %vm969, %v3531, 0.0
      %v3678 = vsel %vm970, %v3532, 0.0
      %v3679 = vpack.c.bf16 %v3648, %v3647
      %v3680 = vpack.c.bf16 %v3650, %v3649
      %v3681 = vpack.c.bf16 %v3652, %v3651
      %v3682 = vpack.c.bf16 %v3654, %v3653
      %v3683 = vpack.c.bf16 %v3656, %v3655
      %v3684 = vpack.c.bf16 %v3658, %v3657
      %v3685 = vpack.c.bf16 %v3660, %v3659
      %v3686 = vpack.c.bf16 %v3662, %v3661
      %v3687 = vpack.c.bf16 %v3664, %v3663
      %v3688 = vpack.c.bf16 %v3666, %v3665
      %v3689 = vpack.c.bf16 %v3668, %v3667
      %v3690 = vpack.c.bf16 %v3670, %v3669
      %v3691 = vpack.c.bf16 %v3672, %v3671
      %v3692 = vpack.c.bf16 %v3674, %v3673
      %v3693 = vpack.c.bf16 %v3676, %v3675
      %v3694 = vpack.c.bf16 %v3678, %v3677
      %v3695 = vld [vmem:[%s4] sm:$0xf]
      %v3696 = vld [vmem:[%s4 + $0x4] sm:$0xf]
      %v3697 = vld [vmem:[%s4 + $0x8] sm:$0xf]
      %v3698 = vld [vmem:[%s4 + $0xc] sm:$0xf]
      %v3699 = vld [vmem:[%s4 + $0x10] sm:$0xf]
      %v3700 = vld [vmem:[%s4 + $0x14] sm:$0xf]
      %v3701 = vld [vmem:[%s4 + $0x18] sm:$0xf]
      %v3702 = vld [vmem:[%s4 + $0x1c] sm:$0xf]
      %v3703 = vld [vmem:[%s4 + $0x20] sm:$0xf]
      %v3704 = vld [vmem:[%s4 + $0x24] sm:$0xf]
      %v3705 = vld [vmem:[%s4 + $0x28] sm:$0xf]
      %v3706 = vld [vmem:[%s4 + $0x2c] sm:$0xf]
      %v3707 = vld [vmem:[%s4 + $0x30] sm:$0xf]
      %v3708 = vld [vmem:[%s4 + $0x34] sm:$0xf]
      %v3709 = vld [vmem:[%s4 + $0x38] sm:$0xf]
      %v3710 = vld [vmem:[%s4 + $0x3c] sm:$0xf]
      %v3711 = vld [vmem:[%s4 + $0x40] sm:$0xf]
      %v3712 = vld [vmem:[%s4 + $0x44] sm:$0xf]
      %v3713 = vld [vmem:[%s4 + $0x48] sm:$0xf]
      %v3714 = vld [vmem:[%s4 + $0x4c] sm:$0xf]
      %v3715 = vld [vmem:[%s4 + $0x50] sm:$0xf]
      %v3716 = vld [vmem:[%s4 + $0x54] sm:$0xf]
      %v3717 = vld [vmem:[%s4 + $0x58] sm:$0xf]
      %v3718 = vld [vmem:[%s4 + $0x5c] sm:$0xf]
      %v3719 = vld [vmem:[%s4 + $0x60] sm:$0xf]
      %v3720 = vld [vmem:[%s4 + $0x64] sm:$0xf]
      %v3721 = vld [vmem:[%s4 + $0x68] sm:$0xf]
      %v3722 = vld [vmem:[%s4 + $0x6c] sm:$0xf]
      %v3723 = vld [vmem:[%s4 + $0x70] sm:$0xf]
      %v3724 = vld [vmem:[%s4 + $0x74] sm:$0xf]
      %v3725 = vld [vmem:[%s4 + $0x78] sm:$0xf]
      %v3726 = vld [vmem:[%s4 + $0x7c] sm:$0xf]
      %v3727 = vrot.slane %v3503, 1
      %v3728 = vrot.slane %v3504, 1
      %v3729 = vrot.slane %v3505, 1
      %v3730 = vrot.slane %v3506, 1
      %v3731 = vrot.slane %v3507, 1
      %v3732 = vrot.slane %v3508, 1
      %v3733 = vrot.slane %v3509, 1
      %v3734 = vrot.slane %v3510, 1
      %v3735 = vrot.slane %v3511, 1
      %v3736 = vrot.slane %v3512, 1
      %v3737 = vrot.slane %v3513, 1
      %v3738 = vrot.slane %v3514, 1
      %v3739 = vrot.slane %v3515, 1
      %v3740 = vrot.slane %v3516, 1
      %v3741 = vrot.slane %v3517, 1
      %v3742 = vrot.slane %v3518, 1
      %v3743 = vrot.slane %v3519, 1
      %v3744 = vrot.slane %v3520, 1
      %v3745 = vrot.slane %v3521, 1
      %v3746 = vrot.slane %v3522, 1
      %v3747 = vrot.slane %v3523, 1
      %v3748 = vrot.slane %v3524, 1
      %v3749 = vrot.slane %v3525, 1
      %v3750 = vrot.slane %v3526, 1
      %v3751 = vrot.slane %v3527, 1
      %v3752 = vrot.slane %v3528, 1
      %v3753 = vrot.slane %v3529, 1
      %v3754 = vrot.slane %v3530, 1
      %v3755 = vrot.slane %v3531, 1
      %v3756 = vrot.slane %v3532, 1
      %v3757 = vrot.slane %v3533, 1
      %v3758 = vrot.slane %v3534, 1
      %v3759 = vsel %vm1083, %v3757, %v3758
      %v3760 = vsel %vm1083, %v3756, %v3757
      %v3761 = vsel %vm1083, %v3755, %v3756
      %v3762 = vsel %vm1083, %v3754, %v3755
      %v3763 = vsel %vm1083, %v3753, %v3754
      %v3764 = vsel %vm1083, %v3752, %v3753
      %v3765 = vsel %vm1083, %v3751, %v3752
      %v3766 = vsel %vm1083, %v3750, %v3751
      %v3767 = vsel %vm1083, %v3749, %v3750
      %v3768 = vsel %vm1083, %v3748, %v3749
      %v3769 = vsel %vm1083, %v3747, %v3748
      %v3770 = vsel %vm1083, %v3746, %v3747
      %v3771 = vsel %vm1083, %v3745, %v3746
      %v3772 = vsel %vm1083, %v3744, %v3745
      %v3773 = vsel %vm1083, %v3743, %v3744
      %v3774 = vsel %vm1083, %v3742, %v3743
      %v3775 = vsel %vm1083, %v3741, %v3742
      %v3776 = vsel %vm1083, %v3740, %v3741
      %v3777 = vsel %vm1083, %v3739, %v3740
      %v3778 = vsel %vm1083, %v3738, %v3739
      %v3779 = vsel %vm1083, %v3737, %v3738
      %v3780 = vsel %vm1083, %v3736, %v3737
      %v3781 = vsel %vm1083, %v3735, %v3736
      %v3782 = vsel %vm1083, %v3734, %v3735
      %v3783 = vsel %vm1083, %v3733, %v3734
      %v3784 = vsel %vm1083, %v3732, %v3733
      %v3785 = vsel %vm1083, %v3731, %v3732
      %v3786 = vsel %vm1083, %v3730, %v3731
      %v3787 = vsel %vm1083, %v3729, %v3730
      %v3788 = vsel %vm1083, %v3728, %v3729
      %v3789 = vsel %vm1083, %v3727, %v3728
      %v3790 = vsel %vm1083, %v3758, %v3727
      %v3791 = vsel %vm1180, %v3759, 0.0
      %v3792 = vsel %vm1181, %v3790, 0.0
      %v3793 = vsel %vm1182, %v3789, 0.0
      %v3794 = vsel %vm1183, %v3788, 0.0
      %v3795 = vsel %vm1184, %v3787, 0.0
      %v3796 = vsel %vm1185, %v3786, 0.0
      %v3797 = vsel %vm1186, %v3785, 0.0
      %v3798 = vsel %vm1187, %v3784, 0.0
      %v3799 = vsel %vm1188, %v3783, 0.0
      %v3800 = vsel %vm1189, %v3782, 0.0
      %v3801 = vsel %vm1190, %v3781, 0.0
      %v3802 = vsel %vm1191, %v3780, 0.0
      %v3803 = vsel %vm1192, %v3779, 0.0
      %v3804 = vsel %vm1193, %v3778, 0.0
      %v3805 = vsel %vm1194, %v3777, 0.0
      %v3806 = vsel %vm1195, %v3776, 0.0
      %v3807 = vsel %vm1196, %v3775, 0.0
      %v3808 = vsel %vm1197, %v3774, 0.0
      %v3809 = vsel %vm1198, %v3773, 0.0
      %v3810 = vsel %vm1199, %v3772, 0.0
      %v3811 = vsel %vm1200, %v3771, 0.0
      %v3812 = vsel %vm1201, %v3770, 0.0
      %v3813 = vsel %vm1202, %v3769, 0.0
      %v3814 = vsel %vm1203, %v3768, 0.0
      %v3815 = vsel %vm1204, %v3767, 0.0
      %v3816 = vsel %vm1205, %v3766, 0.0
      %v3817 = vsel %vm1206, %v3765, 0.0
      %v3818 = vsel %vm1207, %v3764, 0.0
      %v3819 = vsel %vm1208, %v3763, 0.0
      %v3820 = vsel %vm1209, %v3762, 0.0
      %v3821 = vsel %vm1210, %v3761, 0.0
      %v3822 = vsel %vm1211, %v3760, 0.0
      %v3823 = vpack.c.bf16 %v3792, %v3791
      %v3824 = vpack.c.bf16 %v3794, %v3793
      %v3825 = vpack.c.bf16 %v3796, %v3795
      %v3826 = vpack.c.bf16 %v3798, %v3797
      %v3827 = vpack.c.bf16 %v3800, %v3799
      %v3828 = vpack.c.bf16 %v3802, %v3801
      %v3829 = vpack.c.bf16 %v3804, %v3803
      %v3830 = vpack.c.bf16 %v3806, %v3805
      %v3831 = vpack.c.bf16 %v3808, %v3807
      %v3832 = vpack.c.bf16 %v3810, %v3809
      %v3833 = vpack.c.bf16 %v3812, %v3811
      %v3834 = vpack.c.bf16 %v3814, %v3813
      %v3835 = vpack.c.bf16 %v3816, %v3815
      %v3836 = vpack.c.bf16 %v3818, %v3817
      %v3837 = vpack.c.bf16 %v3820, %v3819
      %v3838 = vpack.c.bf16 %v3822, %v3821
      %v3839 = vsel %vm1292, %v3598, 0.0
      %v3840 = vsel %vm1293, %v3597, 0.0
      %v3841 = vsel %vm1294, %v3596, 0.0
      %v3842 = vsel %vm1295, %v3595, 0.0
      %v3843 = vsel %vm1296, %v3594, 0.0
      %v3844 = vsel %vm1297, %v3593, 0.0
      %v3845 = vsel %vm1298, %v3592, 0.0
      %v3846 = vsel %vm1299, %v3591, 0.0
      %v3847 = vsel %vm1300, %v3590, 0.0
      %v3848 = vsel %vm1301, %v3589, 0.0
      %v3849 = vsel %vm1302, %v3588, 0.0
      %v3850 = vsel %vm1303, %v3587, 0.0
      %v3851 = vsel %vm1304, %v3586, 0.0
      %v3852 = vsel %vm1305, %v3585, 0.0
      %v3853 = vsel %vm1306, %v3584, 0.0
      %v3854 = vsel %vm1307, %v3583, 0.0
      %v3855 = vsel %vm1308, %v3582, 0.0
      %v3856 = vsel %vm1309, %v3581, 0.0
      %v3857 = vsel %vm1310, %v3580, 0.0
      %v3858 = vsel %vm1311, %v3579, 0.0
      %v3859 = vsel %vm1312, %v3578, 0.0
      %v3860 = vsel %vm1313, %v3577, 0.0
      %v3861 = vsel %vm1314, %v3576, 0.0
      %v3862 = vsel %vm1315, %v3575, 0.0
      %v3863 = vsel %vm1316, %v3574, 0.0
      %v3864 = vsel %vm1317, %v3573, 0.0
      %v3865 = vsel %vm1318, %v3572, 0.0
      %v3866 = vsel %vm1319, %v3571, 0.0
      %v3867 = vsel %vm1320, %v3570, 0.0
      %v3868 = vsel %vm1321, %v3569, 0.0
      %v3869 = vsel %vm1322, %v3568, 0.0
      %v3870 = vsel %vm1323, %v3567, 0.0
      %v3871 = vpack.c.bf16 %v3840, %v3839
      %v3872 = vpack.c.bf16 %v3842, %v3841
      %v3873 = vpack.c.bf16 %v3844, %v3843
      %v3874 = vpack.c.bf16 %v3846, %v3845
      %v3875 = vpack.c.bf16 %v3848, %v3847
      %v3876 = vpack.c.bf16 %v3850, %v3849
      %v3877 = vpack.c.bf16 %v3852, %v3851
      %v3878 = vpack.c.bf16 %v3854, %v3853
      %v3879 = vpack.c.bf16 %v3856, %v3855
      %v3880 = vpack.c.bf16 %v3858, %v3857
      %v3881 = vpack.c.bf16 %v3860, %v3859
      %v3882 = vpack.c.bf16 %v3862, %v3861
      %v3883 = vpack.c.bf16 %v3864, %v3863
      %v3884 = vpack.c.bf16 %v3866, %v3865
      %v3885 = vpack.c.bf16 %v3868, %v3867
      %v3886 = vpack.c.bf16 %v3870, %v3869
      %v3887 = vld [vmem:[%s4 + $0x80] sm:$0xf]
      %v3888 = vld [vmem:[%s4 + $0x84] sm:$0xf]
      %v3889 = vld [vmem:[%s4 + $0x88] sm:$0xf]
      %v3890 = vld [vmem:[%s4 + $0x8c] sm:$0xf]
      %v3891 = vld [vmem:[%s4 + $0x90] sm:$0xf]
      %v3892 = vld [vmem:[%s4 + $0x94] sm:$0xf]
      %v3893 = vld [vmem:[%s4 + $0x98] sm:$0xf]
      %v3894 = vld [vmem:[%s4 + $0x9c] sm:$0xf]
      %v3895 = vld [vmem:[%s4 + $0xa0] sm:$0xf]
      %v3896 = vld [vmem:[%s4 + $0xa4] sm:$0xf]
      %v3897 = vld [vmem:[%s4 + $0xa8] sm:$0xf]
      %v3898 = vld [vmem:[%s4 + $0xac] sm:$0xf]
      %v3899 = vld [vmem:[%s4 + $0xb0] sm:$0xf]
      %v3900 = vld [vmem:[%s4 + $0xb4] sm:$0xf]
      %v3901 = vld [vmem:[%s4 + $0xb8] sm:$0xf]
      %v3902 = vld [vmem:[%s4 + $0xbc] sm:$0xf]
      %v3903 = vld [vmem:[%s4 + $0xc0] sm:$0xf]
      %v3904 = vld [vmem:[%s4 + $0xc4] sm:$0xf]
      %v3905 = vld [vmem:[%s4 + $0xc8] sm:$0xf]
      %v3906 = vld [vmem:[%s4 + $0xcc] sm:$0xf]
      %v3907 = vld [vmem:[%s4 + $0xd0] sm:$0xf]
      %v3908 = vld [vmem:[%s4 + $0xd4] sm:$0xf]
      %v3909 = vld [vmem:[%s4 + $0xd8] sm:$0xf]
      %v3910 = vld [vmem:[%s4 + $0xdc] sm:$0xf]
      %v3911 = vld [vmem:[%s4 + $0xe0] sm:$0xf]
      %v3912 = vld [vmem:[%s4 + $0xe4] sm:$0xf]
      %v3913 = vld [vmem:[%s4 + $0xe8] sm:$0xf]
      %v3914 = vld [vmem:[%s4 + $0xec] sm:$0xf]
      %v3915 = vld [vmem:[%s4 + $0xf0] sm:$0xf]
      %v3916 = vld [vmem:[%s4 + $0xf4] sm:$0xf]
      %v3917 = vld [vmem:[%s4 + $0xf8] sm:$0xf]
      %v3918 = vld [vmem:[%s4 + $0xfc] sm:$0xf]
      %v3951 = vunpack.c.l.b16 %v3887
      %v3952 = vunpack.c.l.b16 %v3888
      %v3953 = vunpack.c.l.b16 %v3889
      %v3954 = vunpack.c.l.b16 %v3890
      %v3955 = vunpack.c.l.b16 %v3891
      %v3956 = vunpack.c.l.b16 %v3892
      %v3957 = vunpack.c.l.b16 %v3893
      %v3958 = vunpack.c.l.b16 %v3894
      %v3959 = vunpack.c.l.b16 %v3895
      %v3960 = vunpack.c.l.b16 %v3896
      %v3961 = vunpack.c.l.b16 %v3897
      %v3962 = vunpack.c.l.b16 %v3898
      %v3963 = vunpack.c.l.b16 %v3899
      %v3964 = vunpack.c.l.b16 %v3900
      %v3965 = vunpack.c.l.b16 %v3901
      %v3966 = vunpack.c.l.b16 %v3902
      %v3967 = vunpack.c.l.b16 %v3903
      %v3968 = vunpack.c.l.b16 %v3904
      %v3969 = vunpack.c.l.b16 %v3905
      %v3970 = vunpack.c.l.b16 %v3906
      %v3971 = vunpack.c.l.b16 %v3907
      %v3972 = vunpack.c.l.b16 %v3908
      %v3973 = vunpack.c.l.b16 %v3909
      %v3974 = vunpack.c.l.b16 %v3910
      %v3975 = vunpack.c.l.b16 %v3911
      %v3976 = vunpack.c.l.b16 %v3912
      %v3977 = vunpack.c.l.b16 %v3913
      %v3978 = vunpack.c.l.b16 %v3914
      %v3979 = vunpack.c.l.b16 %v3915
      %v3980 = vunpack.c.l.b16 %v3916
      %v3981 = vunpack.c.l.b16 %v3917
      %v3982 = vunpack.c.l.b16 %v3918
      %v3983 = vpack.c.b16 %v3952, %v3951
      %v3984 = vpack.c.b16 %v3954, %v3953
      %v3985 = vpack.c.b16 %v3956, %v3955
      %v3986 = vpack.c.b16 %v3958, %v3957
      %v3987 = vpack.c.b16 %v3960, %v3959
      %v3988 = vpack.c.b16 %v3962, %v3961
      %v3989 = vpack.c.b16 %v3964, %v3963
      %v3990 = vpack.c.b16 %v3966, %v3965
      %v3991 = vpack.c.b16 %v3968, %v3967
      %v3992 = vpack.c.b16 %v3970, %v3969
      %v3993 = vpack.c.b16 %v3972, %v3971
      %v3994 = vpack.c.b16 %v3974, %v3973
      %v3995 = vpack.c.b16 %v3976, %v3975
      %v3996 = vpack.c.b16 %v3978, %v3977
      %v3997 = vpack.c.b16 %v3980, %v3979
      %v3998 = vpack.c.b16 %v3982, %v3981
      %4015 = vmatprep.subr.bf16.mxu0 0
      %4016 = vmatpush1.bf16.msra.mxu0 %v3990
      %4017 = vmatprep.subr.bf16.mxu0 0
      %4018 = vmatpush1.bf16.msra.mxu0 %v3989
      %4019 = vmatprep.subr.bf16.mxu0 0
      %4020 = vmatpush1.bf16.msra.mxu0 %v3988
      %4021 = vmatprep.subr.bf16.mxu0 0
      %4022 = vmatpush1.bf16.msra.mxu0 %v3987
      %4023 = vmatprep.subr.bf16.mxu0 0
      %4024 = vmatpush1.bf16.msra.mxu0 %v3986
      %4025 = vmatprep.subr.bf16.mxu0 0
      %4026 = vmatpush1.bf16.msra.mxu0 %v3985
      %4027 = vmatprep.subr.bf16.mxu0 0
      %4028 = vmatpush1.bf16.msra.mxu0 %v3984
      %4029 = vmatprep.subr.bf16.mxu0 0
      %4030 = vmatpush1.bf16.msra.mxu0 %v3983
      %4031 = vmatprep.subr.bf16.mxu0 0
      %4032 = vmatpush2.bf16.msra.mxu0 %v3998
      %4033 = vmatprep.subr.bf16.mxu0 0
      %4034 = vmatpush2.bf16.msra.mxu0 %v3997
      %4035 = vmatprep.subr.bf16.mxu0 0
      %4036 = vmatpush2.bf16.msra.mxu0 %v3996
      %4037 = vmatprep.subr.bf16.mxu0 0
      %4038 = vmatpush2.bf16.msra.mxu0 %v3995
      %4039 = vmatprep.subr.bf16.mxu0 0
      %4040 = vmatpush2.bf16.msra.mxu0 %v3994
      %4041 = vmatprep.subr.bf16.mxu0 0
      %4042 = vmatpush2.bf16.msra.mxu0 %v3993
      %4043 = vmatprep.subr.bf16.mxu0 0
      %4044 = vmatpush2.bf16.msra.mxu0 %v3992
      %4045 = vmatprep.subr.bf16.mxu0 0
      %4046 = vmatpush2.bf16.msra.mxu0 %v3991
      %4047 = vmatprep.mubr.bf16.mxu0 %v3871
      %4048 = vmatmul.mubr.bf16.gmra.mxu0 %v3823
      %v4049 = vpop.f32.mrf.mxu0
      %v4050 = vadd.f32 0.0, %v4049
      %v4051 = vpop.f32.mrf.mxu0
      %v4052 = vpop.f32.mrf.mxu0
      %v4053 = vadd.f32 0.0, %v4052
      %v4054 = vpop.f32.mrf.mxu0
      %4055 = vmatprep.mubr.bf16.mxu0 %v3872
      %4056 = vmatmul.mubr.bf16.gmra.mxu0 %v3824
      %v4057 = vpop.f32.mrf.mxu0
      %v4058 = vadd.f32 0.0, %v4057
      %v4059 = vpop.f32.mrf.mxu0
      %v4060 = vpop.f32.mrf.mxu0
      %v4061 = vadd.f32 0.0, %v4060
      %v4062 = vpop.f32.mrf.mxu0
      %4063 = vmatprep.mubr.bf16.mxu0 %v3873
      %4064 = vmatmul.mubr.bf16.gmra.mxu0 %v3825
      %v4065 = vpop.f32.mrf.mxu0
      %v4066 = vadd.f32 0.0, %v4065
      %v4067 = vpop.f32.mrf.mxu0
      %v4068 = vpop.f32.mrf.mxu0
      %v4069 = vadd.f32 0.0, %v4068
      %v4070 = vpop.f32.mrf.mxu0
      %4071 = vmatprep.mubr.bf16.mxu0 %v3874
      %4072 = vmatmul.mubr.bf16.gmra.mxu0 %v3826
      %v4073 = vpop.f32.mrf.mxu0
      %v4074 = vadd.f32 0.0, %v4073
      %v4075 = vpop.f32.mrf.mxu0
      %v4076 = vpop.f32.mrf.mxu0
      %v4077 = vadd.f32 0.0, %v4076
      %v4078 = vpop.f32.mrf.mxu0
      %4079 = vmatprep.mubr.bf16.mxu0 %v3875
      %4080 = vmatmul.mubr.bf16.gmra.mxu0 %v3827
      %v4081 = vpop.f32.mrf.mxu0
      %v4082 = vadd.f32 0.0, %v4081
      %v4083 = vpop.f32.mrf.mxu0
      %v4084 = vpop.f32.mrf.mxu0
      %v4085 = vadd.f32 0.0, %v4084
      %v4086 = vpop.f32.mrf.mxu0
      %4087 = vmatprep.mubr.bf16.mxu0 %v3876
      %4088 = vmatmul.mubr.bf16.gmra.mxu0 %v3828
      %v4089 = vpop.f32.mrf.mxu0
      %v4090 = vadd.f32 0.0, %v4089
      %v4091 = vpop.f32.mrf.mxu0
      %v4092 = vpop.f32.mrf.mxu0
      %v4093 = vadd.f32 0.0, %v4092
      %v4094 = vpop.f32.mrf.mxu0
      %4095 = vmatprep.mubr.bf16.mxu0 %v3877
      %4096 = vmatmul.mubr.bf16.gmra.mxu0 %v3829
      %v4097 = vpop.f32.mrf.mxu0
      %v4098 = vadd.f32 0.0, %v4097
      %v4099 = vpop.f32.mrf.mxu0
      %v4100 = vpop.f32.mrf.mxu0
      %v4101 = vadd.f32 0.0, %v4100
      %v4102 = vpop.f32.mrf.mxu0
      %4103 = vmatprep.mubr.bf16.mxu0 %v3878
      %4104 = vmatmul.mubr.bf16.gmra.mxu0 %v3830
      %v4105 = vpop.f32.mrf.mxu0
      %v4106 = vadd.f32 0.0, %v4105
      %v4107 = vpop.f32.mrf.mxu0
      %v4108 = vpop.f32.mrf.mxu0
      %v4109 = vadd.f32 0.0, %v4108
      %v4110 = vpop.f32.mrf.mxu0
      %4111 = vmatprep.mubr.bf16.mxu0 %v3879
      %4112 = vmatmul.mubr.bf16.gmra.mxu0 %v3831
      %v4113 = vpop.f32.mrf.mxu0
      %v4114 = vadd.f32 0.0, %v4113
      %v4115 = vpop.f32.mrf.mxu0
      %v4116 = vpop.f32.mrf.mxu0
      %v4117 = vadd.f32 0.0, %v4116
      %v4118 = vpop.f32.mrf.mxu0
      %4119 = vmatprep.mubr.bf16.mxu0 %v3880
      %4120 = vmatmul.mubr.bf16.gmra.mxu0 %v3832
      %v4121 = vpop.f32.mrf.mxu0
      %v4122 = vadd.f32 0.0, %v4121
      %v4123 = vpop.f32.mrf.mxu0
      %v4124 = vpop.f32.mrf.mxu0
      %v4125 = vadd.f32 0.0, %v4124
      %v4126 = vpop.f32.mrf.mxu0
      %4127 = vmatprep.mubr.bf16.mxu0 %v3881
      %4128 = vmatmul.mubr.bf16.gmra.mxu0 %v3833
      %v4129 = vpop.f32.mrf.mxu0
      %v4130 = vadd.f32 0.0, %v4129
      %v4131 = vpop.f32.mrf.mxu0
      %v4132 = vpop.f32.mrf.mxu0
      %v4133 = vadd.f32 0.0, %v4132
      %v4134 = vpop.f32.mrf.mxu0
      %4135 = vmatprep.mubr.bf16.mxu0 %v3882
      %4136 = vmatmul.mubr.bf16.gmra.mxu0 %v3834
      %v4137 = vpop.f32.mrf.mxu0
      %v4138 = vadd.f32 0.0, %v4137
      %v4139 = vpop.f32.mrf.mxu0
      %v4140 = vpop.f32.mrf.mxu0
      %v4141 = vadd.f32 0.0, %v4140
      %v4142 = vpop.f32.mrf.mxu0
      %4143 = vmatprep.mubr.bf16.mxu0 %v3883
      %4144 = vmatmul.mubr.bf16.gmra.mxu0 %v3835
      %v4145 = vpop.f32.mrf.mxu0
      %v4146 = vadd.f32 0.0, %v4145
      %v4147 = vpop.f32.mrf.mxu0
      %v4148 = vpop.f32.mrf.mxu0
      %v4149 = vadd.f32 0.0, %v4148
      %v4150 = vpop.f32.mrf.mxu0
      %4151 = vmatprep.mubr.bf16.mxu0 %v3884
      %4152 = vmatmul.mubr.bf16.gmra.mxu0 %v3836
      %v4153 = vpop.f32.mrf.mxu0
      %v4154 = vadd.f32 0.0, %v4153
      %v4155 = vpop.f32.mrf.mxu0
      %v4156 = vpop.f32.mrf.mxu0
      %v4157 = vadd.f32 0.0, %v4156
      %v4158 = vpop.f32.mrf.mxu0
      %4159 = vmatprep.mubr.bf16.mxu0 %v3885
      %4160 = vmatmul.mubr.bf16.gmra.mxu0 %v3837
      %v4161 = vpop.f32.mrf.mxu0
      %v4162 = vadd.f32 0.0, %v4161
      %v4163 = vpop.f32.mrf.mxu0
      %v4164 = vpop.f32.mrf.mxu0
      %v4165 = vadd.f32 0.0, %v4164
      %v4166 = vpop.f32.mrf.mxu0
      %4167 = vmatprep.mubr.bf16.mxu0 %v3886
      %4168 = vmatmul.mubr.bf16.gmra.mxu0 %v3838
      %v4169 = vpop.f32.mrf.mxu0
      %v4170 = vadd.f32 0.0, %v4169
      %v4171 = vpop.f32.mrf.mxu0
      %v4172 = vpop.f32.mrf.mxu0
      %v4173 = vadd.f32 0.0, %v4172
      %v4174 = vpop.f32.mrf.mxu0
      %4175 = vdwg.mxu0
      %v4208 = vunpack.c.l.b16 %v3695
      %v4209 = vunpack.c.l.b16 %v3696
      %v4210 = vunpack.c.l.b16 %v3697
      %v4211 = vunpack.c.l.b16 %v3698
      %v4212 = vunpack.c.l.b16 %v3699
      %v4213 = vunpack.c.l.b16 %v3700
      %v4214 = vunpack.c.l.b16 %v3701
      %v4215 = vunpack.c.l.b16 %v3702
      %v4216 = vunpack.c.l.b16 %v3703
      %v4217 = vunpack.c.l.b16 %v3704
      %v4218 = vunpack.c.l.b16 %v3705
      %v4219 = vunpack.c.l.b16 %v3706
      %v4220 = vunpack.c.l.b16 %v3707
      %v4221 = vunpack.c.l.b16 %v3708
      %v4222 = vunpack.c.l.b16 %v3709
      %v4223 = vunpack.c.l.b16 %v3710
      %v4224 = vunpack.c.l.b16 %v3711
      %v4225 = vunpack.c.l.b16 %v3712
      %v4226 = vunpack.c.l.b16 %v3713
      %v4227 = vunpack.c.l.b16 %v3714
      %v4228 = vunpack.c.l.b16 %v3715
      %v4229 = vunpack.c.l.b16 %v3716
      %v4230 = vunpack.c.l.b16 %v3717
      %v4231 = vunpack.c.l.b16 %v3718
      %v4232 = vunpack.c.l.b16 %v3719
      %v4233 = vunpack.c.l.b16 %v3720
      %v4234 = vunpack.c.l.b16 %v3721
      %v4235 = vunpack.c.l.b16 %v3722
      %v4236 = vunpack.c.l.b16 %v3723
      %v4237 = vunpack.c.l.b16 %v3724
      %v4238 = vunpack.c.l.b16 %v3725
      %v4239 = vunpack.c.l.b16 %v3726
      %v4240 = vpack.c.b16 %v4209, %v4208
      %v4241 = vpack.c.b16 %v4211, %v4210
      %v4242 = vpack.c.b16 %v4213, %v4212
      %v4243 = vpack.c.b16 %v4215, %v4214
      %v4244 = vpack.c.b16 %v4217, %v4216
      %v4245 = vpack.c.b16 %v4219, %v4218
      %v4246 = vpack.c.b16 %v4221, %v4220
      %v4247 = vpack.c.b16 %v4223, %v4222
      %v4248 = vpack.c.b16 %v4225, %v4224
      %v4249 = vpack.c.b16 %v4227, %v4226
      %v4250 = vpack.c.b16 %v4229, %v4228
      %v4251 = vpack.c.b16 %v4231, %v4230
      %v4252 = vpack.c.b16 %v4233, %v4232
      %v4253 = vpack.c.b16 %v4235, %v4234
      %v4254 = vpack.c.b16 %v4237, %v4236
      %v4255 = vpack.c.b16 %v4239, %v4238
      %4272 = vmatprep.subr.bf16.mxu0 0
      %4273 = vmatpush1.bf16.msra.mxu0 %v4247
      %4274 = vmatprep.subr.bf16.mxu0 0
      %4275 = vmatpush1.bf16.msra.mxu0 %v4246
      %4276 = vmatprep.subr.bf16.mxu0 0
      %4277 = vmatpush1.bf16.msra.mxu0 %v4245
      %4278 = vmatprep.subr.bf16.mxu0 0
      %4279 = vmatpush1.bf16.msra.mxu0 %v4244
      %4280 = vmatprep.subr.bf16.mxu0 0
      %4281 = vmatpush1.bf16.msra.mxu0 %v4243
      %4282 = vmatprep.subr.bf16.mxu0 0
      %4283 = vmatpush1.bf16.msra.mxu0 %v4242
      %4284 = vmatprep.subr.bf16.mxu0 0
      %4285 = vmatpush1.bf16.msra.mxu0 %v4241
      %4286 = vmatprep.subr.bf16.mxu0 0
      %4287 = vmatpush1.bf16.msra.mxu0 %v4240
      %4288 = vmatprep.subr.bf16.mxu0 0
      %4289 = vmatpush2.bf16.msra.mxu0 %v4255
      %4290 = vmatprep.subr.bf16.mxu0 0
      %4291 = vmatpush2.bf16.msra.mxu0 %v4254
      %4292 = vmatprep.subr.bf16.mxu0 0
      %4293 = vmatpush2.bf16.msra.mxu0 %v4253
      %4294 = vmatprep.subr.bf16.mxu0 0
      %4295 = vmatpush2.bf16.msra.mxu0 %v4252
      %4296 = vmatprep.subr.bf16.mxu0 0
      %4297 = vmatpush2.bf16.msra.mxu0 %v4251
      %4298 = vmatprep.subr.bf16.mxu0 0
      %4299 = vmatpush2.bf16.msra.mxu0 %v4250
      %4300 = vmatprep.subr.bf16.mxu0 0
      %4301 = vmatpush2.bf16.msra.mxu0 %v4249
      %4302 = vmatprep.subr.bf16.mxu0 0
      %4303 = vmatpush2.bf16.msra.mxu0 %v4248
      %4304 = vmatprep.mubr.bf16.mxu0 %v3679
      %4305 = vmatmul.mubr.bf16.gmra.mxu0 %v3631
      %v4306 = vpop.f32.mrf.mxu0
      %v4307 = vadd.f32 %v4050, %v4306
      %v4308 = vpop.f32.mrf.mxu0
      %v4309 = vpop.f32.mrf.mxu0
      %v4310 = vadd.f32 %v4053, %v4309
      %v4311 = vpop.f32.mrf.mxu0
      %4312 = vmatprep.mubr.bf16.mxu0 %v3680
      %4313 = vmatmul.mubr.bf16.gmra.mxu0 %v3632
      %v4314 = vpop.f32.mrf.mxu0
      %v4315 = vadd.f32 %v4058, %v4314
      %v4316 = vpop.f32.mrf.mxu0
      %v4317 = vpop.f32.mrf.mxu0
      %v4318 = vadd.f32 %v4061, %v4317
      %v4319 = vpop.f32.mrf.mxu0
      %4320 = vmatprep.mubr.bf16.mxu0 %v3681
      %4321 = vmatmul.mubr.bf16.gmra.mxu0 %v3633
      %v4322 = vpop.f32.mrf.mxu0
      %v4323 = vadd.f32 %v4066, %v4322
      %v4324 = vpop.f32.mrf.mxu0
      %v4325 = vpop.f32.mrf.mxu0
      %v4326 = vadd.f32 %v4069, %v4325
      %v4327 = vpop.f32.mrf.mxu0
      %4328 = vmatprep.mubr.bf16.mxu0 %v3682
      %4329 = vmatmul.mubr.bf16.gmra.mxu0 %v3634
      %v4330 = vpop.f32.mrf.mxu0
      %v4331 = vadd.f32 %v4074, %v4330
      %v4332 = vpop.f32.mrf.mxu0
      %v4333 = vpop.f32.mrf.mxu0
      %v4334 = vadd.f32 %v4077, %v4333
      %v4335 = vpop.f32.mrf.mxu0
      %4336 = vmatprep.mubr.bf16.mxu0 %v3683
      %4337 = vmatmul.mubr.bf16.gmra.mxu0 %v3635
      %v4338 = vpop.f32.mrf.mxu0
      %v4339 = vadd.f32 %v4082, %v4338
      %v4340 = vpop.f32.mrf.mxu0
      %v4341 = vpop.f32.mrf.mxu0
      %v4342 = vadd.f32 %v4085, %v4341
      %v4343 = vpop.f32.mrf.mxu0
      %4344 = vmatprep.mubr.bf16.mxu0 %v3684
      %4345 = vmatmul.mubr.bf16.gmra.mxu0 %v3636
      %v4346 = vpop.f32.mrf.mxu0
      %v4347 = vadd.f32 %v4090, %v4346
      %v4348 = vpop.f32.mrf.mxu0
      %v4349 = vpop.f32.mrf.mxu0
      %v4350 = vadd.f32 %v4093, %v4349
      %v4351 = vpop.f32.mrf.mxu0
      %4352 = vmatprep.mubr.bf16.mxu0 %v3685
      %4353 = vmatmul.mubr.bf16.gmra.mxu0 %v3637
      %v4354 = vpop.f32.mrf.mxu0
      %v4355 = vadd.f32 %v4098, %v4354
      %v4356 = vpop.f32.mrf.mxu0
      %v4357 = vpop.f32.mrf.mxu0
      %v4358 = vadd.f32 %v4101, %v4357
      %v4359 = vpop.f32.mrf.mxu0
      %4360 = vmatprep.mubr.bf16.mxu0 %v3686
      %4361 = vmatmul.mubr.bf16.gmra.mxu0 %v3638
      %v4362 = vpop.f32.mrf.mxu0
      %v4363 = vadd.f32 %v4106, %v4362
      %v4364 = vpop.f32.mrf.mxu0
      %v4365 = vpop.f32.mrf.mxu0
      %v4366 = vadd.f32 %v4109, %v4365
      %v4367 = vpop.f32.mrf.mxu0
      %4368 = vmatprep.mubr.bf16.mxu0 %v3687
      %4369 = vmatmul.mubr.bf16.gmra.mxu0 %v3639
      %v4370 = vpop.f32.mrf.mxu0
      %v4371 = vadd.f32 %v4114, %v4370
      %v4372 = vpop.f32.mrf.mxu0
      %v4373 = vpop.f32.mrf.mxu0
      %v4374 = vadd.f32 %v4117, %v4373
      %v4375 = vpop.f32.mrf.mxu0
      %4376 = vmatprep.mubr.bf16.mxu0 %v3688
      %4377 = vmatmul.mubr.bf16.gmra.mxu0 %v3640
      %v4378 = vpop.f32.mrf.mxu0
      %v4379 = vadd.f32 %v4122, %v4378
      %v4380 = vpop.f32.mrf.mxu0
      %v4381 = vpop.f32.mrf.mxu0
      %v4382 = vadd.f32 %v4125, %v4381
      %v4383 = vpop.f32.mrf.mxu0
      %4384 = vmatprep.mubr.bf16.mxu0 %v3689
      %4385 = vmatmul.mubr.bf16.gmra.mxu0 %v3641
      %v4386 = vpop.f32.mrf.mxu0
      %v4387 = vadd.f32 %v4130, %v4386
      %v4388 = vpop.f32.mrf.mxu0
      %v4389 = vpop.f32.mrf.mxu0
      %v4390 = vadd.f32 %v4133, %v4389
      %v4391 = vpop.f32.mrf.mxu0
      %4392 = vmatprep.mubr.bf16.mxu0 %v3690
      %4393 = vmatmul.mubr.bf16.gmra.mxu0 %v3642
      %v4394 = vpop.f32.mrf.mxu0
      %v4395 = vadd.f32 %v4138, %v4394
      %v4396 = vpop.f32.mrf.mxu0
      %v4397 = vpop.f32.mrf.mxu0
      %v4398 = vadd.f32 %v4141, %v4397
      %v4399 = vpop.f32.mrf.mxu0
      %4400 = vmatprep.mubr.bf16.mxu0 %v3691
      %4401 = vmatmul.mubr.bf16.gmra.mxu0 %v3643
      %v4402 = vpop.f32.mrf.mxu0
      %v4403 = vadd.f32 %v4146, %v4402
      %v4404 = vpop.f32.mrf.mxu0
      %v4405 = vpop.f32.mrf.mxu0
      %v4406 = vadd.f32 %v4149, %v4405
      %v4407 = vpop.f32.mrf.mxu0
      %4408 = vmatprep.mubr.bf16.mxu0 %v3692
      %4409 = vmatmul.mubr.bf16.gmra.mxu0 %v3644
      %v4410 = vpop.f32.mrf.mxu0
      %v4411 = vadd.f32 %v4154, %v4410
      %v4412 = vpop.f32.mrf.mxu0
      %v4413 = vpop.f32.mrf.mxu0
      %v4414 = vadd.f32 %v4157, %v4413
      %v4415 = vpop.f32.mrf.mxu0
      %4416 = vmatprep.mubr.bf16.mxu0 %v3693
      %4417 = vmatmul.mubr.bf16.gmra.mxu0 %v3645
      %v4418 = vpop.f32.mrf.mxu0
      %v4419 = vadd.f32 %v4162, %v4418
      %v4420 = vpop.f32.mrf.mxu0
      %v4421 = vpop.f32.mrf.mxu0
      %v4422 = vadd.f32 %v4165, %v4421
      %v4423 = vpop.f32.mrf.mxu0
      %4424 = vmatprep.mubr.bf16.mxu0 %v3694
      %4425 = vmatmul.mubr.bf16.gmra.mxu0 %v3646
      %v4426 = vpop.f32.mrf.mxu0
      %v4427 = vadd.f32 %v4170, %v4426
      %v4428 = vpop.f32.mrf.mxu0
      %v4429 = vpop.f32.mrf.mxu0
      %v4430 = vadd.f32 %v4173, %v4429
      %v4431 = vpop.f32.mrf.mxu0
      %4432 = vdwg.mxu0
      %v4433 = vpack.c.bf16 %v3504, %v3503
      %v4434 = vpack.c.bf16 %v3506, %v3505
      %v4435 = vpack.c.bf16 %v3508, %v3507
      %v4436 = vpack.c.bf16 %v3510, %v3509
      %v4437 = vpack.c.bf16 %v3512, %v3511
      %v4438 = vpack.c.bf16 %v3514, %v3513
      %v4439 = vpack.c.bf16 %v3516, %v3515
      %v4440 = vpack.c.bf16 %v3518, %v3517
      %v4441 = vpack.c.bf16 %v3520, %v3519
      %v4442 = vpack.c.bf16 %v3522, %v3521
      %v4443 = vpack.c.bf16 %v3524, %v3523
      %v4444 = vpack.c.bf16 %v3526, %v3525
      %v4445 = vpack.c.bf16 %v3528, %v3527
      %v4446 = vpack.c.bf16 %v3530, %v3529
      %v4447 = vpack.c.bf16 %v3532, %v3531
      %v4448 = vpack.c.bf16 %v3534, %v3533
      %v4449 = vsel %vm1950, %v3789, 0.0
      %v4450 = vsel %vm1951, %v3788, 0.0
      %v4451 = vsel %vm1952, %v3787, 0.0
      %v4452 = vsel %vm1953, %v3786, 0.0
      %v4453 = vsel %vm1954, %v3785, 0.0
      %v4454 = vsel %vm1955, %v3784, 0.0
      %v4455 = vsel %vm1956, %v3783, 0.0
      %v4456 = vsel %vm1957, %v3782, 0.0
      %v4457 = vsel %vm1958, %v3781, 0.0
      %v4458 = vsel %vm1959, %v3780, 0.0
      %v4459 = vsel %vm1960, %v3779, 0.0
      %v4460 = vsel %vm1961, %v3778, 0.0
      %v4461 = vsel %vm1962, %v3777, 0.0
      %v4462 = vsel %vm1963, %v3776, 0.0
      %v4463 = vsel %vm1964, %v3775, 0.0
      %v4464 = vsel %vm1965, %v3774, 0.0
      %v4465 = vsel %vm1966, %v3773, 0.0
      %v4466 = vsel %vm1967, %v3772, 0.0
      %v4467 = vsel %vm1968, %v3771, 0.0
      %v4468 = vsel %vm1969, %v3770, 0.0
      %v4469 = vsel %vm1970, %v3769, 0.0
      %v4470 = vsel %vm1971, %v3768, 0.0
      %v4471 = vsel %vm1972, %v3767, 0.0
      %v4472 = vsel %vm1973, %v3766, 0.0
      %v4473 = vsel %vm1974, %v3765, 0.0
      %v4474 = vsel %vm1975, %v3764, 0.0
      %v4475 = vsel %vm1976, %v3763, 0.0
      %v4476 = vsel %vm1977, %v3762, 0.0
      %v4477 = vsel %vm1978, %v3761, 0.0
      %v4478 = vsel %vm1979, %v3760, 0.0
      %v4479 = vsel %vm1980, %v3759, 0.0
      %v4480 = vsel %vm1981, %v3790, 0.0
      %v4481 = vpack.c.bf16 %v4450, %v4449
      %v4482 = vpack.c.bf16 %v4452, %v4451
      %v4483 = vpack.c.bf16 %v4454, %v4453
      %v4484 = vpack.c.bf16 %v4456, %v4455
      %v4485 = vpack.c.bf16 %v4458, %v4457
      %v4486 = vpack.c.bf16 %v4460, %v4459
      %v4487 = vpack.c.bf16 %v4462, %v4461
      %v4488 = vpack.c.bf16 %v4464, %v4463
      %v4489 = vpack.c.bf16 %v4466, %v4465
      %v4490 = vpack.c.bf16 %v4468, %v4467
      %v4491 = vpack.c.bf16 %v4470, %v4469
      %v4492 = vpack.c.bf16 %v4472, %v4471
      %v4493 = vpack.c.bf16 %v4474, %v4473
      %v4494 = vpack.c.bf16 %v4476, %v4475
      %v4495 = vpack.c.bf16 %v4478, %v4477
      %v4496 = vpack.c.bf16 %v4480, %v4479
      %v4497 = vld [vmem:[%s4 + $0x100] sm:$0xf]
      %v4498 = vld [vmem:[%s4 + $0x104] sm:$0xf]
      %v4499 = vld [vmem:[%s4 + $0x108] sm:$0xf]
      %v4500 = vld [vmem:[%s4 + $0x10c] sm:$0xf]
      %v4501 = vld [vmem:[%s4 + $0x110] sm:$0xf]
      %v4502 = vld [vmem:[%s4 + $0x114] sm:$0xf]
      %v4503 = vld [vmem:[%s4 + $0x118] sm:$0xf]
      %v4504 = vld [vmem:[%s4 + $0x11c] sm:$0xf]
      %v4505 = vld [vmem:[%s4 + $0x120] sm:$0xf]
      %v4506 = vld [vmem:[%s4 + $0x124] sm:$0xf]
      %v4507 = vld [vmem:[%s4 + $0x128] sm:$0xf]
      %v4508 = vld [vmem:[%s4 + $0x12c] sm:$0xf]
      %v4509 = vld [vmem:[%s4 + $0x130] sm:$0xf]
      %v4510 = vld [vmem:[%s4 + $0x134] sm:$0xf]
      %v4511 = vld [vmem:[%s4 + $0x138] sm:$0xf]
      %v4512 = vld [vmem:[%s4 + $0x13c] sm:$0xf]
      %v4513 = vld [vmem:[%s4 + $0x140] sm:$0xf]
      %v4514 = vld [vmem:[%s4 + $0x144] sm:$0xf]
      %v4515 = vld [vmem:[%s4 + $0x148] sm:$0xf]
      %v4516 = vld [vmem:[%s4 + $0x14c] sm:$0xf]
      %v4517 = vld [vmem:[%s4 + $0x150] sm:$0xf]
      %v4518 = vld [vmem:[%s4 + $0x154] sm:$0xf]
      %v4519 = vld [vmem:[%s4 + $0x158] sm:$0xf]
      %v4520 = vld [vmem:[%s4 + $0x15c] sm:$0xf]
      %v4521 = vld [vmem:[%s4 + $0x160] sm:$0xf]
      %v4522 = vld [vmem:[%s4 + $0x164] sm:$0xf]
      %v4523 = vld [vmem:[%s4 + $0x168] sm:$0xf]
      %v4524 = vld [vmem:[%s4 + $0x16c] sm:$0xf]
      %v4525 = vld [vmem:[%s4 + $0x170] sm:$0xf]
      %v4526 = vld [vmem:[%s4 + $0x174] sm:$0xf]
      %v4527 = vld [vmem:[%s4 + $0x178] sm:$0xf]
      %v4528 = vld [vmem:[%s4 + $0x17c] sm:$0xf]
      %v4561 = vunpack.c.l.b16 %v4497
      %v4562 = vunpack.c.l.b16 %v4498
      %v4563 = vunpack.c.l.b16 %v4499
      %v4564 = vunpack.c.l.b16 %v4500
      %v4565 = vunpack.c.l.b16 %v4501
      %v4566 = vunpack.c.l.b16 %v4502
      %v4567 = vunpack.c.l.b16 %v4503
      %v4568 = vunpack.c.l.b16 %v4504
      %v4569 = vunpack.c.l.b16 %v4505
      %v4570 = vunpack.c.l.b16 %v4506
      %v4571 = vunpack.c.l.b16 %v4507
      %v4572 = vunpack.c.l.b16 %v4508
      %v4573 = vunpack.c.l.b16 %v4509
      %v4574 = vunpack.c.l.b16 %v4510
      %v4575 = vunpack.c.l.b16 %v4511
      %v4576 = vunpack.c.l.b16 %v4512
      %v4577 = vunpack.c.l.b16 %v4513
      %v4578 = vunpack.c.l.b16 %v4514
      %v4579 = vunpack.c.l.b16 %v4515
      %v4580 = vunpack.c.l.b16 %v4516
      %v4581 = vunpack.c.l.b16 %v4517
      %v4582 = vunpack.c.l.b16 %v4518
      %v4583 = vunpack.c.l.b16 %v4519
      %v4584 = vunpack.c.l.b16 %v4520
      %v4585 = vunpack.c.l.b16 %v4521
      %v4586 = vunpack.c.l.b16 %v4522
      %v4587 = vunpack.c.l.b16 %v4523
      %v4588 = vunpack.c.l.b16 %v4524
      %v4589 = vunpack.c.l.b16 %v4525
      %v4590 = vunpack.c.l.b16 %v4526
      %v4591 = vunpack.c.l.b16 %v4527
      %v4592 = vunpack.c.l.b16 %v4528
      %v4593 = vpack.c.b16 %v4562, %v4561
      %v4594 = vpack.c.b16 %v4564, %v4563
      %v4595 = vpack.c.b16 %v4566, %v4565
      %v4596 = vpack.c.b16 %v4568, %v4567
      %v4597 = vpack.c.b16 %v4570, %v4569
      %v4598 = vpack.c.b16 %v4572, %v4571
      %v4599 = vpack.c.b16 %v4574, %v4573
      %v4600 = vpack.c.b16 %v4576, %v4575
      %v4601 = vpack.c.b16 %v4578, %v4577
      %v4602 = vpack.c.b16 %v4580, %v4579
      %v4603 = vpack.c.b16 %v4582, %v4581
      %v4604 = vpack.c.b16 %v4584, %v4583
      %v4605 = vpack.c.b16 %v4586, %v4585
      %v4606 = vpack.c.b16 %v4588, %v4587
      %v4607 = vpack.c.b16 %v4590, %v4589
      %v4608 = vpack.c.b16 %v4592, %v4591
      %4625 = vmatprep.subr.bf16.mxu0 0
      %4626 = vmatpush1.bf16.msra.mxu0 %v4600
      %4627 = vmatprep.subr.bf16.mxu0 0
      %4628 = vmatpush1.bf16.msra.mxu0 %v4599
      %4629 = vmatprep.subr.bf16.mxu0 0
      %4630 = vmatpush1.bf16.msra.mxu0 %v4598
      %4631 = vmatprep.subr.bf16.mxu0 0
      %4632 = vmatpush1.bf16.msra.mxu0 %v4597
      %4633 = vmatprep.subr.bf16.mxu0 0
      %4634 = vmatpush1.bf16.msra.mxu0 %v4596
      %4635 = vmatprep.subr.bf16.mxu0 0
      %4636 = vmatpush1.bf16.msra.mxu0 %v4595
      %4637 = vmatprep.subr.bf16.mxu0 0
      %4638 = vmatpush1.bf16.msra.mxu0 %v4594
      %4639 = vmatprep.subr.bf16.mxu0 0
      %4640 = vmatpush1.bf16.msra.mxu0 %v4593
      %4641 = vmatprep.subr.bf16.mxu0 0
      %4642 = vmatpush2.bf16.msra.mxu0 %v4608
      %4643 = vmatprep.subr.bf16.mxu0 0
      %4644 = vmatpush2.bf16.msra.mxu0 %v4607
      %4645 = vmatprep.subr.bf16.mxu0 0
      %4646 = vmatpush2.bf16.msra.mxu0 %v4606
      %4647 = vmatprep.subr.bf16.mxu0 0
      %4648 = vmatpush2.bf16.msra.mxu0 %v4605
      %4649 = vmatprep.subr.bf16.mxu0 0
      %4650 = vmatpush2.bf16.msra.mxu0 %v4604
      %4651 = vmatprep.subr.bf16.mxu0 0
      %4652 = vmatpush2.bf16.msra.mxu0 %v4603
      %4653 = vmatprep.subr.bf16.mxu0 0
      %4654 = vmatpush2.bf16.msra.mxu0 %v4602
      %4655 = vmatprep.subr.bf16.mxu0 0
      %4656 = vmatpush2.bf16.msra.mxu0 %v4601
      %4657 = vmatprep.mubr.bf16.mxu0 %v4481
      %4658 = vmatmul.mubr.bf16.gmra.mxu0 %v4433
      %v4659 = vpop.f32.mrf.mxu0
      %v4660 = vadd.f32 0.0, %v4659
      %v4661 = vpop.f32.mrf.mxu0
      %v4662 = vpop.f32.mrf.mxu0
      %v4663 = vadd.f32 0.0, %v4662
      %v4664 = vpop.f32.mrf.mxu0
      %4665 = vmatprep.mubr.bf16.mxu0 %v4482
      %4666 = vmatmul.mubr.bf16.gmra.mxu0 %v4434
      %v4667 = vpop.f32.mrf.mxu0
      %v4668 = vadd.f32 0.0, %v4667
      %v4669 = vpop.f32.mrf.mxu0
      %v4670 = vpop.f32.mrf.mxu0
      %v4671 = vadd.f32 0.0, %v4670
      %v4672 = vpop.f32.mrf.mxu0
      %4673 = vmatprep.mubr.bf16.mxu0 %v4483
      %4674 = vmatmul.mubr.bf16.gmra.mxu0 %v4435
      %v4675 = vpop.f32.mrf.mxu0
      %v4676 = vadd.f32 0.0, %v4675
      %v4677 = vpop.f32.mrf.mxu0
      %v4678 = vpop.f32.mrf.mxu0
      %v4679 = vadd.f32 0.0, %v4678
      %v4680 = vpop.f32.mrf.mxu0
      %4681 = vmatprep.mubr.bf16.mxu0 %v4484
      %4682 = vmatmul.mubr.bf16.gmra.mxu0 %v4436
      %v4683 = vpop.f32.mrf.mxu0
      %v4684 = vadd.f32 0.0, %v4683
      %v4685 = vpop.f32.mrf.mxu0
      %v4686 = vpop.f32.mrf.mxu0
      %v4687 = vadd.f32 0.0, %v4686
      %v4688 = vpop.f32.mrf.mxu0
      %4689 = vmatprep.mubr.bf16.mxu0 %v4485
      %4690 = vmatmul.mubr.bf16.gmra.mxu0 %v4437
      %v4691 = vpop.f32.mrf.mxu0
      %v4692 = vadd.f32 0.0, %v4691
      %v4693 = vpop.f32.mrf.mxu0
      %v4694 = vpop.f32.mrf.mxu0
      %v4695 = vadd.f32 0.0, %v4694
      %v4696 = vpop.f32.mrf.mxu0
      %4697 = vmatprep.mubr.bf16.mxu0 %v4486
      %4698 = vmatmul.mubr.bf16.gmra.mxu0 %v4438
      %v4699 = vpop.f32.mrf.mxu0
      %v4700 = vadd.f32 0.0, %v4699
      %v4701 = vpop.f32.mrf.mxu0
      %v4702 = vpop.f32.mrf.mxu0
      %v4703 = vadd.f32 0.0, %v4702
      %v4704 = vpop.f32.mrf.mxu0
      %4705 = vmatprep.mubr.bf16.mxu0 %v4487
      %4706 = vmatmul.mubr.bf16.gmra.mxu0 %v4439
      %v4707 = vpop.f32.mrf.mxu0
      %v4708 = vadd.f32 0.0, %v4707
      %v4709 = vpop.f32.mrf.mxu0
      %v4710 = vpop.f32.mrf.mxu0
      %v4711 = vadd.f32 0.0, %v4710
      %v4712 = vpop.f32.mrf.mxu0
      %4713 = vmatprep.mubr.bf16.mxu0 %v4488
      %4714 = vmatmul.mubr.bf16.gmra.mxu0 %v4440
      %v4715 = vpop.f32.mrf.mxu0
      %v4716 = vadd.f32 0.0, %v4715
      %v4717 = vpop.f32.mrf.mxu0
      %v4718 = vpop.f32.mrf.mxu0
      %v4719 = vadd.f32 0.0, %v4718
      %v4720 = vpop.f32.mrf.mxu0
      %4721 = vmatprep.mubr.bf16.mxu0 %v4489
      %4722 = vmatmul.mubr.bf16.gmra.mxu0 %v4441
      %v4723 = vpop.f32.mrf.mxu0
      %v4724 = vadd.f32 0.0, %v4723
      %v4725 = vpop.f32.mrf.mxu0
      %v4726 = vpop.f32.mrf.mxu0
      %v4727 = vadd.f32 0.0, %v4726
      %v4728 = vpop.f32.mrf.mxu0
      %4729 = vmatprep.mubr.bf16.mxu0 %v4490
      %4730 = vmatmul.mubr.bf16.gmra.mxu0 %v4442
      %v4731 = vpop.f32.mrf.mxu0
      %v4732 = vadd.f32 0.0, %v4731
      %v4733 = vpop.f32.mrf.mxu0
      %v4734 = vpop.f32.mrf.mxu0
      %v4735 = vadd.f32 0.0, %v4734
      %v4736 = vpop.f32.mrf.mxu0
      %4737 = vmatprep.mubr.bf16.mxu0 %v4491
      %4738 = vmatmul.mubr.bf16.gmra.mxu0 %v4443
      %v4739 = vpop.f32.mrf.mxu0
      %v4740 = vadd.f32 0.0, %v4739
      %v4741 = vpop.f32.mrf.mxu0
      %v4742 = vpop.f32.mrf.mxu0
      %v4743 = vadd.f32 0.0, %v4742
      %v4744 = vpop.f32.mrf.mxu0
      %4745 = vmatprep.mubr.bf16.mxu0 %v4492
      %4746 = vmatmul.mubr.bf16.gmra.mxu0 %v4444
      %v4747 = vpop.f32.mrf.mxu0
      %v4748 = vadd.f32 0.0, %v4747
      %v4749 = vpop.f32.mrf.mxu0
      %v4750 = vpop.f32.mrf.mxu0
      %v4751 = vadd.f32 0.0, %v4750
      %v4752 = vpop.f32.mrf.mxu0
      %4753 = vmatprep.mubr.bf16.mxu0 %v4493
      %4754 = vmatmul.mubr.bf16.gmra.mxu0 %v4445
      %v4755 = vpop.f32.mrf.mxu0
      %v4756 = vadd.f32 0.0, %v4755
      %v4757 = vpop.f32.mrf.mxu0
      %v4758 = vpop.f32.mrf.mxu0
      %v4759 = vadd.f32 0.0, %v4758
      %v4760 = vpop.f32.mrf.mxu0
      %4761 = vmatprep.mubr.bf16.mxu0 %v4494
      %4762 = vmatmul.mubr.bf16.gmra.mxu0 %v4446
      %v4763 = vpop.f32.mrf.mxu0
      %v4764 = vadd.f32 0.0, %v4763
      %v4765 = vpop.f32.mrf.mxu0
      %v4766 = vpop.f32.mrf.mxu0
      %v4767 = vadd.f32 0.0, %v4766
      %v4768 = vpop.f32.mrf.mxu0
      %4769 = vmatprep.mubr.bf16.mxu0 %v4495
      %4770 = vmatmul.mubr.bf16.gmra.mxu0 %v4447
      %v4771 = vpop.f32.mrf.mxu0
      %v4772 = vadd.f32 0.0, %v4771
      %v4773 = vpop.f32.mrf.mxu0
      %v4774 = vpop.f32.mrf.mxu0
      %v4775 = vadd.f32 0.0, %v4774
      %v4776 = vpop.f32.mrf.mxu0
      %4777 = vmatprep.mubr.bf16.mxu0 %v4496
      %4778 = vmatmul.mubr.bf16.gmra.mxu0 %v4448
      %v4779 = vpop.f32.mrf.mxu0
      %v4780 = vadd.f32 0.0, %v4779
      %v4781 = vpop.f32.mrf.mxu0
      %v4782 = vpop.f32.mrf.mxu0
      %v4783 = vadd.f32 0.0, %v4782
      %v4784 = vpop.f32.mrf.mxu0
      %4785 = vdwg.mxu0
      %v4786 = vadd.f32 %v4307, %v4660
      %v4787 = vadd.f32 %v4310, %v4663
      %v4788 = vadd.f32 %v4315, %v4668
      %v4789 = vadd.f32 %v4318, %v4671
      %v4790 = vadd.f32 %v4323, %v4676
      %v4791 = vadd.f32 %v4326, %v4679
      %v4792 = vadd.f32 %v4331, %v4684
      %v4793 = vadd.f32 %v4334, %v4687
      %v4794 = vadd.f32 %v4339, %v4692
      %v4795 = vadd.f32 %v4342, %v4695
      %v4796 = vadd.f32 %v4347, %v4700
      %v4797 = vadd.f32 %v4350, %v4703
      %v4798 = vadd.f32 %v4355, %v4708
      %v4799 = vadd.f32 %v4358, %v4711
      %v4800 = vadd.f32 %v4363, %v4716
      %v4801 = vadd.f32 %v4366, %v4719
      %v4802 = vadd.f32 %v4371, %v4724
      %v4803 = vadd.f32 %v4374, %v4727
      %v4804 = vadd.f32 %v4379, %v4732
      %v4805 = vadd.f32 %v4382, %v4735
      %v4806 = vadd.f32 %v4387, %v4740
      %v4807 = vadd.f32 %v4390, %v4743
      %v4808 = vadd.f32 %v4395, %v4748
      %v4809 = vadd.f32 %v4398, %v4751
      %v4810 = vadd.f32 %v4403, %v4756
      %v4811 = vadd.f32 %v4406, %v4759
      %v4812 = vadd.f32 %v4411, %v4764
      %v4813 = vadd.f32 %v4414, %v4767
      %v4814 = vadd.f32 %v4419, %v4772
      %v4815 = vadd.f32 %v4422, %v4775
      %v4816 = vadd.f32 %v4427, %v4780
      %v4817 = vadd.f32 %v4430, %v4783
      %v4818 = vsel %vm2511, %v3596, 0.0
      %v4819 = vsel %vm2512, %v3595, 0.0
      %v4820 = vsel %vm2513, %v3594, 0.0
      %v4821 = vsel %vm2514, %v3593, 0.0
      %v4822 = vsel %vm2515, %v3592, 0.0
      %v4823 = vsel %vm2516, %v3591, 0.0
      %v4824 = vsel %vm2517, %v3590, 0.0
      %v4825 = vsel %vm2518, %v3589, 0.0
      %v4826 = vsel %vm2519, %v3588, 0.0
      %v4827 = vsel %vm2520, %v3587, 0.0
      %v4828 = vsel %vm2521, %v3586, 0.0
      %v4829 = vsel %vm2522, %v3585, 0.0
      %v4830 = vsel %vm2523, %v3584, 0.0
      %v4831 = vsel %vm2524, %v3583, 0.0
      %v4832 = vsel %vm2525, %v3582, 0.0
      %v4833 = vsel %vm2526, %v3581, 0.0
      %v4834 = vsel %vm2527, %v3580, 0.0
      %v4835 = vsel %vm2528, %v3579, 0.0
      %v4836 = vsel %vm2529, %v3578, 0.0
      %v4837 = vsel %vm2530, %v3577, 0.0
      %v4838 = vsel %vm2531, %v3576, 0.0
      %v4839 = vsel %vm2532, %v3575, 0.0
      %v4840 = vsel %vm2533, %v3574, 0.0
      %v4841 = vsel %vm2534, %v3573, 0.0
      %v4842 = vsel %vm2535, %v3572, 0.0
      %v4843 = vsel %vm2536, %v3571, 0.0
      %v4844 = vsel %vm2537, %v3570, 0.0
      %v4845 = vsel %vm2538, %v3569, 0.0
      %v4846 = vsel %vm2539, %v3568, 0.0
      %v4847 = vsel %vm2540, %v3567, 0.0
      %v4848 = vsel %vm2541, %v3598, 0.0
      %v4849 = vsel %vm2542, %v3597, 0.0
      %v4850 = vpack.c.bf16 %v4819, %v4818
      %v4851 = vpack.c.bf16 %v4821, %v4820
      %v4852 = vpack.c.bf16 %v4823, %v4822
      %v4853 = vpack.c.bf16 %v4825, %v4824
      %v4854 = vpack.c.bf16 %v4827, %v4826
      %v4855 = vpack.c.bf16 %v4829, %v4828
      %v4856 = vpack.c.bf16 %v4831, %v4830
      %v4857 = vpack.c.bf16 %v4833, %v4832
      %v4858 = vpack.c.bf16 %v4835, %v4834
      %v4859 = vpack.c.bf16 %v4837, %v4836
      %v4860 = vpack.c.bf16 %v4839, %v4838
      %v4861 = vpack.c.bf16 %v4841, %v4840
      %v4862 = vpack.c.bf16 %v4843, %v4842
      %v4863 = vpack.c.bf16 %v4845, %v4844
      %v4864 = vpack.c.bf16 %v4847, %v4846
      %v4865 = vpack.c.bf16 %v4849, %v4848
      %v4866 = vsel %vm2623, %v3505, 0.0
      %v4867 = vsel %vm2624, %v3506, 0.0
      %v4868 = vsel %vm2625, %v3507, 0.0
      %v4869 = vsel %vm2626, %v3508, 0.0
      %v4870 = vsel %vm2627, %v3509, 0.0
      %v4871 = vsel %vm2628, %v3510, 0.0
      %v4872 = vsel %vm2629, %v3511, 0.0
      %v4873 = vsel %vm2630, %v3512, 0.0
      %v4874 = vsel %vm2631, %v3513, 0.0
      %v4875 = vsel %vm2632, %v3514, 0.0
      %v4876 = vsel %vm2633, %v3515, 0.0
      %v4877 = vsel %vm2634, %v3516, 0.0
      %v4878 = vsel %vm2635, %v3517, 0.0
      %v4879 = vsel %vm2636, %v3518, 0.0
      %v4880 = vsel %vm2637, %v3519, 0.0
      %v4881 = vsel %vm2638, %v3520, 0.0
      %v4882 = vsel %vm2639, %v3521, 0.0
      %v4883 = vsel %vm2640, %v3522, 0.0
      %v4884 = vsel %vm2641, %v3523, 0.0
      %v4885 = vsel %vm2642, %v3524, 0.0
      %v4886 = vsel %vm2643, %v3525, 0.0
      %v4887 = vsel %vm2644, %v3526, 0.0
      %v4888 = vsel %vm2645, %v3527, 0.0
      %v4889 = vsel %vm2646, %v3528, 0.0
      %v4890 = vsel %vm2647, %v3529, 0.0
      %v4891 = vsel %vm2648, %v3530, 0.0
      %v4892 = vsel %vm2649, %v3531, 0.0
      %v4893 = vsel %vm2650, %v3532, 0.0
      %v4894 = vsel %vm2651, %v3533, 0.0
      %v4895 = vsel %vm2652, %v3534, 0.0
      %v4896 = vsel %vm2653, %v3503, 0.0
      %v4897 = vsel %vm2654, %v3504, 0.0
      %v4898 = vpack.c.bf16 %v4867, %v4866
      %v4899 = vpack.c.bf16 %v4869, %v4868
      %v4900 = vpack.c.bf16 %v4871, %v4870
      %v4901 = vpack.c.bf16 %v4873, %v4872
      %v4902 = vpack.c.bf16 %v4875, %v4874
      %v4903 = vpack.c.bf16 %v4877, %v4876
      %v4904 = vpack.c.bf16 %v4879, %v4878
      %v4905 = vpack.c.bf16 %v4881, %v4880
      %v4906 = vpack.c.bf16 %v4883, %v4882
      %v4907 = vpack.c.bf16 %v4885, %v4884
      %v4908 = vpack.c.bf16 %v4887, %v4886
      %v4909 = vpack.c.bf16 %v4889, %v4888
      %v4910 = vpack.c.bf16 %v4891, %v4890
      %v4911 = vpack.c.bf16 %v4893, %v4892
      %v4912 = vpack.c.bf16 %v4895, %v4894
      %v4913 = vpack.c.bf16 %v4897, %v4896
      %v4914 = vld [vmem:[%s4 + $0x180] sm:$0xf]
      %v4915 = vld [vmem:[%s4 + $0x184] sm:$0xf]
      %v4916 = vld [vmem:[%s4 + $0x188] sm:$0xf]
      %v4917 = vld [vmem:[%s4 + $0x18c] sm:$0xf]
      %v4918 = vld [vmem:[%s4 + $0x190] sm:$0xf]
      %v4919 = vld [vmem:[%s4 + $0x194] sm:$0xf]
      %v4920 = vld [vmem:[%s4 + $0x198] sm:$0xf]
      %v4921 = vld [vmem:[%s4 + $0x19c] sm:$0xf]
      %v4922 = vld [vmem:[%s4 + $0x1a0] sm:$0xf]
      %v4923 = vld [vmem:[%s4 + $0x1a4] sm:$0xf]
      %v4924 = vld [vmem:[%s4 + $0x1a8] sm:$0xf]
      %v4925 = vld [vmem:[%s4 + $0x1ac] sm:$0xf]
      %v4926 = vld [vmem:[%s4 + $0x1b0] sm:$0xf]
      %v4927 = vld [vmem:[%s4 + $0x1b4] sm:$0xf]
      %v4928 = vld [vmem:[%s4 + $0x1b8] sm:$0xf]
      %v4929 = vld [vmem:[%s4 + $0x1bc] sm:$0xf]
      %v4930 = vld [vmem:[%s4 + $0x1c0] sm:$0xf]
      %v4931 = vld [vmem:[%s4 + $0x1c4] sm:$0xf]
      %v4932 = vld [vmem:[%s4 + $0x1c8] sm:$0xf]
      %v4933 = vld [vmem:[%s4 + $0x1cc] sm:$0xf]
      %v4934 = vld [vmem:[%s4 + $0x1d0] sm:$0xf]
      %v4935 = vld [vmem:[%s4 + $0x1d4] sm:$0xf]
      %v4936 = vld [vmem:[%s4 + $0x1d8] sm:$0xf]
      %v4937 = vld [vmem:[%s4 + $0x1dc] sm:$0xf]
      %v4938 = vld [vmem:[%s4 + $0x1e0] sm:$0xf]
      %v4939 = vld [vmem:[%s4 + $0x1e4] sm:$0xf]
      %v4940 = vld [vmem:[%s4 + $0x1e8] sm:$0xf]
      %v4941 = vld [vmem:[%s4 + $0x1ec] sm:$0xf]
      %v4942 = vld [vmem:[%s4 + $0x1f0] sm:$0xf]
      %v4943 = vld [vmem:[%s4 + $0x1f4] sm:$0xf]
      %v4944 = vld [vmem:[%s4 + $0x1f8] sm:$0xf]
      %v4945 = vld [vmem:[%s4 + $0x1fc] sm:$0xf]
      %v4978 = vunpack.c.l.b16 %v4914
      %v4979 = vunpack.c.l.b16 %v4915
      %v4980 = vunpack.c.l.b16 %v4916
      %v4981 = vunpack.c.l.b16 %v4917
      %v4982 = vunpack.c.l.b16 %v4918
      %v4983 = vunpack.c.l.b16 %v4919
      %v4984 = vunpack.c.l.b16 %v4920
      %v4985 = vunpack.c.l.b16 %v4921
      %v4986 = vunpack.c.l.b16 %v4922
      %v4987 = vunpack.c.l.b16 %v4923
      %v4988 = vunpack.c.l.b16 %v4924
      %v4989 = vunpack.c.l.b16 %v4925
      %v4990 = vunpack.c.l.b16 %v4926
      %v4991 = vunpack.c.l.b16 %v4927
      %v4992 = vunpack.c.l.b16 %v4928
      %v4993 = vunpack.c.l.b16 %v4929
      %v4994 = vunpack.c.l.b16 %v4930
      %v4995 = vunpack.c.l.b16 %v4931
      %v4996 = vunpack.c.l.b16 %v4932
      %v4997 = vunpack.c.l.b16 %v4933
      %v4998 = vunpack.c.l.b16 %v4934
      %v4999 = vunpack.c.l.b16 %v4935
      %v5000 = vunpack.c.l.b16 %v4936
      %v5001 = vunpack.c.l.b16 %v4937
      %v5002 = vunpack.c.l.b16 %v4938
      %v5003 = vunpack.c.l.b16 %v4939
      %v5004 = vunpack.c.l.b16 %v4940
      %v5005 = vunpack.c.l.b16 %v4941
      %v5006 = vunpack.c.l.b16 %v4942
      %v5007 = vunpack.c.l.b16 %v4943
      %v5008 = vunpack.c.l.b16 %v4944
      %v5009 = vunpack.c.l.b16 %v4945
      %v5010 = vpack.c.b16 %v4979, %v4978
      %v5011 = vpack.c.b16 %v4981, %v4980
      %v5012 = vpack.c.b16 %v4983, %v4982
      %v5013 = vpack.c.b16 %v4985, %v4984
      %v5014 = vpack.c.b16 %v4987, %v4986
      %v5015 = vpack.c.b16 %v4989, %v4988
      %v5016 = vpack.c.b16 %v4991, %v4990
      %v5017 = vpack.c.b16 %v4993, %v4992
      %v5018 = vpack.c.b16 %v4995, %v4994
      %v5019 = vpack.c.b16 %v4997, %v4996
      %v5020 = vpack.c.b16 %v4999, %v4998
      %v5021 = vpack.c.b16 %v5001, %v5000
      %v5022 = vpack.c.b16 %v5003, %v5002
      %v5023 = vpack.c.b16 %v5005, %v5004
      %v5024 = vpack.c.b16 %v5007, %v5006
      %v5025 = vpack.c.b16 %v5009, %v5008
      %5042 = vmatprep.subr.bf16.mxu0 0
      %5043 = vmatpush1.bf16.msra.mxu0 %v5017
      %5044 = vmatprep.subr.bf16.mxu0 0
      %5045 = vmatpush1.bf16.msra.mxu0 %v5016
      %5046 = vmatprep.subr.bf16.mxu0 0
      %5047 = vmatpush1.bf16.msra.mxu0 %v5015
      %5048 = vmatprep.subr.bf16.mxu0 0
      %5049 = vmatpush1.bf16.msra.mxu0 %v5014
      %5050 = vmatprep.subr.bf16.mxu0 0
      %5051 = vmatpush1.bf16.msra.mxu0 %v5013
      %5052 = vmatprep.subr.bf16.mxu0 0
      %5053 = vmatpush1.bf16.msra.mxu0 %v5012
      %5054 = vmatprep.subr.bf16.mxu0 0
      %5055 = vmatpush1.bf16.msra.mxu0 %v5011
      %5056 = vmatprep.subr.bf16.mxu0 0
      %5057 = vmatpush1.bf16.msra.mxu0 %v5010
      %5058 = vmatprep.subr.bf16.mxu0 0
      %5059 = vmatpush2.bf16.msra.mxu0 %v5025
      %5060 = vmatprep.subr.bf16.mxu0 0
      %5061 = vmatpush2.bf16.msra.mxu0 %v5024
      %5062 = vmatprep.subr.bf16.mxu0 0
      %5063 = vmatpush2.bf16.msra.mxu0 %v5023
      %5064 = vmatprep.subr.bf16.mxu0 0
      %5065 = vmatpush2.bf16.msra.mxu0 %v5022
      %5066 = vmatprep.subr.bf16.mxu0 0
      %5067 = vmatpush2.bf16.msra.mxu0 %v5021
      %5068 = vmatprep.subr.bf16.mxu0 0
      %5069 = vmatpush2.bf16.msra.mxu0 %v5020
      %5070 = vmatprep.subr.bf16.mxu0 0
      %5071 = vmatpush2.bf16.msra.mxu0 %v5019
      %5072 = vmatprep.subr.bf16.mxu0 0
      %5073 = vmatpush2.bf16.msra.mxu0 %v5018
      %5074 = vmatprep.mubr.bf16.mxu0 %v4898
      %5075 = vmatmul.mubr.bf16.gmra.mxu0 %v4850
      %v5076 = vpop.f32.mrf.mxu0
      %v5077 = vadd.f32 0.0, %v5076
      %v5078 = vpop.f32.mrf.mxu0
      %v5079 = vpop.f32.mrf.mxu0
      %v5080 = vadd.f32 0.0, %v5079
      %v5081 = vpop.f32.mrf.mxu0
      %5082 = vmatprep.mubr.bf16.mxu0 %v4899
      %5083 = vmatmul.mubr.bf16.gmra.mxu0 %v4851
      %v5084 = vpop.f32.mrf.mxu0
      %v5085 = vadd.f32 0.0, %v5084
      %v5086 = vpop.f32.mrf.mxu0
      %v5087 = vpop.f32.mrf.mxu0
      %v5088 = vadd.f32 0.0, %v5087
      %v5089 = vpop.f32.mrf.mxu0
      %5090 = vmatprep.mubr.bf16.mxu0 %v4900
      %5091 = vmatmul.mubr.bf16.gmra.mxu0 %v4852
      %v5092 = vpop.f32.mrf.mxu0
      %v5093 = vadd.f32 0.0, %v5092
      %v5094 = vpop.f32.mrf.mxu0
      %v5095 = vpop.f32.mrf.mxu0
      %v5096 = vadd.f32 0.0, %v5095
      %v5097 = vpop.f32.mrf.mxu0
      %5098 = vmatprep.mubr.bf16.mxu0 %v4901
      %5099 = vmatmul.mubr.bf16.gmra.mxu0 %v4853
      %v5100 = vpop.f32.mrf.mxu0
      %v5101 = vadd.f32 0.0, %v5100
      %v5102 = vpop.f32.mrf.mxu0
      %v5103 = vpop.f32.mrf.mxu0
      %v5104 = vadd.f32 0.0, %v5103
      %v5105 = vpop.f32.mrf.mxu0
      %5106 = vmatprep.mubr.bf16.mxu0 %v4902
      %5107 = vmatmul.mubr.bf16.gmra.mxu0 %v4854
      %v5108 = vpop.f32.mrf.mxu0
      %v5109 = vadd.f32 0.0, %v5108
      %v5110 = vpop.f32.mrf.mxu0
      %v5111 = vpop.f32.mrf.mxu0
      %v5112 = vadd.f32 0.0, %v5111
      %v5113 = vpop.f32.mrf.mxu0
      %5114 = vmatprep.mubr.bf16.mxu0 %v4903
      %5115 = vmatmul.mubr.bf16.gmra.mxu0 %v4855
      %v5116 = vpop.f32.mrf.mxu0
      %v5117 = vadd.f32 0.0, %v5116
      %v5118 = vpop.f32.mrf.mxu0
      %v5119 = vpop.f32.mrf.mxu0
      %v5120 = vadd.f32 0.0, %v5119
      %v5121 = vpop.f32.mrf.mxu0
      %5122 = vmatprep.mubr.bf16.mxu0 %v4904
      %5123 = vmatmul.mubr.bf16.gmra.mxu0 %v4856
      %v5124 = vpop.f32.mrf.mxu0
      %v5125 = vadd.f32 0.0, %v5124
      %v5126 = vpop.f32.mrf.mxu0
      %v5127 = vpop.f32.mrf.mxu0
      %v5128 = vadd.f32 0.0, %v5127
      %v5129 = vpop.f32.mrf.mxu0
      %5130 = vmatprep.mubr.bf16.mxu0 %v4905
      %5131 = vmatmul.mubr.bf16.gmra.mxu0 %v4857
      %v5132 = vpop.f32.mrf.mxu0
      %v5133 = vadd.f32 0.0, %v5132
      %v5134 = vpop.f32.mrf.mxu0
      %v5135 = vpop.f32.mrf.mxu0
      %v5136 = vadd.f32 0.0, %v5135
      %v5137 = vpop.f32.mrf.mxu0
      %5138 = vmatprep.mubr.bf16.mxu0 %v4906
      %5139 = vmatmul.mubr.bf16.gmra.mxu0 %v4858
      %v5140 = vpop.f32.mrf.mxu0
      %v5141 = vadd.f32 0.0, %v5140
      %v5142 = vpop.f32.mrf.mxu0
      %v5143 = vpop.f32.mrf.mxu0
      %v5144 = vadd.f32 0.0, %v5143
      %v5145 = vpop.f32.mrf.mxu0
      %5146 = vmatprep.mubr.bf16.mxu0 %v4907
      %5147 = vmatmul.mubr.bf16.gmra.mxu0 %v4859
      %v5148 = vpop.f32.mrf.mxu0
      %v5149 = vadd.f32 0.0, %v5148
      %v5150 = vpop.f32.mrf.mxu0
      %v5151 = vpop.f32.mrf.mxu0
      %v5152 = vadd.f32 0.0, %v5151
      %v5153 = vpop.f32.mrf.mxu0
      %5154 = vmatprep.mubr.bf16.mxu0 %v4908
      %5155 = vmatmul.mubr.bf16.gmra.mxu0 %v4860
      %v5156 = vpop.f32.mrf.mxu0
      %v5157 = vadd.f32 0.0, %v5156
      %v5158 = vpop.f32.mrf.mxu0
      %v5159 = vpop.f32.mrf.mxu0
      %v5160 = vadd.f32 0.0, %v5159
      %v5161 = vpop.f32.mrf.mxu0
      %5162 = vmatprep.mubr.bf16.mxu0 %v4909
      %5163 = vmatmul.mubr.bf16.gmra.mxu0 %v4861
      %v5164 = vpop.f32.mrf.mxu0
      %v5165 = vadd.f32 0.0, %v5164
      %v5166 = vpop.f32.mrf.mxu0
      %v5167 = vpop.f32.mrf.mxu0
      %v5168 = vadd.f32 0.0, %v5167
      %v5169 = vpop.f32.mrf.mxu0
      %5170 = vmatprep.mubr.bf16.mxu0 %v4910
      %5171 = vmatmul.mubr.bf16.gmra.mxu0 %v4862
      %v5172 = vpop.f32.mrf.mxu0
      %v5173 = vadd.f32 0.0, %v5172
      %v5174 = vpop.f32.mrf.mxu0
      %v5175 = vpop.f32.mrf.mxu0
      %v5176 = vadd.f32 0.0, %v5175
      %v5177 = vpop.f32.mrf.mxu0
      %5178 = vmatprep.mubr.bf16.mxu0 %v4911
      %5179 = vmatmul.mubr.bf16.gmra.mxu0 %v4863
      %v5180 = vpop.f32.mrf.mxu0
      %v5181 = vadd.f32 0.0, %v5180
      %v5182 = vpop.f32.mrf.mxu0
      %v5183 = vpop.f32.mrf.mxu0
      %v5184 = vadd.f32 0.0, %v5183
      %v5185 = vpop.f32.mrf.mxu0
      %5186 = vmatprep.mubr.bf16.mxu0 %v4912
      %5187 = vmatmul.mubr.bf16.gmra.mxu0 %v4864
      %v5188 = vpop.f32.mrf.mxu0
      %v5189 = vadd.f32 0.0, %v5188
      %v5190 = vpop.f32.mrf.mxu0
      %v5191 = vpop.f32.mrf.mxu0
      %v5192 = vadd.f32 0.0, %v5191
      %v5193 = vpop.f32.mrf.mxu0
      %5194 = vmatprep.mubr.bf16.mxu0 %v4913
      %5195 = vmatmul.mubr.bf16.gmra.mxu0 %v4865
      %v5196 = vpop.f32.mrf.mxu0
      %v5197 = vadd.f32 0.0, %v5196
      %v5198 = vpop.f32.mrf.mxu0
      %v5199 = vpop.f32.mrf.mxu0
      %v5200 = vadd.f32 0.0, %v5199
      %v5201 = vpop.f32.mrf.mxu0
      %5202 = vdwg.mxu0
      %v5203 = vadd.f32 %v4786, %v5077
      %v5204 = vadd.f32 %v4787, %v5080
      %v5205 = vadd.f32 %v4788, %v5085
      %v5206 = vadd.f32 %v4789, %v5088
      %v5207 = vadd.f32 %v4790, %v5093
      %v5208 = vadd.f32 %v4791, %v5096
      %v5209 = vadd.f32 %v4792, %v5101
      %v5210 = vadd.f32 %v4793, %v5104
      %v5211 = vadd.f32 %v4794, %v5109
      %v5212 = vadd.f32 %v4795, %v5112
      %v5213 = vadd.f32 %v4796, %v5117
      %v5214 = vadd.f32 %v4797, %v5120
      %v5215 = vadd.f32 %v4798, %v5125
      %v5216 = vadd.f32 %v4799, %v5128
      %v5217 = vadd.f32 %v4800, %v5133
      %v5218 = vadd.f32 %v4801, %v5136
      %v5219 = vadd.f32 %v4802, %v5141
      %v5220 = vadd.f32 %v4803, %v5144
      %v5221 = vadd.f32 %v4804, %v5149
      %v5222 = vadd.f32 %v4805, %v5152
      %v5223 = vadd.f32 %v4806, %v5157
      %v5224 = vadd.f32 %v4807, %v5160
      %v5225 = vadd.f32 %v4808, %v5165
      %v5226 = vadd.f32 %v4809, %v5168
      %v5227 = vadd.f32 %v4810, %v5173
      %v5228 = vadd.f32 %v4811, %v5176
      %v5229 = vadd.f32 %v4812, %v5181
      %v5230 = vadd.f32 %v4813, %v5184
      %v5231 = vadd.f32 %v4814, %v5189
      %v5232 = vadd.f32 %v4815, %v5192
      %v5233 = vadd.f32 %v4816, %v5197
      %v5234 = vadd.f32 %v4817, %v5200
      %v5235 = vsel %vm3088, %v3787, 0.0
      %v5236 = vsel %vm3089, %v3786, 0.0
      %v5237 = vsel %vm3090, %v3785, 0.0
      %v5238 = vsel %vm3091, %v3784, 0.0
      %v5239 = vsel %vm3092, %v3783, 0.0
      %v5240 = vsel %vm3093, %v3782, 0.0
      %v5241 = vsel %vm3094, %v3781, 0.0
      %v5242 = vsel %vm3095, %v3780, 0.0
      %v5243 = vsel %vm3096, %v3779, 0.0
      %v5244 = vsel %vm3097, %v3778, 0.0
      %v5245 = vsel %vm3098, %v3777, 0.0
      %v5246 = vsel %vm3099, %v3776, 0.0
      %v5247 = vsel %vm3100, %v3775, 0.0
      %v5248 = vsel %vm3101, %v3774, 0.0
      %v5249 = vsel %vm3102, %v3773, 0.0
      %v5250 = vsel %vm3103, %v3772, 0.0
      %v5251 = vsel %vm3104, %v3771, 0.0
      %v5252 = vsel %vm3105, %v3770, 0.0
      %v5253 = vsel %vm3106, %v3769, 0.0
      %v5254 = vsel %vm3107, %v3768, 0.0
      %v5255 = vsel %vm3108, %v3767, 0.0
      %v5256 = vsel %vm3109, %v3766, 0.0
      %v5257 = vsel %vm3110, %v3765, 0.0
      %v5258 = vsel %vm3111, %v3764, 0.0
      %v5259 = vsel %vm3112, %v3763, 0.0
      %v5260 = vsel %vm3113, %v3762, 0.0
      %v5261 = vsel %vm3114, %v3761, 0.0
      %v5262 = vsel %vm3115, %v3760, 0.0
      %v5263 = vsel %vm3116, %v3759, 0.0
      %v5264 = vsel %vm3117, %v3790, 0.0
      %v5265 = vsel %vm3118, %v3789, 0.0
      %v5266 = vsel %vm3119, %v3788, 0.0
      %v5267 = vpack.c.bf16 %v5236, %v5235
      %v5268 = vpack.c.bf16 %v5238, %v5237
      %v5269 = vpack.c.bf16 %v5240, %v5239
      %v5270 = vpack.c.bf16 %v5242, %v5241
      %v5271 = vpack.c.bf16 %v5244, %v5243
      %v5272 = vpack.c.bf16 %v5246, %v5245
      %v5273 = vpack.c.bf16 %v5248, %v5247
      %v5274 = vpack.c.bf16 %v5250, %v5249
      %v5275 = vpack.c.bf16 %v5252, %v5251
      %v5276 = vpack.c.bf16 %v5254, %v5253
      %v5277 = vpack.c.bf16 %v5256, %v5255
      %v5278 = vpack.c.bf16 %v5258, %v5257
      %v5279 = vpack.c.bf16 %v5260, %v5259
      %v5280 = vpack.c.bf16 %v5262, %v5261
      %v5281 = vpack.c.bf16 %v5264, %v5263
      %v5282 = vpack.c.bf16 %v5266, %v5265
      %v5283 = vld [vmem:[%s4 + $0x200] sm:$0xf]
      %v5284 = vld [vmem:[%s4 + $0x204] sm:$0xf]
      %v5285 = vld [vmem:[%s4 + $0x208] sm:$0xf]
      %v5286 = vld [vmem:[%s4 + $0x20c] sm:$0xf]
      %v5287 = vld [vmem:[%s4 + $0x210] sm:$0xf]
      %v5288 = vld [vmem:[%s4 + $0x214] sm:$0xf]
      %v5289 = vld [vmem:[%s4 + $0x218] sm:$0xf]
      %v5290 = vld [vmem:[%s4 + $0x21c] sm:$0xf]
      %v5291 = vld [vmem:[%s4 + $0x220] sm:$0xf]
      %v5292 = vld [vmem:[%s4 + $0x224] sm:$0xf]
      %v5293 = vld [vmem:[%s4 + $0x228] sm:$0xf]
      %v5294 = vld [vmem:[%s4 + $0x22c] sm:$0xf]
      %v5295 = vld [vmem:[%s4 + $0x230] sm:$0xf]
      %v5296 = vld [vmem:[%s4 + $0x234] sm:$0xf]
      %v5297 = vld [vmem:[%s4 + $0x238] sm:$0xf]
      %v5298 = vld [vmem:[%s4 + $0x23c] sm:$0xf]
      %v5315 = vunpack.c.l.b16 %v5283
      %v5316 = vunpack.c.l.b16 %v5284
      %v5317 = vunpack.c.l.b16 %v5285
      %v5318 = vunpack.c.l.b16 %v5286
      %v5319 = vunpack.c.l.b16 %v5287
      %v5320 = vunpack.c.l.b16 %v5288
      %v5321 = vunpack.c.l.b16 %v5289
      %v5322 = vunpack.c.l.b16 %v5290
      %v5323 = vunpack.c.l.b16 %v5291
      %v5324 = vunpack.c.l.b16 %v5292
      %v5325 = vunpack.c.l.b16 %v5293
      %v5326 = vunpack.c.l.b16 %v5294
      %v5327 = vunpack.c.l.b16 %v5295
      %v5328 = vunpack.c.l.b16 %v5296
      %v5329 = vunpack.c.l.b16 %v5297
      %v5330 = vunpack.c.l.b16 %v5298
      %v5331 = vpack.c.b16 %v5316, %v5315
      %v5332 = vpack.c.b16 %v5318, %v5317
      %v5333 = vpack.c.b16 %v5320, %v5319
      %v5334 = vpack.c.b16 %v5322, %v5321
      %v5335 = vpack.c.b16 %v5324, %v5323
      %v5336 = vpack.c.b16 %v5326, %v5325
      %v5337 = vpack.c.b16 %v5328, %v5327
      %v5338 = vpack.c.b16 %v5330, %v5329
      %5347 = vmatprep.subr.bf16.mxu0 0
      %5348 = vmatpush1.bf16.msra.mxu0 %v5338
      %5349 = vmatprep.subr.bf16.mxu0 0
      %5350 = vmatpush1.bf16.msra.mxu0 %v5337
      %5351 = vmatprep.subr.bf16.mxu0 0
      %5352 = vmatpush1.bf16.msra.mxu0 %v5336
      %5353 = vmatprep.subr.bf16.mxu0 0
      %5354 = vmatpush1.bf16.msra.mxu0 %v5335
      %5355 = vmatprep.subr.bf16.mxu0 0
      %5356 = vmatpush1.bf16.msra.mxu0 %v5334
      %5357 = vmatprep.subr.bf16.mxu0 0
      %5358 = vmatpush1.bf16.msra.mxu0 %v5333
      %5359 = vmatprep.subr.bf16.mxu0 0
      %5360 = vmatpush1.bf16.msra.mxu0 %v5332
      %5361 = vmatprep.subr.bf16.mxu0 0
      %5362 = vmatpush1.bf16.msra.mxu0 %v5331
      %5363 = vmatprep.subr.bf16.mxu0 0
      %5364 = vmatpush2.bf16.msra.mxu0 0
      %5365 = vmatprep.subr.bf16.mxu0 0
      %5366 = vmatpush2.bf16.msra.mxu0 0
      %5367 = vmatprep.subr.bf16.mxu0 0
      %5368 = vmatpush2.bf16.msra.mxu0 0
      %5369 = vmatprep.subr.bf16.mxu0 0
      %5370 = vmatpush2.bf16.msra.mxu0 0
      %5371 = vmatprep.subr.bf16.mxu0 0
      %5372 = vmatpush2.bf16.msra.mxu0 0
      %5373 = vmatprep.subr.bf16.mxu0 0
      %5374 = vmatpush2.bf16.msra.mxu0 0
      %5375 = vmatprep.subr.bf16.mxu0 0
      %5376 = vmatpush2.bf16.msra.mxu0 0
      %5377 = vmatprep.subr.bf16.mxu0 0
      %5378 = vmatpush2.bf16.msra.mxu0 0
      %5379 = vmatprep.mubr.bf16.mxu0 0
      %5380 = vmatmul.mubr.bf16.gmra.mxu0 %v5267
      %v5381 = vpop.f32.mrf.mxu0
      %v5382 = vadd.f32 0.0, %v5381
      %v5383 = vpop.f32.mrf.mxu0
      %v5384 = vpop.f32.mrf.mxu0
      %v5385 = vadd.f32 0.0, %v5384
      %v5386 = vpop.f32.mrf.mxu0
      %5387 = vmatprep.mubr.bf16.mxu0 0
      %5388 = vmatmul.mubr.bf16.gmra.mxu0 %v5268
      %v5389 = vpop.f32.mrf.mxu0
      %v5390 = vadd.f32 0.0, %v5389
      %v5391 = vpop.f32.mrf.mxu0
      %v5392 = vpop.f32.mrf.mxu0
      %v5393 = vadd.f32 0.0, %v5392
      %v5394 = vpop.f32.mrf.mxu0
      %5395 = vmatprep.mubr.bf16.mxu0 0
      %5396 = vmatmul.mubr.bf16.gmra.mxu0 %v5269
      %v5397 = vpop.f32.mrf.mxu0
      %v5398 = vadd.f32 0.0, %v5397
      %v5399 = vpop.f32.mrf.mxu0
      %v5400 = vpop.f32.mrf.mxu0
      %v5401 = vadd.f32 0.0, %v5400
      %v5402 = vpop.f32.mrf.mxu0
      %5403 = vmatprep.mubr.bf16.mxu0 0
      %5404 = vmatmul.mubr.bf16.gmra.mxu0 %v5270
      %v5405 = vpop.f32.mrf.mxu0
      %v5406 = vadd.f32 0.0, %v5405
      %v5407 = vpop.f32.mrf.mxu0
      %v5408 = vpop.f32.mrf.mxu0
      %v5409 = vadd.f32 0.0, %v5408
      %v5410 = vpop.f32.mrf.mxu0
      %5411 = vmatprep.mubr.bf16.mxu0 0
      %5412 = vmatmul.mubr.bf16.gmra.mxu0 %v5271
      %v5413 = vpop.f32.mrf.mxu0
      %v5414 = vadd.f32 0.0, %v5413
      %v5415 = vpop.f32.mrf.mxu0
      %v5416 = vpop.f32.mrf.mxu0
      %v5417 = vadd.f32 0.0, %v5416
      %v5418 = vpop.f32.mrf.mxu0
      %5419 = vmatprep.mubr.bf16.mxu0 0
      %5420 = vmatmul.mubr.bf16.gmra.mxu0 %v5272
      %v5421 = vpop.f32.mrf.mxu0
      %v5422 = vadd.f32 0.0, %v5421
      %v5423 = vpop.f32.mrf.mxu0
      %v5424 = vpop.f32.mrf.mxu0
      %v5425 = vadd.f32 0.0, %v5424
      %v5426 = vpop.f32.mrf.mxu0
      %5427 = vmatprep.mubr.bf16.mxu0 0
      %5428 = vmatmul.mubr.bf16.gmra.mxu0 %v5273
      %v5429 = vpop.f32.mrf.mxu0
      %v5430 = vadd.f32 0.0, %v5429
      %v5431 = vpop.f32.mrf.mxu0
      %v5432 = vpop.f32.mrf.mxu0
      %v5433 = vadd.f32 0.0, %v5432
      %v5434 = vpop.f32.mrf.mxu0
      %5435 = vmatprep.mubr.bf16.mxu0 0
      %5436 = vmatmul.mubr.bf16.gmra.mxu0 %v5274
      %v5437 = vpop.f32.mrf.mxu0
      %v5438 = vadd.f32 0.0, %v5437
      %v5439 = vpop.f32.mrf.mxu0
      %v5440 = vpop.f32.mrf.mxu0
      %v5441 = vadd.f32 0.0, %v5440
      %v5442 = vpop.f32.mrf.mxu0
      %5443 = vmatprep.mubr.bf16.mxu0 0
      %5444 = vmatmul.mubr.bf16.gmra.mxu0 %v5275
      %v5445 = vpop.f32.mrf.mxu0
      %v5446 = vadd.f32 0.0, %v5445
      %v5447 = vpop.f32.mrf.mxu0
      %v5448 = vpop.f32.mrf.mxu0
      %v5449 = vadd.f32 0.0, %v5448
      %v5450 = vpop.f32.mrf.mxu0
      %5451 = vmatprep.mubr.bf16.mxu0 0
      %5452 = vmatmul.mubr.bf16.gmra.mxu0 %v5276
      %v5453 = vpop.f32.mrf.mxu0
      %v5454 = vadd.f32 0.0, %v5453
      %v5455 = vpop.f32.mrf.mxu0
      %v5456 = vpop.f32.mrf.mxu0
      %v5457 = vadd.f32 0.0, %v5456
      %v5458 = vpop.f32.mrf.mxu0
      %5459 = vmatprep.mubr.bf16.mxu0 0
      %5460 = vmatmul.mubr.bf16.gmra.mxu0 %v5277
      %v5461 = vpop.f32.mrf.mxu0
      %v5462 = vadd.f32 0.0, %v5461
      %v5463 = vpop.f32.mrf.mxu0
      %v5464 = vpop.f32.mrf.mxu0
      %v5465 = vadd.f32 0.0, %v5464
      %v5466 = vpop.f32.mrf.mxu0
      %5467 = vmatprep.mubr.bf16.mxu0 0
      %5468 = vmatmul.mubr.bf16.gmra.mxu0 %v5278
      %v5469 = vpop.f32.mrf.mxu0
      %v5470 = vadd.f32 0.0, %v5469
      %v5471 = vpop.f32.mrf.mxu0
      %v5472 = vpop.f32.mrf.mxu0
      %v5473 = vadd.f32 0.0, %v5472
      %v5474 = vpop.f32.mrf.mxu0
      %5475 = vmatprep.mubr.bf16.mxu0 0
      %5476 = vmatmul.mubr.bf16.gmra.mxu0 %v5279
      %v5477 = vpop.f32.mrf.mxu0
      %v5478 = vadd.f32 0.0, %v5477
      %v5479 = vpop.f32.mrf.mxu0
      %v5480 = vpop.f32.mrf.mxu0
      %v5481 = vadd.f32 0.0, %v5480
      %v5482 = vpop.f32.mrf.mxu0
      %5483 = vmatprep.mubr.bf16.mxu0 0
      %5484 = vmatmul.mubr.bf16.gmra.mxu0 %v5280
      %v5485 = vpop.f32.mrf.mxu0
      %v5486 = vadd.f32 0.0, %v5485
      %v5487 = vpop.f32.mrf.mxu0
      %v5488 = vpop.f32.mrf.mxu0
      %v5489 = vadd.f32 0.0, %v5488
      %v5490 = vpop.f32.mrf.mxu0
      %5491 = vmatprep.mubr.bf16.mxu0 0
      %5492 = vmatmul.mubr.bf16.gmra.mxu0 %v5281
      %v5493 = vpop.f32.mrf.mxu0
      %v5494 = vadd.f32 0.0, %v5493
      %v5495 = vpop.f32.mrf.mxu0
      %v5496 = vpop.f32.mrf.mxu0
      %v5497 = vadd.f32 0.0, %v5496
      %v5498 = vpop.f32.mrf.mxu0
      %5499 = vmatprep.mubr.bf16.mxu0 0
      %5500 = vmatmul.mubr.bf16.gmra.mxu0 %v5282
      %v5501 = vpop.f32.mrf.mxu0
      %v5502 = vadd.f32 0.0, %v5501
      %v5503 = vpop.f32.mrf.mxu0
      %v5504 = vpop.f32.mrf.mxu0
      %v5505 = vadd.f32 0.0, %v5504
      %v5506 = vpop.f32.mrf.mxu0
      %5507 = vdwg.mxu0
      %v5508 = vadd.f32 %v5203, %v5382
      %v5509 = vadd.f32 %v5204, %v5385
      %v5510 = vadd.f32 %v5205, %v5390
      %v5511 = vadd.f32 %v5206, %v5393
      %v5512 = vadd.f32 %v5207, %v5398
      %v5513 = vadd.f32 %v5208, %v5401
      %v5514 = vadd.f32 %v5209, %v5406
      %v5515 = vadd.f32 %v5210, %v5409
      %v5516 = vadd.f32 %v5211, %v5414
      %v5517 = vadd.f32 %v5212, %v5417
      %v5518 = vadd.f32 %v5213, %v5422
      %v5519 = vadd.f32 %v5214, %v5425
      %v5520 = vadd.f32 %v5215, %v5430
      %v5521 = vadd.f32 %v5216, %v5433
      %v5522 = vadd.f32 %v5217, %v5438
      %v5523 = vadd.f32 %v5218, %v5441
      %v5524 = vadd.f32 %v5219, %v5446
      %v5525 = vadd.f32 %v5220, %v5449
      %v5526 = vadd.f32 %v5221, %v5454
      %v5527 = vadd.f32 %v5222, %v5457
      %v5528 = vadd.f32 %v5223, %v5462
      %v5529 = vadd.f32 %v5224, %v5465
      %v5530 = vadd.f32 %v5225, %v5470
      %v5531 = vadd.f32 %v5226, %v5473
      %v5532 = vadd.f32 %v5227, %v5478
      %v5533 = vadd.f32 %v5228, %v5481
      %v5534 = vadd.f32 %v5229, %v5486
      %v5535 = vadd.f32 %v5230, %v5489
      %v5536 = vadd.f32 %v5231, %v5494
      %v5537 = vadd.f32 %v5232, %v5497
      %v5538 = vadd.f32 %v5233, %v5502
      %v5539 = vadd.f32 %v5234, %v5505
      %v5540 = vld [vmem:[%s5] sm:$0x1]
      %v5542 = vlaneseq
      %v5543 = vshrl.u32 %v5542, 7
      %v5544 = vsub.s32 0, %v5543
      %v5545 = vrot.slane %v5540, %v5544
      %v5547 = vmul.f32 %v5508, %v5545
      %v5548 = vmul.f32 %v5509, %v5545
      %v5549 = vmul.f32 %v5510, %v5545
      %v5550 = vmul.f32 %v5511, %v5545
      %v5551 = vmul.f32 %v5512, %v5545
      %v5552 = vmul.f32 %v5513, %v5545
      %v5553 = vmul.f32 %v5514, %v5545
      %v5554 = vmul.f32 %v5515, %v5545
      %v5555 = vmul.f32 %v5516, %v5545
      %v5556 = vmul.f32 %v5517, %v5545
      %v5557 = vmul.f32 %v5518, %v5545
      %v5558 = vmul.f32 %v5519, %v5545
      %v5559 = vmul.f32 %v5520, %v5545
      %v5560 = vmul.f32 %v5521, %v5545
      %v5561 = vmul.f32 %v5522, %v5545
      %v5562 = vmul.f32 %v5523, %v5545
      %v5563 = vmul.f32 %v5524, %v5545
      %v5564 = vmul.f32 %v5525, %v5545
      %v5565 = vmul.f32 %v5526, %v5545
      %v5566 = vmul.f32 %v5527, %v5545
      %v5567 = vmul.f32 %v5528, %v5545
      %v5568 = vmul.f32 %v5529, %v5545
      %v5569 = vmul.f32 %v5530, %v5545
      %v5570 = vmul.f32 %v5531, %v5545
      %v5571 = vmul.f32 %v5532, %v5545
      %v5572 = vmul.f32 %v5533, %v5545
      %v5573 = vmul.f32 %v5534, %v5545
      %v5574 = vmul.f32 %v5535, %v5545
      %v5575 = vmul.f32 %v5536, %v5545
      %v5576 = vmul.f32 %v5537, %v5545
      %v5577 = vmul.f32 %v5538, %v5545
      %v5578 = vmul.f32 %v5539, %v5545
      %v5579 = vld [vmem:[%s6] sm:$0x1]
      %v5581 = vlaneseq
      %v5582 = vshrl.u32 %v5581, 7
      %v5583 = vsub.s32 0, %v5582
      %v5584 = vrot.slane %v5579, %v5583
      %v5586 = vadd.f32 %v5547, %v5584
      %v5587 = vadd.f32 %v5548, %v5584
      %v5588 = vadd.f32 %v5549, %v5584
      %v5589 = vadd.f32 %v5550, %v5584
      %v5590 = vadd.f32 %v5551, %v5584
      %v5591 = vadd.f32 %v5552, %v5584
      %v5592 = vadd.f32 %v5553, %v5584
      %v5593 = vadd.f32 %v5554, %v5584
      %v5594 = vadd.f32 %v5555, %v5584
      %v5595 = vadd.f32 %v5556, %v5584
      %v5596 = vadd.f32 %v5557, %v5584
      %v5597 = vadd.f32 %v5558, %v5584
      %v5598 = vadd.f32 %v5559, %v5584
      %v5599 = vadd.f32 %v5560, %v5584
      %v5600 = vadd.f32 %v5561, %v5584
      %v5601 = vadd.f32 %v5562, %v5584
      %v5602 = vadd.f32 %v5563, %v5584
      %v5603 = vadd.f32 %v5564, %v5584
      %v5604 = vadd.f32 %v5565, %v5584
      %v5605 = vadd.f32 %v5566, %v5584
      %v5606 = vadd.f32 %v5567, %v5584
      %v5607 = vadd.f32 %v5568, %v5584
      %v5608 = vadd.f32 %v5569, %v5584
      %v5609 = vadd.f32 %v5570, %v5584
      %v5610 = vadd.f32 %v5571, %v5584
      %v5611 = vadd.f32 %v5572, %v5584
      %v5612 = vadd.f32 %v5573, %v5584
      %v5613 = vadd.f32 %v5574, %v5584
      %v5614 = vadd.f32 %v5575, %v5584
      %v5615 = vadd.f32 %v5576, %v5584
      %v5616 = vadd.f32 %v5577, %v5584
      %v5617 = vadd.f32 %v5578, %v5584
      %v5618 = vadd.f32 %v5586, %v666
      %v5619 = vadd.f32 %v5587, %v667
      %v5620 = vadd.f32 %v5588, %v668
      %v5621 = vadd.f32 %v5589, %v669
      %v5622 = vadd.f32 %v5590, %v670
      %v5623 = vadd.f32 %v5591, %v671
      %v5624 = vadd.f32 %v5592, %v672
      %v5625 = vadd.f32 %v5593, %v673
      %v5626 = vadd.f32 %v5594, %v674
      %v5627 = vadd.f32 %v5595, %v675
      %v5628 = vadd.f32 %v5596, %v676
      %v5629 = vadd.f32 %v5597, %v677
      %v5630 = vadd.f32 %v5598, %v678
      %v5631 = vadd.f32 %v5599, %v679
      %v5632 = vadd.f32 %v5600, %v680
      %v5633 = vadd.f32 %v5601, %v681
      %v5634 = vadd.f32 %v5602, %v682
      %v5635 = vadd.f32 %v5603, %v683
      %v5636 = vadd.f32 %v5604, %v684
      %v5637 = vadd.f32 %v5605, %v685
      %v5638 = vadd.f32 %v5606, %v686
      %v5639 = vadd.f32 %v5607, %v687
      %v5640 = vadd.f32 %v5608, %v688
      %v5641 = vadd.f32 %v5609, %v689
      %v5642 = vadd.f32 %v5610, %v690
      %v5643 = vadd.f32 %v5611, %v691
      %v5644 = vadd.f32 %v5612, %v692
      %v5645 = vadd.f32 %v5613, %v693
      %v5646 = vadd.f32 %v5614, %v694
      %v5647 = vadd.f32 %v5615, %v695
      %v5648 = vadd.f32 %v5616, %v696
      %v5649 = vadd.f32 %v5617, %v697
      %v5650 = vmax.f32 %v5618, 0.0
      %v5651 = vmax.f32 %v5619, 0.0
      %v5652 = vmax.f32 %v5620, 0.0
      %v5653 = vmax.f32 %v5621, 0.0
      %v5654 = vmax.f32 %v5622, 0.0
      %v5655 = vmax.f32 %v5623, 0.0
      %v5656 = vmax.f32 %v5624, 0.0
      %v5657 = vmax.f32 %v5625, 0.0
      %v5658 = vmax.f32 %v5626, 0.0
      %v5659 = vmax.f32 %v5627, 0.0
      %v5660 = vmax.f32 %v5628, 0.0
      %v5661 = vmax.f32 %v5629, 0.0
      %v5662 = vmax.f32 %v5630, 0.0
      %v5663 = vmax.f32 %v5631, 0.0
      %v5664 = vmax.f32 %v5632, 0.0
      %v5665 = vmax.f32 %v5633, 0.0
      %v5666 = vmax.f32 %v5634, 0.0
      %v5667 = vmax.f32 %v5635, 0.0
      %v5668 = vmax.f32 %v5636, 0.0
      %v5669 = vmax.f32 %v5637, 0.0
      %v5670 = vmax.f32 %v5638, 0.0
      %v5671 = vmax.f32 %v5639, 0.0
      %v5672 = vmax.f32 %v5640, 0.0
      %v5673 = vmax.f32 %v5641, 0.0
      %v5674 = vmax.f32 %v5642, 0.0
      %v5675 = vmax.f32 %v5643, 0.0
      %v5676 = vmax.f32 %v5644, 0.0
      %v5677 = vmax.f32 %v5645, 0.0
      %v5678 = vmax.f32 %v5646, 0.0
      %v5679 = vmax.f32 %v5647, 0.0
      %v5680 = vmax.f32 %v5648, 0.0
      %v5681 = vmax.f32 %v5649, 0.0
      %v5682 = vpack.c.bf16 %v5651, %v5650
      %v5683 = vpack.c.bf16 %v5653, %v5652
      %v5684 = vpack.c.bf16 %v5655, %v5654
      %v5685 = vpack.c.bf16 %v5657, %v5656
      %v5686 = vpack.c.bf16 %v5659, %v5658
      %v5687 = vpack.c.bf16 %v5661, %v5660
      %v5688 = vpack.c.bf16 %v5663, %v5662
      %v5689 = vpack.c.bf16 %v5665, %v5664
      %v5690 = vpack.c.bf16 %v5667, %v5666
      %v5691 = vpack.c.bf16 %v5669, %v5668
      %v5692 = vpack.c.bf16 %v5671, %v5670
      %v5693 = vpack.c.bf16 %v5673, %v5672
      %v5694 = vpack.c.bf16 %v5675, %v5674
      %v5695 = vpack.c.bf16 %v5677, %v5676
      %v5696 = vpack.c.bf16 %v5679, %v5678
      %v5697 = vpack.c.bf16 %v5681, %v5680
      %v5714 = vunpack.c.l.b16 %v5682
      %v5715 = vunpack.c.h.b16 %v5682
      %v5716 = vunpack.c.l.b16 %v5683
      %v5717 = vunpack.c.h.b16 %v5683
      %v5718 = vunpack.c.l.b16 %v5684
      %v5719 = vunpack.c.h.b16 %v5684
      %v5720 = vunpack.c.l.b16 %v5685
      %v5721 = vunpack.c.h.b16 %v5685
      %v5722 = vunpack.c.l.b16 %v5686
      %v5723 = vunpack.c.h.b16 %v5686
      %v5724 = vunpack.c.l.b16 %v5687
      %v5725 = vunpack.c.h.b16 %v5687
      %v5726 = vunpack.c.l.b16 %v5688
      %v5727 = vunpack.c.h.b16 %v5688
      %v5728 = vunpack.c.l.b16 %v5689
      %v5729 = vunpack.c.h.b16 %v5689
      %v5730 = vunpack.c.l.b16 %v5690
      %v5731 = vunpack.c.h.b16 %v5690
      %v5732 = vunpack.c.l.b16 %v5691
      %v5733 = vunpack.c.h.b16 %v5691
      %v5734 = vunpack.c.l.b16 %v5692
      %v5735 = vunpack.c.h.b16 %v5692
      %v5736 = vunpack.c.l.b16 %v5693
      %v5737 = vunpack.c.h.b16 %v5693
      %v5738 = vunpack.c.l.b16 %v5694
      %v5739 = vunpack.c.h.b16 %v5694
      %v5740 = vunpack.c.l.b16 %v5695
      %v5741 = vunpack.c.h.b16 %v5695
      %v5742 = vunpack.c.l.b16 %v5696
      %v5743 = vunpack.c.h.b16 %v5696
      %v5744 = vunpack.c.l.b16 %v5697
      %v5745 = vunpack.c.h.b16 %v5697
      %v5746 = vpack.c.b16 %v5714, %v5714
      %v5747 = vpack.c.b16 %v5715, %v5715
      %v5748 = vpack.c.b16 %v5716, %v5716
      %v5749 = vpack.c.b16 %v5717, %v5717
      %v5750 = vpack.c.b16 %v5718, %v5718
      %v5751 = vpack.c.b16 %v5719, %v5719
      %v5752 = vpack.c.b16 %v5720, %v5720
      %v5753 = vpack.c.b16 %v5721, %v5721
      %v5754 = vpack.c.b16 %v5722, %v5722
      %v5755 = vpack.c.b16 %v5723, %v5723
      %v5756 = vpack.c.b16 %v5724, %v5724
      %v5757 = vpack.c.b16 %v5725, %v5725
      %v5758 = vpack.c.b16 %v5726, %v5726
      %v5759 = vpack.c.b16 %v5727, %v5727
      %v5760 = vpack.c.b16 %v5728, %v5728
      %v5761 = vpack.c.b16 %v5729, %v5729
      %v5762 = vpack.c.b16 %v5730, %v5730
      %v5763 = vpack.c.b16 %v5731, %v5731
      %v5764 = vpack.c.b16 %v5732, %v5732
      %v5765 = vpack.c.b16 %v5733, %v5733
      %v5766 = vpack.c.b16 %v5734, %v5734
      %v5767 = vpack.c.b16 %v5735, %v5735
      %v5768 = vpack.c.b16 %v5736, %v5736
      %v5769 = vpack.c.b16 %v5737, %v5737
      %v5770 = vpack.c.b16 %v5738, %v5738
      %v5771 = vpack.c.b16 %v5739, %v5739
      %v5772 = vpack.c.b16 %v5740, %v5740
      %v5773 = vpack.c.b16 %v5741, %v5741
      %v5774 = vpack.c.b16 %v5742, %v5742
      %v5775 = vpack.c.b16 %v5743, %v5743
      %v5776 = vpack.c.b16 %v5744, %v5744
      %v5777 = vpack.c.b16 %v5745, %v5745
      %5810 = vst [vmem:[%s278] sm:$0xf] %v5746
      %5811 = vst [vmem:[%s278 + $0x4] sm:$0xf] %v5747
      %5812 = vst [vmem:[%s278 + $0x8] sm:$0xf] %v5748
      %5813 = vst [vmem:[%s278 + $0xc] sm:$0xf] %v5749
      %5814 = vst [vmem:[%s278 + $0x10] sm:$0xf] %v5750
      %5815 = vst [vmem:[%s278 + $0x14] sm:$0xf] %v5751
      %5816 = vst [vmem:[%s278 + $0x18] sm:$0xf] %v5752
      %5817 = vst [vmem:[%s278 + $0x1c] sm:$0xf] %v5753
      %5818 = vst [vmem:[%s278 + $0x20] sm:$0xf] %v5754
      %5819 = vst [vmem:[%s278 + $0x24] sm:$0xf] %v5755
      %5820 = vst [vmem:[%s278 + $0x28] sm:$0xf] %v5756
      %5821 = vst [vmem:[%s278 + $0x2c] sm:$0xf] %v5757
      %5822 = vst [vmem:[%s278 + $0x30] sm:$0xf] %v5758
      %5823 = vst [vmem:[%s278 + $0x34] sm:$0xf] %v5759
      %5824 = vst [vmem:[%s278 + $0x38] sm:$0xf] %v5760
      %5825 = vst [vmem:[%s278 + $0x3c] sm:$0xf] %v5761
      %5826 = vst [vmem:[%s278 + $0x40] sm:$0xf] %v5762
      %5827 = vst [vmem:[%s278 + $0x44] sm:$0xf] %v5763
      %5828 = vst [vmem:[%s278 + $0x48] sm:$0xf] %v5764
      %5829 = vst [vmem:[%s278 + $0x4c] sm:$0xf] %v5765
      %5830 = vst [vmem:[%s278 + $0x50] sm:$0xf] %v5766
      %5831 = vst [vmem:[%s278 + $0x54] sm:$0xf] %v5767
      %5832 = vst [vmem:[%s278 + $0x58] sm:$0xf] %v5768
      %5833 = vst [vmem:[%s278 + $0x5c] sm:$0xf] %v5769
      %5834 = vst [vmem:[%s278 + $0x60] sm:$0xf] %v5770
      %5835 = vst [vmem:[%s278 + $0x64] sm:$0xf] %v5771
      %5836 = vst [vmem:[%s278 + $0x68] sm:$0xf] %v5772
      %5837 = vst [vmem:[%s278 + $0x6c] sm:$0xf] %v5773
      %5838 = vst [vmem:[%s278 + $0x70] sm:$0xf] %v5774
      %5839 = vst [vmem:[%s278 + $0x74] sm:$0xf] %v5775
      %5840 = vst [vmem:[%s278 + $0x78] sm:$0xf] %v5776
      %5841 = vst [vmem:[%s278 + $0x7c] sm:$0xf] %v5777
      %p5842 = scmp.lt.s32.totalorder %s18, 1
      %s5843 = scalar_select %p5842, %s18, 1
      %s5844 = smul.addr %s5843, 32
      %s5845 = smul.addr %s5844, 4
      %s5846 = scalar_lea.vmem %s7, %s5845
      // Predicated region
      $region49: #{basic_block_forward.1} parent=47 // pred_check
        %p5847 = pneg %p188
      $region50: #{basic_block_forward.1} parent=47 // pred_check_branch
        %5849 = sbr.rel (%p5847) target = $region52
      $region51: #{basic_block_forward.1} parent=47 // pred_region
        _
      $region52: #{basic_block_forward.1} parent=47 // pred_fallthru
        _
    $region48: #{basic_block_forward.1} parent=5 // pred_fallthru
      _
    %p5850 = scmp.le.s32.totalorder 2, %s13
    // Predicated region
    $region53: #{basic_block_forward.1} parent=5 // pred_check
      %p5851 = pneg %p5850
    $region54: #{basic_block_forward.1} parent=5 // pred_check_branch
      %5853 = sbr.rel (%p5851) target = $region56
    $region55: #{basic_block_forward.1} parent=5 // pred_region
      %s5854 = ssub.s32 %s13, 2
      // Predicated region
      $region57: #{basic_block_forward.1} parent=55 // pred_check
        %p5855 = pneg %p194
      $region58: #{basic_block_forward.1} parent=55 // pred_check_branch
        %5857 = sbr.rel (%p5855) target = $region60
      $region59: #{basic_block_forward.1} parent=55 // pred_region
        %p5858 = scmp.lt.s32.totalorder %s19, 1
        %s5859 = scalar_select %p5858, %s19, 1
        %s5860 = smul.addr %s5859, 32
        %s5861 = smul.addr %s5860, 4
        %s5862 = scalar_lea.vmem %s7, %s5861
      $region60: #{basic_block_forward.1} parent=55 // pred_fallthru
        _
    $region56: #{basic_block_forward.1} parent=5 // pred_fallthru
      _
  $region6: #{basic_block_forward.1} parent=0 // loop_footer
    %s17 = sadd.s32 1, %s13
  $region7: #{basic_block_forward.1} parent=0 // loop_footer_branch
    %12 = sbr.rel target = $region3
  $region8: #{basic_block_forward.1} parent=0 // loop_exit
    _

</llo_original>
